<compile_context>
chip_gen: v7x
topology: tpu7x:2x2x1
jax: 0.10.0
libtpu: 0.0.40
codegen_flags: <defaults>
</compile_context>

<pallas_src>
import jax
import jax.numpy as jnp
import numpy as np
from jax.experimental import pallas as pl
from jax.experimental.pallas import tpu as pltpu

# Dims implied by the PyTorch forward:
#   vector_size = 300 (.view(..., 300)), hidden_dim = 300 (Linear(600, 300) since
#   3 conv branches * 200 filters = 600), context_dim = 50 (.view(..., 50)),
#   context projection = 100, filters = 200.
BATCH_SIZE = 2
MAX_LENGTH = 8
VOCAB = 32
VECTOR_SIZE = 300
NUM_FILTERS = 200
HIDDEN_DIM = 300
CONTEXT_DIM = 50
CONTEXT_HID = 100

TAP = 256           # each conv tap padded 200 -> 256 output columns (lane aligned)
NUM_TAPS = 6        # h=1 (1 tap) + h=2 (2 taps) + h=3 (3 taps)


def _wdecnn_kernel(ids_ref, ctx_ref, emb_ref, wconv_ref, bconv_ref,
                   whp_ref, bh_ref, wc_ref, bc_ref,
                   woh_ref, woc_ref, bo_ref, out_ref):
    B, L = BATCH_SIZE, MAX_LENGTH

    # ---- embedding gather as one-hot matmul (MXU, no dynamic gather) --------
    ids = ids_ref[...]                                              # (B*L, 1) int32
    vocab_iota = jax.lax.broadcasted_iota(jnp.int32, (B * L, VOCAB), 1)
    onehot = (ids == vocab_iota).astype(jnp.bfloat16)               # (B*L, VOCAB)
    x = jnp.dot(onehot, emb_ref[...],
                preferred_element_type=jnp.float32).astype(jnp.bfloat16)  # (B*L, D)

    # ---- all six conv taps in ONE wide matmul -------------------------------
    z = jnp.dot(x, wconv_ref[...], preferred_element_type=jnp.float32)  # (B*L, 6*TAP)

    # ---- per-batch shifted adds + max-pool (tanh/bias AFTER the pool) -------
    feat_rows = []
    for b in range(B):                                              # B=2, static
        zb = z[b * L:(b + 1) * L]                                   # (L, 6*TAP)
        m1 = jnp.max(zb[:, 0 * TAP:1 * TAP], axis=0, keepdims=True)             # h=1
        m2 = jnp.max(zb[:L - 1, 1 * TAP:2 * TAP] + zb[1:, 2 * TAP:3 * TAP],
                     axis=0, keepdims=True)                                      # h=2
        m3 = jnp.max(zb[:L - 2, 3 * TAP:4 * TAP] + zb[1:L - 1, 4 * TAP:5 * TAP]
                     + zb[2:, 5 * TAP:6 * TAP], axis=0, keepdims=True)            # h=3
        feat_rows.append(jnp.concatenate([m1, m2, m3], axis=1))     # (1, 3*TAP), 256-aligned
    mfeat = jnp.concatenate(feat_rows, axis=0)                      # (B, 3*TAP)

    # tanh(max(z) + b) == max(tanh(z + b)) since tanh is monotone, bias constant
    feat = jnp.tanh(mfeat + bconv_ref[...]).astype(jnp.bfloat16)    # (B, 3*TAP)

    # ---- hidden layer (packed, zero-padded rows absorb the 200->256 padding) -
    h = jnp.tanh(jnp.dot(feat, whp_ref[...],
                         preferred_element_type=jnp.float32) + bh_ref[...])   # (B, HD)

    # ---- context projection --------------------------------------------------
    c = jnp.tanh(jnp.dot(ctx_ref[...].astype(jnp.bfloat16), wc_ref[...],
                         preferred_element_type=jnp.float32) + bc_ref[...])   # (B, 100)

    # ---- out layer: split-weight matmul-accumulate instead of concat([h, c]) -
    out = (jnp.dot(h.astype(jnp.bfloat16), woh_ref[...],
                   preferred_element_type=jnp.float32)
           + jnp.dot(c.astype(jnp.bfloat16), woc_ref[...],
                     preferred_element_type=jnp.float32)
           + bo_ref[...])                                           # (B, HD)
    out_ref[...] = out


@jax.jit
def wdecnn_forward(kparams, inp, ctx):
    """inp: (B, 2 + MAX_LENGTH) float (col0=len, col1=ctx-id, cols2:=tokens);
    ctx: (B, CONTEXT_DIM) float.  Returns (B, 1, HIDDEN_DIM)."""
    # Token ids (tiny) stay as the only wrapper-side prep; gather is in-kernel.
    idx = inp[:, 2:].astype(jnp.int32).reshape(BATCH_SIZE * MAX_LENGTH, 1)
    ctx2 = ctx.astype(jnp.float32)

    vmem = pl.BlockSpec(memory_space=pltpu.MemorySpace.VMEM)

    flops = 2 * (BATCH_SIZE * MAX_LENGTH * (VOCAB * VECTOR_SIZE
                                            + VECTOR_SIZE * NUM_TAPS * TAP)
                 + BATCH_SIZE * (3 * TAP * HIDDEN_DIM
                                 + CONTEXT_DIM * CONTEXT_HID
                                 + HIDDEN_DIM * HIDDEN_DIM
                                 + CONTEXT_HID * HIDDEN_DIM))
    transcendentals = BATCH_SIZE * (3 * TAP + HIDDEN_DIM + CONTEXT_HID)
    bytes_accessed = (2 * (VOCAB * VECTOR_SIZE + VECTOR_SIZE * NUM_TAPS * TAP
                           + 3 * TAP * HIDDEN_DIM + CONTEXT_DIM * CONTEXT_HID
                           + HIDDEN_DIM * HIDDEN_DIM + CONTEXT_HID * HIDDEN_DIM)
                      + 4 * (3 * TAP + 2 * HIDDEN_DIM + CONTEXT_HID
                             + BATCH_SIZE * (MAX_LENGTH + CONTEXT_DIM + HIDDEN_DIM)))

    out = pl.pallas_call(
        _wdecnn_kernel,
        out_shape=jax.ShapeDtypeStruct((BATCH_SIZE, HIDDEN_DIM), jnp.float32),
        in_specs=[vmem] * 12,
        out_specs=vmem,
        cost_estimate=pl.CostEstimate(flops=flops,
                                      transcendentals=transcendentals,
                                      bytes_accessed=bytes_accessed),
    )(idx, ctx2,
      kparams["embed"], kparams["wconv"], kparams["bconv"],
      kparams["whp"], kparams["bh"], kparams["wc"], kparams["bc"],
      kparams["woh"], kparams["woc"], kparams["bo"])
    return out.reshape(BATCH_SIZE, 1, HIDDEN_DIM)


def init_params(key):
    """Raw (reference-layout) parameters.  Weights are bf16-valued (shared by
    kernel and reference so bf16 weight storage introduces no mismatch);
    biases stay f32."""
    ks = jax.random.split(key, 13)

    def rnd(k, shape, scale, dtype=jnp.float32):
        return (jax.random.normal(k, shape, jnp.float32) * scale).astype(dtype)

    def conv_w(k, h):
        # torch layout (NF, 1, h, D) -> stored as (h, D, NF)
        w = rnd(k, (NUM_FILTERS, h, VECTOR_SIZE), 1.0 / np.sqrt(h * VECTOR_SIZE))
        return jnp.transpose(w, (1, 2, 0)).astype(jnp.bfloat16)

    return {
        "embed": rnd(ks[0], (VOCAB, VECTOR_SIZE), 0.1, jnp.bfloat16),
        "w1": conv_w(ks[1], 1), "b1": rnd(ks[2], (1, NUM_FILTERS), 0.01),
        "w2": conv_w(ks[3], 2), "b2": rnd(ks[4], (1, NUM_FILTERS), 0.01),
        "w3": conv_w(ks[5], 3), "b3": rnd(ks[6], (1, NUM_FILTERS), 0.01),
        "wh": rnd(ks[7], (3 * NUM_FILTERS, HIDDEN_DIM),
                  1.0 / np.sqrt(3 * NUM_FILTERS), jnp.bfloat16),
        "bh": rnd(ks[8], (1, HIDDEN_DIM), 0.01),
        "wc": rnd(ks[9], (CONTEXT_DIM, CONTEXT_HID),
                  1.0 / np.sqrt(CONTEXT_DIM), jnp.bfloat16),
        "bc": rnd(ks[10], (1, CONTEXT_HID), 0.01),
        "wo": rnd(ks[11], (HIDDEN_DIM + CONTEXT_HID, HIDDEN_DIM),
                  1.0 / np.sqrt(HIDDEN_DIM + CONTEXT_HID), jnp.bfloat16),
        "bo": rnd(ks[12], (1, HIDDEN_DIM), 0.01),
    }


def pack_params(p):
    """Rearrange raw params into the kernel's packed, lane-aligned bf16 layout."""
    pad_nf = TAP - NUM_FILTERS

    taps = []
    for w in (p["w1"], p["w2"], p["w3"]):                # (h, D, NF)
        for k in range(w.shape[0]):
            taps.append(jnp.pad(w[k], ((0, 0), (0, pad_nf))))     # (D, TAP)
    wconv = jnp.concatenate(taps, axis=1)                # (D, 6*TAP) bf16

    bconv = jnp.concatenate(
        [jnp.pad(b, ((0, 0), (0, pad_nf))) for b in (p["b1"], p["b2"], p["b3"])],
        axis=1)                                          # (1, 3*TAP) f32

    whp = jnp.concatenate(
        [jnp.pad(p["wh"][i * NUM_FILTERS:(i + 1) * NUM_FILTERS],
                 ((0, pad_nf), (0, 0))) for i in range(3)],
        axis=0)                                          # (3*TAP, HD) bf16, zero rows in padding

    return {
        "embed": p["embed"],                             # (VOCAB, D) bf16
        "wconv": wconv, "bconv": bconv,
        "whp": whp, "bh": p["bh"],
        "wc": p["wc"], "bc": p["bc"],
        "woh": p["wo"][:HIDDEN_DIM],                     # (HD, HD)  bf16
        "woc": p["wo"][HIDDEN_DIM:],                     # (100, HD) bf16
        "bo": p["bo"],
    }


def ref_forward(params, inp, ctx):
    """Pure-JAX f32 reference mirroring the PyTorch forward."""
    f32 = lambda a: a.astype(jnp.float32)
    idx = inp[:, 2:].astype(jnp.int32)
    x = f32(params["embed"])[idx]                        # (B, L, D)

    def branch(w, b, h):                                 # w: (h, D, NF)
        w = f32(w)
        outs = []
        for i in range(MAX_LENGTH - h + 1):
            acc = b
            for k in range(h):
                acc = acc + x[:, i + k, :] @ w[k]
            outs.append(acc)
        s = jnp.tanh(jnp.stack(outs, axis=1))            # (B, P, NF)
        return jnp.max(s, axis=1)                        # (B, NF)

    f1 = branch(params["w1"], params["b1"], 1)
    f2 = branch(params["w2"], params["b2"], 2)
    f3 = branch(params["w3"], params["b3"], 3)
    feat = jnp.concatenate([f1, f2, f3], axis=1)         # (B, 600)
    h = jnp.tanh(feat @ f32(params["wh"]) + params["bh"])
    c = jnp.tanh(ctx @ f32(params["wc"]) + params["bc"])
    out = jnp.concatenate([h, c], axis=1) @ f32(params["wo"]) + params["bo"]
    return out.reshape(BATCH_SIZE, 1, HIDDEN_DIM)


if __name__ == "__main__":
    key = jax.random.PRNGKey(0)
    kp, ki, kc = jax.random.split(key, 3)
    params = init_params(kp)
    kparams = pack_params(params)

    # input layout per the torch forward: col0 = length, col1 = context id,
    # cols 2: = token indices (stored as float, cast to int inside).
    # NOTE: like the original forward, length/context-id columns are unused.
    lens = jnp.full((BATCH_SIZE, 1), float(MAX_LENGTH), jnp.float32)
    ctx_id = jnp.zeros((BATCH_SIZE, 1), jnp.float32)
    tokens = jax.random.randint(ki, (BATCH_SIZE, MAX_LENGTH), 0, VOCAB).astype(jnp.float32)
    inp = jnp.concatenate([lens, ctx_id, tokens], axis=1)            # (B, 2 + L)
    ctx = jax.random.normal(kc, (BATCH_SIZE, CONTEXT_DIM), jnp.float32)

    out = wdecnn_forward(kparams, inp, ctx)
    out = jax.block_until_ready(out)

    ref = ref_forward(params, inp, ctx)
    np.testing.assert_allclose(np.asarray(out), np.asarray(ref), rtol=2e-2, atol=2e-2)
    assert out.shape == (BATCH_SIZE, 1, HIDDEN_DIM)
    print("KERNEL_OK")
</pallas_src>

<mosaic_0001>
module attributes {stable_mosaic.version = 11 : i64} {
  func.func @_wdecnn_kernel(%arg0: memref<16x1xi32, #tpu.memory_space<vmem>>, %arg1: memref<2x50xf32, #tpu.memory_space<vmem>>, %arg2: memref<32x300xbf16, #tpu.memory_space<vmem>>, %arg3: memref<300x1536xbf16, #tpu.memory_space<vmem>>, %arg4: memref<1x768xf32, #tpu.memory_space<vmem>>, %arg5: memref<768x300xbf16, #tpu.memory_space<vmem>>, %arg6: memref<1x300xf32, #tpu.memory_space<vmem>>, %arg7: memref<50x100xbf16, #tpu.memory_space<vmem>>, %arg8: memref<1x100xf32, #tpu.memory_space<vmem>>, %arg9: memref<300x300xbf16, #tpu.memory_space<vmem>>, %arg10: memref<100x300xbf16, #tpu.memory_space<vmem>>, %arg11: memref<1x300xf32, #tpu.memory_space<vmem>>, %arg12: memref<2x300xf32, #tpu.memory_space<vmem>>) attributes {dimension_semantics = [], scalar_prefetch = 0 : i64, scratch_operands = 0 : i64, tpu.core_type = #tpu.core_type<tc>} {
    %c0 = arith.constant 0 : index
    %c0_0 = arith.constant 0 : index
    %0 = vector.load %arg0[%c0, %c0_0] : memref<16x1xi32, #tpu.memory_space<vmem>>, vector<16x1xi32>
    %1 = tpu.iota {dimensions = array<i32: 1>} : vector<16x32xi32>
    %2 = vector.broadcast %0 : vector<16x1xi32> to vector<16x32xi32>
    %3 = arith.cmpi eq, %2, %1 : vector<16x32xi32>
    %4 = arith.extui %3 : vector<16x32xi1> to vector<16x32xi32>
    %5 = arith.sitofp %4 : vector<16x32xi32> to vector<16x32xf32>
    %6 = arith.truncf %5 : vector<16x32xf32> to vector<16x32xbf16>
    %c0_1 = arith.constant 0 : index
    %c0_2 = arith.constant 0 : index
    %7 = vector.load %arg2[%c0_1, %c0_2] : memref<32x300xbf16, #tpu.memory_space<vmem>>, vector<32x300xbf16>
    %cst = arith.constant dense<0.000000e+00> : vector<16x300xf32>
    %8 = tpu.matmul %6, %7, %cst {dimension_numbers = #tpu.dot_dimension_numbers<[1], [0], [0], [1], [0, 0, 1, 1], [], []>} : vector<16x32xbf16>, vector<32x300xbf16>, vector<16x300xf32> -> vector<16x300xf32>
    %9 = arith.truncf %8 : vector<16x300xf32> to vector<16x300xbf16>
    %c0_3 = arith.constant 0 : index
    %c0_4 = arith.constant 0 : index
    %10 = vector.load %arg3[%c0_3, %c0_4] : memref<300x1536xbf16, #tpu.memory_space<vmem>>, vector<300x1536xbf16>
    %cst_5 = arith.constant dense<0.000000e+00> : vector<16x1536xf32>
    %11 = tpu.matmul %9, %10, %cst_5 {dimension_numbers = #tpu.dot_dimension_numbers<[1], [0], [0], [1], [0, 0, 1, 1], [], []>} : vector<16x300xbf16>, vector<300x1536xbf16>, vector<16x1536xf32> -> vector<16x1536xf32>
    %12 = vector.extract_strided_slice %11 {offsets = [0, 0], sizes = [8, 1536], strides = [1, 1]} : vector<16x1536xf32> to vector<8x1536xf32>
    %13 = vector.extract_strided_slice %12 {offsets = [0, 0], sizes = [8, 256], strides = [1, 1]} : vector<8x1536xf32> to vector<8x256xf32>
    %cst_6 = arith.constant dense<0xFF800000> : vector<256xf32>
    %14 = vector.multi_reduction <maximumf>, %13, %cst_6 [0] : vector<8x256xf32> to vector<256xf32>
    %15 = vector.shape_cast %14 : vector<256xf32> to vector<1x256xf32>
    %16 = vector.extract_strided_slice %12 {offsets = [0, 256], sizes = [7, 256], strides = [1, 1]} : vector<8x1536xf32> to vector<7x256xf32>
    %17 = vector.extract_strided_slice %12 {offsets = [1, 512], sizes = [7, 256], strides = [1, 1]} : vector<8x1536xf32> to vector<7x256xf32>
    %18 = arith.addf %16, %17 : vector<7x256xf32>
    %cst_7 = arith.constant dense<0xFF800000> : vector<256xf32>
    %19 = vector.multi_reduction <maximumf>, %18, %cst_7 [0] : vector<7x256xf32> to vector<256xf32>
    %20 = vector.shape_cast %19 : vector<256xf32> to vector<1x256xf32>
    %21 = vector.extract_strided_slice %12 {offsets = [0, 768], sizes = [6, 256], strides = [1, 1]} : vector<8x1536xf32> to vector<6x256xf32>
    %22 = vector.extract_strided_slice %12 {offsets = [1, 1024], sizes = [6, 256], strides = [1, 1]} : vector<8x1536xf32> to vector<6x256xf32>
    %23 = arith.addf %21, %22 : vector<6x256xf32>
    %24 = vector.extract_strided_slice %12 {offsets = [2, 1280], sizes = [6, 256], strides = [1, 1]} : vector<8x1536xf32> to vector<6x256xf32>
    %25 = arith.addf %23, %24 : vector<6x256xf32>
    %cst_8 = arith.constant dense<0xFF800000> : vector<256xf32>
    %26 = vector.multi_reduction <maximumf>, %25, %cst_8 [0] : vector<6x256xf32> to vector<256xf32>
    %27 = vector.shape_cast %26 : vector<256xf32> to vector<1x256xf32>
    %28 = tpu.concatenate %15, %20, %27 in 1 : vector<1x256xf32>, vector<1x256xf32>, vector<1x256xf32> -> vector<1x768xf32>
    %29 = vector.extract_strided_slice %11 {offsets = [8, 0], sizes = [8, 1536], strides = [1, 1]} : vector<16x1536xf32> to vector<8x1536xf32>
    %30 = vector.extract_strided_slice %29 {offsets = [0, 0], sizes = [8, 256], strides = [1, 1]} : vector<8x1536xf32> to vector<8x256xf32>
    %cst_9 = arith.constant dense<0xFF800000> : vector<256xf32>
    %31 = vector.multi_reduction <maximumf>, %30, %cst_9 [0] : vector<8x256xf32> to vector<256xf32>
    %32 = vector.shape_cast %31 : vector<256xf32> to vector<1x256xf32>
    %33 = vector.extract_strided_slice %29 {offsets = [0, 256], sizes = [7, 256], strides = [1, 1]} : vector<8x1536xf32> to vector<7x256xf32>
    %34 = vector.extract_strided_slice %29 {offsets = [1, 512], sizes = [7, 256], strides = [1, 1]} : vector<8x1536xf32> to vector<7x256xf32>
    %35 = arith.addf %33, %34 : vector<7x256xf32>
    %cst_10 = arith.constant dense<0xFF800000> : vector<256xf32>
    %36 = vector.multi_reduction <maximumf>, %35, %cst_10 [0] : vector<7x256xf32> to vector<256xf32>
    %37 = vector.shape_cast %36 : vector<256xf32> to vector<1x256xf32>
    %38 = vector.extract_strided_slice %29 {offsets = [0, 768], sizes = [6, 256], strides = [1, 1]} : vector<8x1536xf32> to vector<6x256xf32>
    %39 = vector.extract_strided_slice %29 {offsets = [1, 1024], sizes = [6, 256], strides = [1, 1]} : vector<8x1536xf32> to vector<6x256xf32>
    %40 = arith.addf %38, %39 : vector<6x256xf32>
    %41 = vector.extract_strided_slice %29 {offsets = [2, 1280], sizes = [6, 256], strides = [1, 1]} : vector<8x1536xf32> to vector<6x256xf32>
    %42 = arith.addf %40, %41 : vector<6x256xf32>
    %cst_11 = arith.constant dense<0xFF800000> : vector<256xf32>
    %43 = vector.multi_reduction <maximumf>, %42, %cst_11 [0] : vector<6x256xf32> to vector<256xf32>
    %44 = vector.shape_cast %43 : vector<256xf32> to vector<1x256xf32>
    %45 = tpu.concatenate %32, %37, %44 in 1 : vector<1x256xf32>, vector<1x256xf32>, vector<1x256xf32> -> vector<1x768xf32>
    %46 = tpu.concatenate %28, %45 in 0 : vector<1x768xf32>, vector<1x768xf32> -> vector<2x768xf32>
    %c0_12 = arith.constant 0 : index
    %c0_13 = arith.constant 0 : index
    %47 = vector.load %arg4[%c0_12, %c0_13] : memref<1x768xf32, #tpu.memory_space<vmem>>, vector<1x768xf32>
    %48 = vector.broadcast %47 : vector<1x768xf32> to vector<2x768xf32>
    %49 = arith.addf %46, %48 : vector<2x768xf32>
    %50 = math.tanh %49 : vector<2x768xf32>
    %51 = arith.truncf %50 : vector<2x768xf32> to vector<2x768xbf16>
    %c0_14 = arith.constant 0 : index
    %c0_15 = arith.constant 0 : index
    %52 = vector.load %arg5[%c0_14, %c0_15] : memref<768x300xbf16, #tpu.memory_space<vmem>>, vector<768x300xbf16>
    %cst_16 = arith.constant dense<0.000000e+00> : vector<2x300xf32>
    %53 = tpu.matmul %51, %52, %cst_16 {dimension_numbers = #tpu.dot_dimension_numbers<[1], [0], [0], [1], [0, 0, 1, 1], [], []>} : vector<2x768xbf16>, vector<768x300xbf16>, vector<2x300xf32> -> vector<2x300xf32>
    %c0_17 = arith.constant 0 : index
    %c0_18 = arith.constant 0 : index
    %54 = vector.load %arg6[%c0_17, %c0_18] : memref<1x300xf32, #tpu.memory_space<vmem>>, vector<1x300xf32>
    %55 = vector.broadcast %54 : vector<1x300xf32> to vector<2x300xf32>
    %56 = arith.addf %53, %55 : vector<2x300xf32>
    %57 = math.tanh %56 : vector<2x300xf32>
    %c0_19 = arith.constant 0 : index
    %c0_20 = arith.constant 0 : index
    %58 = vector.load %arg1[%c0_19, %c0_20] : memref<2x50xf32, #tpu.memory_space<vmem>>, vector<2x50xf32>
    %59 = arith.truncf %58 : vector<2x50xf32> to vector<2x50xbf16>
    %c0_21 = arith.constant 0 : index
    %c0_22 = arith.constant 0 : index
    %60 = vector.load %arg7[%c0_21, %c0_22] : memref<50x100xbf16, #tpu.memory_space<vmem>>, vector<50x100xbf16>
    %cst_23 = arith.constant dense<0.000000e+00> : vector<2x100xf32>
    %61 = tpu.matmul %59, %60, %cst_23 {dimension_numbers = #tpu.dot_dimension_numbers<[1], [0], [0], [1], [0, 0, 1, 1], [], []>} : vector<2x50xbf16>, vector<50x100xbf16>, vector<2x100xf32> -> vector<2x100xf32>
    %c0_24 = arith.constant 0 : index
    %c0_25 = arith.constant 0 : index
    %62 = vector.load %arg8[%c0_24, %c0_25] : memref<1x100xf32, #tpu.memory_space<vmem>>, vector<1x100xf32>
    %63 = vector.broadcast %62 : vector<1x100xf32> to vector<2x100xf32>
    %64 = arith.addf %61, %63 : vector<2x100xf32>
    %65 = math.tanh %64 : vector<2x100xf32>
    %66 = arith.truncf %57 : vector<2x300xf32> to vector<2x300xbf16>
    %c0_26 = arith.constant 0 : index
    %c0_27 = arith.constant 0 : index
    %67 = vector.load %arg9[%c0_26, %c0_27] : memref<300x300xbf16, #tpu.memory_space<vmem>>, vector<300x300xbf16>
    %cst_28 = arith.constant dense<0.000000e+00> : vector<2x300xf32>
    %68 = tpu.matmul %66, %67, %cst_28 {dimension_numbers = #tpu.dot_dimension_numbers<[1], [0], [0], [1], [0, 0, 1, 1], [], []>} : vector<2x300xbf16>, vector<300x300xbf16>, vector<2x300xf32> -> vector<2x300xf32>
    %69 = arith.truncf %65 : vector<2x100xf32> to vector<2x100xbf16>
    %c0_29 = arith.constant 0 : index
    %c0_30 = arith.constant 0 : index
    %70 = vector.load %arg10[%c0_29, %c0_30] : memref<100x300xbf16, #tpu.memory_space<vmem>>, vector<100x300xbf16>
    %cst_31 = arith.constant dense<0.000000e+00> : vector<2x300xf32>
    %71 = tpu.matmul %69, %70, %cst_31 {dimension_numbers = #tpu.dot_dimension_numbers<[1], [0], [0], [1], [0, 0, 1, 1], [], []>} : vector<2x100xbf16>, vector<100x300xbf16>, vector<2x300xf32> -> vector<2x300xf32>
    %72 = arith.addf %68, %71 : vector<2x300xf32>
    %c0_32 = arith.constant 0 : index
    %c0_33 = arith.constant 0 : index
    %73 = vector.load %arg11[%c0_32, %c0_33] : memref<1x300xf32, #tpu.memory_space<vmem>>, vector<1x300xf32>
    %74 = vector.broadcast %73 : vector<1x300xf32> to vector<2x300xf32>
    %75 = arith.addf %72, %74 : vector<2x300xf32>
    %c0_34 = arith.constant 0 : index
    %c0_35 = arith.constant 0 : index
    %76 = vector.load %arg12[%c0_34, %c0_35] : memref<2x300xf32, #tpu.memory_space<vmem>>, vector<2x300xf32>
    tpu.vector_store %arg12[%c0_34, %c0_35], %75 {strides = array<i32>} : memref<2x300xf32, #tpu.memory_space<vmem>>, vector<2x300xf32>,
    return
  }
}

</mosaic_0001>

<llo_original>
// kernel: wdecnn_forward.1
$region0: #{wdecnn_forward.1}
  #allocation0 [shape = 'u32[]', space=smem, size = 0x4, offset = 0x4, fixed_abs, tag = 'smem constant byte address 0x4 - core index']
  #allocation1 [shape = 'u32[144,128]{1,0:T(1,128)}', space=vmem, size = 0x12000, scoped, tag = 'internal scratch']
  %s0 = inlined_call_operand.vmem [shape: s32[16,1], index: 0, kind: input, shape index: {}]
  %s1 = inlined_call_operand.vmem [shape: f32[2,50], index: 1, kind: input, shape index: {}]
  %s2 = inlined_call_operand.vmem [shape: bf16[32,300], index: 2, kind: input, shape index: {}]
  %s3 = inlined_call_operand.vmem [shape: bf16[300,1536], index: 3, kind: input, shape index: {}]
  %s4 = inlined_call_operand.vmem [shape: f32[1,768], index: 4, kind: input, shape index: {}]
  %s5 = inlined_call_operand.vmem [shape: bf16[768,300], index: 5, kind: input, shape index: {}]
  %s6 = inlined_call_operand.vmem [shape: f32[1,300], index: 6, kind: input, shape index: {}]
  %s7 = inlined_call_operand.vmem [shape: bf16[50,100], index: 7, kind: input, shape index: {}]
  %s8 = inlined_call_operand.vmem [shape: f32[1,100], index: 8, kind: input, shape index: {}]
  %s9 = inlined_call_operand.vmem [shape: bf16[300,300], index: 9, kind: input, shape index: {}]
  %s10 = inlined_call_operand.vmem [shape: bf16[100,300], index: 10, kind: input, shape index: {}]
  %s11 = inlined_call_operand.vmem [shape: f32[1,300], index: 11, kind: input, shape index: {}]
  %s12 = inlined_call_operand.vmem [shape: f32[2,300], index: 12, kind: output, shape index: {}]
  %s13 = sld [smem:[#allocation0]]
  $region58: #{wdecnn_forward.1} parent=0
    _
  %s15 = ssub.s32 1, %s13
  %s16 = scalar_select 0, %s15, %s13
  // Predicated region
  $region2: #{wdecnn_forward.1} parent=0 // pred_check
    _
  $region3: #{wdecnn_forward.1} parent=0 // pred_check_branch
    %18 = sbr.rel (0) target = $region5
  $region4: #{wdecnn_forward.1} parent=0 // pred_region
    _
  $region5: #{wdecnn_forward.1} parent=0 // pred_fallthru
    _
  // Predicated region
  $region6: #{wdecnn_forward.1} parent=0 // pred_check
    _
  $region7: #{wdecnn_forward.1} parent=0 // pred_check_branch
    %20 = sbr.rel (0) target = $region9
  $region8: #{wdecnn_forward.1} parent=0 // pred_region
    _
  $region9: #{wdecnn_forward.1} parent=0 // pred_fallthru
    _
  // Predicated region
  $region10: #{wdecnn_forward.1} parent=0 // pred_check
    _
  $region11: #{wdecnn_forward.1} parent=0 // pred_check_branch
    %22 = sbr.rel (0) target = $region13
  $region12: #{wdecnn_forward.1} parent=0 // pred_region
    _
  $region13: #{wdecnn_forward.1} parent=0 // pred_fallthru
    _
  // Predicated region
  $region14: #{wdecnn_forward.1} parent=0 // pred_check
    _
  $region15: #{wdecnn_forward.1} parent=0 // pred_check_branch
    %24 = sbr.rel (0) target = $region17
  $region16: #{wdecnn_forward.1} parent=0 // pred_region
    _
  $region17: #{wdecnn_forward.1} parent=0 // pred_fallthru
    _
  // Predicated region
  $region18: #{wdecnn_forward.1} parent=0 // pred_check
    _
  $region19: #{wdecnn_forward.1} parent=0 // pred_check_branch
    %26 = sbr.rel (0) target = $region21
  $region20: #{wdecnn_forward.1} parent=0 // pred_region
    _
  $region21: #{wdecnn_forward.1} parent=0 // pred_fallthru
    _
  // Predicated region
  $region22: #{wdecnn_forward.1} parent=0 // pred_check
    _
  $region23: #{wdecnn_forward.1} parent=0 // pred_check_branch
    %28 = sbr.rel (0) target = $region25
  $region24: #{wdecnn_forward.1} parent=0 // pred_region
    _
  $region25: #{wdecnn_forward.1} parent=0 // pred_fallthru
    _
  // Predicated region
  $region26: #{wdecnn_forward.1} parent=0 // pred_check
    _
  $region27: #{wdecnn_forward.1} parent=0 // pred_check_branch
    %30 = sbr.rel (0) target = $region29
  $region28: #{wdecnn_forward.1} parent=0 // pred_region
    _
  $region29: #{wdecnn_forward.1} parent=0 // pred_fallthru
    _
  // Predicated region
  $region30: #{wdecnn_forward.1} parent=0 // pred_check
    _
  $region31: #{wdecnn_forward.1} parent=0 // pred_check_branch
    %32 = sbr.rel (0) target = $region33
  $region32: #{wdecnn_forward.1} parent=0 // pred_region
    _
  $region33: #{wdecnn_forward.1} parent=0 // pred_fallthru
    _
  // Predicated region
  $region34: #{wdecnn_forward.1} parent=0 // pred_check
    _
  $region35: #{wdecnn_forward.1} parent=0 // pred_check_branch
    %34 = sbr.rel (0) target = $region37
  $region36: #{wdecnn_forward.1} parent=0 // pred_region
    _
  $region37: #{wdecnn_forward.1} parent=0 // pred_fallthru
    _
  // Predicated region
  $region38: #{wdecnn_forward.1} parent=0 // pred_check
    _
  $region39: #{wdecnn_forward.1} parent=0 // pred_check_branch
    %36 = sbr.rel (0) target = $region41
  $region40: #{wdecnn_forward.1} parent=0 // pred_region
    _
  $region41: #{wdecnn_forward.1} parent=0 // pred_fallthru
    _
  // Predicated region
  $region42: #{wdecnn_forward.1} parent=0 // pred_check
    _
  $region43: #{wdecnn_forward.1} parent=0 // pred_check_branch
    %38 = sbr.rel (0) target = $region45
  $region44: #{wdecnn_forward.1} parent=0 // pred_region
    _
  $region45: #{wdecnn_forward.1} parent=0 // pred_fallthru
    _
  // Predicated region
  $region46: #{wdecnn_forward.1} parent=0 // pred_check
    _
  $region47: #{wdecnn_forward.1} parent=0 // pred_check_branch
    %40 = sbr.rel (0) target = $region49
  $region48: #{wdecnn_forward.1} parent=0 // pred_region
    _
  $region49: #{wdecnn_forward.1} parent=0 // pred_fallthru
    _
  %v42 = vld [vmem:[%s0] sm:$0xff]
  %v43 = vld [vmem:[%s0 + $0x8] sm:$0xff]
  %v44 = vlaneseq
  %v45 = vand.u32 %v44, 127
  %46 = vset.pattern.permute.xlu0 0
  %47 = vperm.xlu0 %46, %v42
  %v48 = vpop.permute.xlu0 %47
  %49 = vset.pattern.permute.xlu0 0
  %50 = vperm.xlu0 %49, %v43
  %v51 = vpop.permute.xlu0 %50
  %vm52 = vcmp.eq.s32.totalorder %v48, %v45
  %vm53 = vcmp.eq.s32.totalorder %v51, %v45
  %v54 = vsel %vm52, 1, 0
  %v55 = vsel %vm53, 1, 0
  %v56 = vcvt.s32.f32 %v54
  %v57 = vcvt.s32.f32 %v55
  %v58 = vpack.c.bf16 %v57, %v56
  %v59 = vld [vmem:[%s2] sm:$0xff]
  %v60 = vld [vmem:[%s2 + $0x8] sm:$0xf]
  %v61 = vld [vmem:[%s2 + $0xc] sm:$0xff]
  %v62 = vld [vmem:[%s2 + $0x14] sm:$0xf]
  %v63 = vld [vmem:[%s2 + $0x18] sm:$0xff]
  %v64 = vld [vmem:[%s2 + $0x20] sm:$0xf]
  %v65 = vld [vmem:[%s2 + $0x24] sm:$0xff]
  %v66 = vld [vmem:[%s2 + $0x2c] sm:$0xf]
  %v75 = vunpack.c.l.b16 %v59
  %v76 = vunpack.c.h.b16 %v59
  %v77 = vunpack.c.l.b16 %v60
  %v78 = vunpack.c.l.b16 %v61
  %v79 = vunpack.c.h.b16 %v61
  %v80 = vunpack.c.l.b16 %v62
  %v81 = vunpack.c.l.b16 %v63
  %v82 = vunpack.c.h.b16 %v63
  %v83 = vunpack.c.l.b16 %v64
  %v84 = vunpack.c.l.b16 %v65
  %v85 = vunpack.c.h.b16 %v65
  %v86 = vunpack.c.l.b16 %v66
  %v87 = vpack.c.b16 %v78, %v75
  %v88 = vpack.c.b16 %v79, %v76
  %v89 = vpack.c.b16 %v80, %v77
  %v90 = vpack.c.b16 %v84, %v81
  %v91 = vpack.c.b16 %v85, %v82
  %v92 = vpack.c.b16 %v86, %v83
  %vm99 = vcmask 261120
  %v101 = vsel %vm99, %v58, 0
  %103 = vmatprep.subr.bf16.mxu0 %v88
  %104 = vmatpush1.bf16.msra.mxu0 %v87
  %105 = vmatprep.subr.bf16.mxu0 %v91
  %106 = vmatpush1.bf16.msra.mxu0 %v90
  %107 = vmatprep.subr.bf16.mxu0 0
  %108 = vmatpush1.bf16.msra.mxu0 0
  %109 = vmatprep.subr.bf16.mxu0 0
  %110 = vmatpush1.bf16.msra.mxu0 0
  %111 = vmatprep.subr.bf16.mxu0 0
  %112 = vmatpush1.bf16.msra.mxu0 0
  %113 = vmatprep.subr.bf16.mxu0 0
  %114 = vmatpush1.bf16.msra.mxu0 0
  %115 = vmatprep.subr.bf16.mxu0 0
  %116 = vmatpush1.bf16.msra.mxu0 0
  %117 = vmatprep.subr.bf16.mxu0 0
  %118 = vmatpush1.bf16.msra.mxu0 0
  %119 = vmatprep.subr.bf16.mxu0 0
  %120 = vmatpush1.bf16.msra.mxu0 0
  %121 = vmatprep.subr.bf16.mxu0 0
  %122 = vmatpush1.bf16.msra.mxu0 0
  %123 = vmatprep.subr.bf16.mxu0 0
  %124 = vmatpush1.bf16.msra.mxu0 0
  %125 = vmatprep.subr.bf16.mxu0 0
  %126 = vmatpush1.bf16.msra.mxu0 0
  %127 = vmatprep.subr.bf16.mxu0 0
  %128 = vmatpush1.bf16.msra.mxu0 0
  %129 = vmatprep.subr.bf16.mxu0 0
  %130 = vmatpush1.bf16.msra.mxu0 0
  %131 = vmatprep.subr.bf16.mxu0 0
  %132 = vmatpush1.bf16.msra.mxu0 0
  %133 = vmatprep.subr.bf16.mxu0 0
  %134 = vmatpush1.bf16.msra.mxu0 0
  %135 = vmatprep.mubr.bf16.mxu0 0
  %136 = vmatmul.mubr.bf16.gmra.mrb[0].mxu0 %v101
  %v137 = vpop.f32.mrb[0].mxu0
  %v138 = vadd.f32 0.0, %v137
  %v139 = vpop.f32.mrb[0].mxu0
  %v140 = vadd.f32 0.0, %v139
  %v141 = vpop.f32.mrb[0].mxu0
  %v142 = vadd.f32 0.0, %v141
  %v143 = vpop.f32.mrb[0].mxu0
  %v144 = vadd.f32 0.0, %v143
  %145 = vdwg.mxu0
  %146 = vmatprep.subr.bf16.mxu0 0
  %147 = vmatpush1.bf16.msra.mxu0 %v89
  %148 = vmatprep.subr.bf16.mxu0 0
  %149 = vmatpush1.bf16.msra.mxu0 %v92
  %150 = vmatprep.subr.bf16.mxu0 0
  %151 = vmatpush1.bf16.msra.mxu0 0
  %152 = vmatprep.subr.bf16.mxu0 0
  %153 = vmatpush1.bf16.msra.mxu0 0
  %154 = vmatprep.subr.bf16.mxu0 0
  %155 = vmatpush1.bf16.msra.mxu0 0
  %156 = vmatprep.subr.bf16.mxu0 0
  %157 = vmatpush1.bf16.msra.mxu0 0
  %158 = vmatprep.subr.bf16.mxu0 0
  %159 = vmatpush1.bf16.msra.mxu0 0
  %160 = vmatprep.subr.bf16.mxu0 0
  %161 = vmatpush1.bf16.msra.mxu0 0
  %162 = vmatprep.subr.bf16.mxu0 0
  %163 = vmatpush1.bf16.msra.mxu0 0
  %164 = vmatprep.subr.bf16.mxu0 0
  %165 = vmatpush1.bf16.msra.mxu0 0
  %166 = vmatprep.subr.bf16.mxu0 0
  %167 = vmatpush1.bf16.msra.mxu0 0
  %168 = vmatprep.subr.bf16.mxu0 0
  %169 = vmatpush1.bf16.msra.mxu0 0
  %170 = vmatprep.subr.bf16.mxu0 0
  %171 = vmatpush1.bf16.msra.mxu0 0
  %172 = vmatprep.subr.bf16.mxu0 0
  %173 = vmatpush1.bf16.msra.mxu0 0
  %174 = vmatprep.subr.bf16.mxu0 0
  %175 = vmatpush1.bf16.msra.mxu0 0
  %176 = vmatprep.subr.bf16.mxu0 0
  %177 = vmatpush1.bf16.msra.mxu0 0
  %178 = vmatprep.mubr.bf16.mxu0 0
  %179 = vmatmul.mubr.bf16.gmra.mrb[0].mxu0 %v101
  %v180 = vpop.f32.mrb[0].mxu0
  %v181 = vadd.f32 0.0, %v180
  %v182 = vpop.f32.mrb[0].mxu0
  %v183 = vpop.f32.mrb[0].mxu0
  %v184 = vadd.f32 0.0, %v183
  %v185 = vpop.f32.mrb[0].mxu0
  %186 = vdwg.mxu0
  %v187 = vpack.c.bf16 %v142, %v138
  %v188 = vpack.c.bf16 %v144, %v140
  %v189 = vpack.c.bf16 %v184, %v181
  %v190 = vld [vmem:[%s3] sm:$0xff]
  %v191 = vld [vmem:[%s3 + $0x8] sm:$0xff]
  %v192 = vld [vmem:[%s3 + $0x10] sm:$0xff]
  %v193 = vld [vmem:[%s3 + $0x18] sm:$0xff]
  %v194 = vld [vmem:[%s3 + $0x20] sm:$0xff]
  %v195 = vld [vmem:[%s3 + $0x28] sm:$0xff]
  %v196 = vld [vmem:[%s3 + $0x30] sm:$0xff]
  %v197 = vld [vmem:[%s3 + $0x38] sm:$0xff]
  %v198 = vld [vmem:[%s3 + $0x40] sm:$0xff]
  %v199 = vld [vmem:[%s3 + $0x48] sm:$0xff]
  %v200 = vld [vmem:[%s3 + $0x50] sm:$0xff]
  %v201 = vld [vmem:[%s3 + $0x58] sm:$0xff]
  %v202 = vld [vmem:[%s3 + $0x60] sm:$0xff]
  %v203 = vld [vmem:[%s3 + $0x68] sm:$0xff]
  %v204 = vld [vmem:[%s3 + $0x70] sm:$0xff]
  %v205 = vld [vmem:[%s3 + $0x78] sm:$0xff]
  %v206 = vld [vmem:[%s3 + $0x80] sm:$0xff]
  %v207 = vld [vmem:[%s3 + $0x88] sm:$0xff]
  %v208 = vld [vmem:[%s3 + $0x90] sm:$0xff]
  %v209 = vld [vmem:[%s3 + $0x98] sm:$0xff]
  %v210 = vld [vmem:[%s3 + $0xa0] sm:$0xff]
  %v211 = vld [vmem:[%s3 + $0xa8] sm:$0xff]
  %v212 = vld [vmem:[%s3 + $0xb0] sm:$0xff]
  %v213 = vld [vmem:[%s3 + $0xb8] sm:$0xff]
  %v214 = vld [vmem:[%s3 + $0xc0] sm:$0xff]
  %v215 = vld [vmem:[%s3 + $0xc8] sm:$0xff]
  %v216 = vld [vmem:[%s3 + $0xd0] sm:$0xff]
  %v217 = vld [vmem:[%s3 + $0xd8] sm:$0xff]
  %v218 = vld [vmem:[%s3 + $0xe0] sm:$0xff]
  %v219 = vld [vmem:[%s3 + $0xe8] sm:$0xff]
  %v220 = vld [vmem:[%s3 + $0xf0] sm:$0xff]
  %v221 = vld [vmem:[%s3 + $0xf8] sm:$0xff]
  %v222 = vld [vmem:[%s3 + $0x100] sm:$0xff]
  %v223 = vld [vmem:[%s3 + $0x108] sm:$0xff]
  %v224 = vld [vmem:[%s3 + $0x110] sm:$0xff]
  %v225 = vld [vmem:[%s3 + $0x118] sm:$0xff]
  %v226 = vld [vmem:[%s3 + $0x120] sm:$0xff]
  %v227 = vld [vmem:[%s3 + $0x128] sm:$0xff]
  %v228 = vld [vmem:[%s3 + $0x130] sm:$0xff]
  %v229 = vld [vmem:[%s3 + $0x138] sm:$0xff]
  %v230 = vld [vmem:[%s3 + $0x140] sm:$0xff]
  %v231 = vld [vmem:[%s3 + $0x148] sm:$0xff]
  %v232 = vld [vmem:[%s3 + $0x150] sm:$0xff]
  %v233 = vld [vmem:[%s3 + $0x158] sm:$0xff]
  %v234 = vld [vmem:[%s3 + $0x160] sm:$0xff]
  %v235 = vld [vmem:[%s3 + $0x168] sm:$0xff]
  %v236 = vld [vmem:[%s3 + $0x170] sm:$0xff]
  %v237 = vld [vmem:[%s3 + $0x178] sm:$0xff]
  %v238 = vld [vmem:[%s3 + $0x180] sm:$0xff]
  %v239 = vld [vmem:[%s3 + $0x188] sm:$0xff]
  %v240 = vld [vmem:[%s3 + $0x190] sm:$0xff]
  %v241 = vld [vmem:[%s3 + $0x198] sm:$0xff]
  %v242 = vld [vmem:[%s3 + $0x1a0] sm:$0xff]
  %v243 = vld [vmem:[%s3 + $0x1a8] sm:$0xff]
  %v244 = vld [vmem:[%s3 + $0x1b0] sm:$0xff]
  %v245 = vld [vmem:[%s3 + $0x1b8] sm:$0xff]
  %v246 = vld [vmem:[%s3 + $0x1c0] sm:$0xff]
  %v247 = vld [vmem:[%s3 + $0x1c8] sm:$0xff]
  %v248 = vld [vmem:[%s3 + $0x1d0] sm:$0xff]
  %v249 = vld [vmem:[%s3 + $0x1d8] sm:$0xff]
  %v250 = vld [vmem:[%s3 + $0x1e0] sm:$0xff]
  %v251 = vld [vmem:[%s3 + $0x1e8] sm:$0xff]
  %v252 = vld [vmem:[%s3 + $0x1f0] sm:$0xff]
  %v253 = vld [vmem:[%s3 + $0x1f8] sm:$0xff]
  %v254 = vld [vmem:[%s3 + $0x200] sm:$0xff]
  %v255 = vld [vmem:[%s3 + $0x208] sm:$0xff]
  %v256 = vld [vmem:[%s3 + $0x210] sm:$0xff]
  %v257 = vld [vmem:[%s3 + $0x218] sm:$0xff]
  %v258 = vld [vmem:[%s3 + $0x220] sm:$0xff]
  %v259 = vld [vmem:[%s3 + $0x228] sm:$0xff]
  %v260 = vld [vmem:[%s3 + $0x230] sm:$0xff]
  %v261 = vld [vmem:[%s3 + $0x238] sm:$0xff]
  %v262 = vld [vmem:[%s3 + $0x240] sm:$0xff]
  %v263 = vld [vmem:[%s3 + $0x248] sm:$0xff]
  %v264 = vld [vmem:[%s3 + $0x250] sm:$0xff]
  %v265 = vld [vmem:[%s3 + $0x258] sm:$0xff]
  %v266 = vld [vmem:[%s3 + $0x260] sm:$0xff]
  %v267 = vld [vmem:[%s3 + $0x268] sm:$0xff]
  %v268 = vld [vmem:[%s3 + $0x270] sm:$0xff]
  %v269 = vld [vmem:[%s3 + $0x278] sm:$0xff]
  %v270 = vld [vmem:[%s3 + $0x280] sm:$0xff]
  %v271 = vld [vmem:[%s3 + $0x288] sm:$0xff]
  %v272 = vld [vmem:[%s3 + $0x290] sm:$0xff]
  %v273 = vld [vmem:[%s3 + $0x298] sm:$0xff]
  %v274 = vld [vmem:[%s3 + $0x2a0] sm:$0xff]
  %v275 = vld [vmem:[%s3 + $0x2a8] sm:$0xff]
  %v276 = vld [vmem:[%s3 + $0x2b0] sm:$0xff]
  %v277 = vld [vmem:[%s3 + $0x2b8] sm:$0xff]
  %v278 = vld [vmem:[%s3 + $0x2c0] sm:$0xff]
  %v279 = vld [vmem:[%s3 + $0x2c8] sm:$0xff]
  %v280 = vld [vmem:[%s3 + $0x2d0] sm:$0xff]
  %v281 = vld [vmem:[%s3 + $0x2d8] sm:$0xff]
  %v282 = vld [vmem:[%s3 + $0x2e0] sm:$0xff]
  %v283 = vld [vmem:[%s3 + $0x2e8] sm:$0xff]
  %v284 = vld [vmem:[%s3 + $0x2f0] sm:$0xff]
  %v285 = vld [vmem:[%s3 + $0x2f8] sm:$0xff]
  %v286 = vld [vmem:[%s3 + $0x300] sm:$0xff]
  %v287 = vld [vmem:[%s3 + $0x308] sm:$0xff]
  %v288 = vld [vmem:[%s3 + $0x310] sm:$0xff]
  %v289 = vld [vmem:[%s3 + $0x318] sm:$0xff]
  %v290 = vld [vmem:[%s3 + $0x320] sm:$0xff]
  %v291 = vld [vmem:[%s3 + $0x328] sm:$0xff]
  %v292 = vld [vmem:[%s3 + $0x330] sm:$0xff]
  %v293 = vld [vmem:[%s3 + $0x338] sm:$0xff]
  %v294 = vld [vmem:[%s3 + $0x340] sm:$0xff]
  %v295 = vld [vmem:[%s3 + $0x348] sm:$0xff]
  %v296 = vld [vmem:[%s3 + $0x350] sm:$0xff]
  %v297 = vld [vmem:[%s3 + $0x358] sm:$0xff]
  %v298 = vld [vmem:[%s3 + $0x360] sm:$0xff]
  %v299 = vld [vmem:[%s3 + $0x368] sm:$0xff]
  %v300 = vld [vmem:[%s3 + $0x370] sm:$0xff]
  %v301 = vld [vmem:[%s3 + $0x378] sm:$0xff]
  %v302 = vld [vmem:[%s3 + $0x380] sm:$0xff]
  %v303 = vld [vmem:[%s3 + $0x388] sm:$0xff]
  %v304 = vld [vmem:[%s3 + $0x390] sm:$0xff]
  %v305 = vld [vmem:[%s3 + $0x398] sm:$0xff]
  %v306 = vld [vmem:[%s3 + $0x3a0] sm:$0xff]
  %v307 = vld [vmem:[%s3 + $0x3a8] sm:$0xff]
  %v308 = vld [vmem:[%s3 + $0x3b0] sm:$0xff]
  %v309 = vld [vmem:[%s3 + $0x3b8] sm:$0xff]
  %v310 = vld [vmem:[%s3 + $0x3c0] sm:$0xff]
  %v311 = vld [vmem:[%s3 + $0x3c8] sm:$0xff]
  %v312 = vld [vmem:[%s3 + $0x3d0] sm:$0xff]
  %v313 = vld [vmem:[%s3 + $0x3d8] sm:$0xff]
  %v314 = vld [vmem:[%s3 + $0x3e0] sm:$0xff]
  %v315 = vld [vmem:[%s3 + $0x3e8] sm:$0xff]
  %v316 = vld [vmem:[%s3 + $0x3f0] sm:$0xff]
  %v317 = vld [vmem:[%s3 + $0x3f8] sm:$0xff]
  %v318 = vld [vmem:[%s3 + $0x400] sm:$0xff]
  %v319 = vld [vmem:[%s3 + $0x408] sm:$0xff]
  %v320 = vld [vmem:[%s3 + $0x410] sm:$0xff]
  %v321 = vld [vmem:[%s3 + $0x418] sm:$0xff]
  %v322 = vld [vmem:[%s3 + $0x420] sm:$0xff]
  %v323 = vld [vmem:[%s3 + $0x428] sm:$0xff]
  %v324 = vld [vmem:[%s3 + $0x430] sm:$0xff]
  %v325 = vld [vmem:[%s3 + $0x438] sm:$0xff]
  %v326 = vld [vmem:[%s3 + $0x440] sm:$0xff]
  %v327 = vld [vmem:[%s3 + $0x448] sm:$0xff]
  %v328 = vld [vmem:[%s3 + $0x450] sm:$0xff]
  %v329 = vld [vmem:[%s3 + $0x458] sm:$0xff]
  %v330 = vld [vmem:[%s3 + $0x460] sm:$0xff]
  %v331 = vld [vmem:[%s3 + $0x468] sm:$0xff]
  %v332 = vld [vmem:[%s3 + $0x470] sm:$0xff]
  %v333 = vld [vmem:[%s3 + $0x478] sm:$0xff]
  %v334 = vld [vmem:[%s3 + $0x480] sm:$0xff]
  %v335 = vld [vmem:[%s3 + $0x488] sm:$0xff]
  %v336 = vld [vmem:[%s3 + $0x490] sm:$0xff]
  %v337 = vld [vmem:[%s3 + $0x498] sm:$0xff]
  %v338 = vld [vmem:[%s3 + $0x4a0] sm:$0xff]
  %v339 = vld [vmem:[%s3 + $0x4a8] sm:$0xff]
  %v340 = vld [vmem:[%s3 + $0x4b0] sm:$0xff]
  %v341 = vld [vmem:[%s3 + $0x4b8] sm:$0xff]
  %v342 = vld [vmem:[%s3 + $0x4c0] sm:$0xff]
  %v343 = vld [vmem:[%s3 + $0x4c8] sm:$0xff]
  %v344 = vld [vmem:[%s3 + $0x4d0] sm:$0xff]
  %v345 = vld [vmem:[%s3 + $0x4d8] sm:$0xff]
  %v346 = vld [vmem:[%s3 + $0x4e0] sm:$0xff]
  %v347 = vld [vmem:[%s3 + $0x4e8] sm:$0xff]
  %v348 = vld [vmem:[%s3 + $0x4f0] sm:$0xff]
  %v349 = vld [vmem:[%s3 + $0x4f8] sm:$0xff]
  %v350 = vld [vmem:[%s3 + $0x500] sm:$0xff]
  %v351 = vld [vmem:[%s3 + $0x508] sm:$0xff]
  %v352 = vld [vmem:[%s3 + $0x510] sm:$0xff]
  %v353 = vld [vmem:[%s3 + $0x518] sm:$0xff]
  %v354 = vld [vmem:[%s3 + $0x520] sm:$0xff]
  %v355 = vld [vmem:[%s3 + $0x528] sm:$0xff]
  %v356 = vld [vmem:[%s3 + $0x530] sm:$0xff]
  %v357 = vld [vmem:[%s3 + $0x538] sm:$0xff]
  %v358 = vld [vmem:[%s3 + $0x540] sm:$0xff]
  %v359 = vld [vmem:[%s3 + $0x548] sm:$0xff]
  %v360 = vld [vmem:[%s3 + $0x550] sm:$0xff]
  %v361 = vld [vmem:[%s3 + $0x558] sm:$0xff]
  %v362 = vld [vmem:[%s3 + $0x560] sm:$0xff]
  %v363 = vld [vmem:[%s3 + $0x568] sm:$0xff]
  %v364 = vld [vmem:[%s3 + $0x570] sm:$0xff]
  %v365 = vld [vmem:[%s3 + $0x578] sm:$0xff]
  %v366 = vld [vmem:[%s3 + $0x580] sm:$0xff]
  %v367 = vld [vmem:[%s3 + $0x588] sm:$0xff]
  %v368 = vld [vmem:[%s3 + $0x590] sm:$0xff]
  %v369 = vld [vmem:[%s3 + $0x598] sm:$0xff]
  %v370 = vld [vmem:[%s3 + $0x5a0] sm:$0xff]
  %v371 = vld [vmem:[%s3 + $0x5a8] sm:$0xff]
  %v372 = vld [vmem:[%s3 + $0x5b0] sm:$0xff]
  %v373 = vld [vmem:[%s3 + $0x5b8] sm:$0xff]
  %v374 = vld [vmem:[%s3 + $0x5c0] sm:$0xff]
  %v375 = vld [vmem:[%s3 + $0x5c8] sm:$0xff]
  %v376 = vld [vmem:[%s3 + $0x5d0] sm:$0xff]
  %v377 = vld [vmem:[%s3 + $0x5d8] sm:$0xff]
  %v378 = vld [vmem:[%s3 + $0x5e0] sm:$0xff]
  %v379 = vld [vmem:[%s3 + $0x5e8] sm:$0xff]
  %v380 = vld [vmem:[%s3 + $0x5f0] sm:$0xff]
  %v381 = vld [vmem:[%s3 + $0x5f8] sm:$0xff]
  %v382 = vld [vmem:[%s3 + $0x600] sm:$0xff]
  %v383 = vld [vmem:[%s3 + $0x608] sm:$0xff]
  %v384 = vld [vmem:[%s3 + $0x610] sm:$0xff]
  %v385 = vld [vmem:[%s3 + $0x618] sm:$0xff]
  %v386 = vld [vmem:[%s3 + $0x620] sm:$0xff]
  %v387 = vld [vmem:[%s3 + $0x628] sm:$0xff]
  %v388 = vld [vmem:[%s3 + $0x630] sm:$0xff]
  %v389 = vld [vmem:[%s3 + $0x638] sm:$0xff]
  %v390 = vld [vmem:[%s3 + $0x640] sm:$0xff]
  %v391 = vld [vmem:[%s3 + $0x648] sm:$0xff]
  %v392 = vld [vmem:[%s3 + $0x650] sm:$0xff]
  %v393 = vld [vmem:[%s3 + $0x658] sm:$0xff]
  %v394 = vld [vmem:[%s3 + $0x660] sm:$0xff]
  %v395 = vld [vmem:[%s3 + $0x668] sm:$0xff]
  %v396 = vld [vmem:[%s3 + $0x670] sm:$0xff]
  %v397 = vld [vmem:[%s3 + $0x678] sm:$0xff]
  %v398 = vld [vmem:[%s3 + $0x680] sm:$0xff]
  %v399 = vld [vmem:[%s3 + $0x688] sm:$0xff]
  %v400 = vld [vmem:[%s3 + $0x690] sm:$0xff]
  %v401 = vld [vmem:[%s3 + $0x698] sm:$0xff]
  %v402 = vld [vmem:[%s3 + $0x6a0] sm:$0xff]
  %v403 = vld [vmem:[%s3 + $0x6a8] sm:$0xff]
  %v404 = vld [vmem:[%s3 + $0x6b0] sm:$0xff]
  %v405 = vld [vmem:[%s3 + $0x6b8] sm:$0xff]
  %v406 = vld [vmem:[%s3 + $0x6c0] sm:$0xff]
  %v407 = vld [vmem:[%s3 + $0x6c8] sm:$0xff]
  %v408 = vld [vmem:[%s3 + $0x6d0] sm:$0xff]
  %v409 = vld [vmem:[%s3 + $0x6d8] sm:$0xff]
  %v410 = vld [vmem:[%s3 + $0x6e0] sm:$0xff]
  %v411 = vld [vmem:[%s3 + $0x6e8] sm:$0xff]
  %v412 = vld [vmem:[%s3 + $0x6f0] sm:$0x33]
  %v413 = vld [vmem:[%s3 + $0x6f8] sm:$0x33]
  %v414 = vld [vmem:[%s3 + $0x700] sm:$0x33]
  %v415 = vld [vmem:[%s3 + $0x708] sm:$0x33]
  %v416 = vld [vmem:[%s3 + $0x710] sm:$0x33]
  %v417 = vld [vmem:[%s3 + $0x718] sm:$0x33]
  %v646 = vunpack.c.l.b16 %v190
  %v647 = vunpack.c.h.b16 %v190
  %v648 = vunpack.c.l.b16 %v191
  %v649 = vunpack.c.h.b16 %v191
  %v650 = vunpack.c.l.b16 %v192
  %v651 = vunpack.c.h.b16 %v192
  %v652 = vunpack.c.l.b16 %v193
  %v653 = vunpack.c.h.b16 %v193
  %v654 = vunpack.c.l.b16 %v194
  %v655 = vunpack.c.h.b16 %v194
  %v656 = vunpack.c.l.b16 %v195
  %v657 = vunpack.c.h.b16 %v195
  %v658 = vunpack.c.l.b16 %v196
  %v659 = vunpack.c.h.b16 %v196
  %v660 = vunpack.c.l.b16 %v197
  %v661 = vunpack.c.h.b16 %v197
  %v662 = vunpack.c.l.b16 %v198
  %v663 = vunpack.c.h.b16 %v198
  %v664 = vunpack.c.l.b16 %v199
  %v665 = vunpack.c.h.b16 %v199
  %v666 = vunpack.c.l.b16 %v200
  %v667 = vunpack.c.h.b16 %v200
  %v668 = vunpack.c.l.b16 %v201
  %v669 = vunpack.c.h.b16 %v201
  %v670 = vunpack.c.l.b16 %v202
  %v671 = vunpack.c.h.b16 %v202
  %v672 = vunpack.c.l.b16 %v203
  %v673 = vunpack.c.h.b16 %v203
  %v674 = vunpack.c.l.b16 %v204
  %v675 = vunpack.c.h.b16 %v204
  %v676 = vunpack.c.l.b16 %v205
  %v677 = vunpack.c.h.b16 %v205
  %v678 = vunpack.c.l.b16 %v206
  %v679 = vunpack.c.h.b16 %v206
  %v680 = vunpack.c.l.b16 %v207
  %v681 = vunpack.c.h.b16 %v207
  %v682 = vunpack.c.l.b16 %v208
  %v683 = vunpack.c.h.b16 %v208
  %v684 = vunpack.c.l.b16 %v209
  %v685 = vunpack.c.h.b16 %v209
  %v686 = vunpack.c.l.b16 %v210
  %v687 = vunpack.c.h.b16 %v210
  %v688 = vunpack.c.l.b16 %v211
  %v689 = vunpack.c.h.b16 %v211
  %v690 = vunpack.c.l.b16 %v212
  %v691 = vunpack.c.h.b16 %v212
  %v692 = vunpack.c.l.b16 %v213
  %v693 = vunpack.c.h.b16 %v213
  %v694 = vunpack.c.l.b16 %v214
  %v695 = vunpack.c.h.b16 %v214
  %v696 = vunpack.c.l.b16 %v215
  %v697 = vunpack.c.h.b16 %v215
  %v698 = vunpack.c.l.b16 %v216
  %v699 = vunpack.c.h.b16 %v216
  %v700 = vunpack.c.l.b16 %v217
  %v701 = vunpack.c.h.b16 %v217
  %v702 = vunpack.c.l.b16 %v218
  %v703 = vunpack.c.h.b16 %v218
  %v704 = vunpack.c.l.b16 %v219
  %v705 = vunpack.c.h.b16 %v219
  %v706 = vunpack.c.l.b16 %v220
  %v707 = vunpack.c.h.b16 %v220
  %v708 = vunpack.c.l.b16 %v221
  %v709 = vunpack.c.h.b16 %v221
  %v710 = vunpack.c.l.b16 %v222
  %v711 = vunpack.c.h.b16 %v222
  %v712 = vunpack.c.l.b16 %v223
  %v713 = vunpack.c.h.b16 %v223
  %v714 = vunpack.c.l.b16 %v224
  %v715 = vunpack.c.h.b16 %v224
  %v716 = vunpack.c.l.b16 %v225
  %v717 = vunpack.c.h.b16 %v225
  %v718 = vunpack.c.l.b16 %v226
  %v719 = vunpack.c.h.b16 %v226
  %v720 = vunpack.c.l.b16 %v227
  %v721 = vunpack.c.h.b16 %v227
  %v722 = vunpack.c.l.b16 %v228
  %v723 = vunpack.c.h.b16 %v228
  %v724 = vunpack.c.l.b16 %v229
  %v725 = vunpack.c.h.b16 %v229
  %v726 = vunpack.c.l.b16 %v230
  %v727 = vunpack.c.h.b16 %v230
  %v728 = vunpack.c.l.b16 %v231
  %v729 = vunpack.c.h.b16 %v231
  %v730 = vunpack.c.l.b16 %v232
  %v731 = vunpack.c.h.b16 %v232
  %v732 = vunpack.c.l.b16 %v233
  %v733 = vunpack.c.h.b16 %v233
  %v734 = vunpack.c.l.b16 %v234
  %v735 = vunpack.c.h.b16 %v234
  %v736 = vunpack.c.l.b16 %v235
  %v737 = vunpack.c.h.b16 %v235
  %v738 = vunpack.c.l.b16 %v236
  %v739 = vunpack.c.h.b16 %v236
  %v740 = vunpack.c.l.b16 %v237
  %v741 = vunpack.c.h.b16 %v237
  %v742 = vunpack.c.l.b16 %v238
  %v743 = vunpack.c.h.b16 %v238
  %v744 = vunpack.c.l.b16 %v239
  %v745 = vunpack.c.h.b16 %v239
  %v746 = vunpack.c.l.b16 %v240
  %v747 = vunpack.c.h.b16 %v240
  %v748 = vunpack.c.l.b16 %v241
  %v749 = vunpack.c.h.b16 %v241
  %v750 = vunpack.c.l.b16 %v242
  %v751 = vunpack.c.h.b16 %v242
  %v752 = vunpack.c.l.b16 %v243
  %v753 = vunpack.c.h.b16 %v243
  %v754 = vunpack.c.l.b16 %v244
  %v755 = vunpack.c.h.b16 %v244
  %v756 = vunpack.c.l.b16 %v245
  %v757 = vunpack.c.h.b16 %v245
  %v758 = vunpack.c.l.b16 %v246
  %v759 = vunpack.c.h.b16 %v246
  %v760 = vunpack.c.l.b16 %v247
  %v761 = vunpack.c.h.b16 %v247
  %v762 = vunpack.c.l.b16 %v248
  %v763 = vunpack.c.h.b16 %v248
  %v764 = vunpack.c.l.b16 %v249
  %v765 = vunpack.c.h.b16 %v249
  %v766 = vunpack.c.l.b16 %v250
  %v767 = vunpack.c.h.b16 %v250
  %v768 = vunpack.c.l.b16 %v251
  %v769 = vunpack.c.h.b16 %v251
  %v770 = vunpack.c.l.b16 %v252
  %v771 = vunpack.c.h.b16 %v252
  %v772 = vunpack.c.l.b16 %v253
  %v773 = vunpack.c.h.b16 %v253
  %v774 = vunpack.c.l.b16 %v254
  %v775 = vunpack.c.h.b16 %v254
  %v776 = vunpack.c.l.b16 %v255
  %v777 = vunpack.c.h.b16 %v255
  %v778 = vunpack.c.l.b16 %v256
  %v779 = vunpack.c.h.b16 %v256
  %v780 = vunpack.c.l.b16 %v257
  %v781 = vunpack.c.h.b16 %v257
  %v782 = vunpack.c.l.b16 %v258
  %v783 = vunpack.c.h.b16 %v258
  %v784 = vunpack.c.l.b16 %v259
  %v785 = vunpack.c.h.b16 %v259
  %v786 = vunpack.c.l.b16 %v260
  %v787 = vunpack.c.h.b16 %v260
  %v788 = vunpack.c.l.b16 %v261
  %v789 = vunpack.c.h.b16 %v261
  %v790 = vunpack.c.l.b16 %v262
  %v791 = vunpack.c.h.b16 %v262
  %v792 = vunpack.c.l.b16 %v263
  %v793 = vunpack.c.h.b16 %v263
  %v794 = vunpack.c.l.b16 %v264
  %v795 = vunpack.c.h.b16 %v264
  %v796 = vunpack.c.l.b16 %v265
  %v797 = vunpack.c.h.b16 %v265
  %v798 = vunpack.c.l.b16 %v266
  %v799 = vunpack.c.h.b16 %v266
  %v800 = vunpack.c.l.b16 %v267
  %v801 = vunpack.c.h.b16 %v267
  %v802 = vunpack.c.l.b16 %v268
  %v803 = vunpack.c.h.b16 %v268
  %v804 = vunpack.c.l.b16 %v269
  %v805 = vunpack.c.h.b16 %v269
  %v806 = vunpack.c.l.b16 %v270
  %v807 = vunpack.c.h.b16 %v270
  %v808 = vunpack.c.l.b16 %v271
  %v809 = vunpack.c.h.b16 %v271
  %v810 = vunpack.c.l.b16 %v272
  %v811 = vunpack.c.h.b16 %v272
  %v812 = vunpack.c.l.b16 %v273
  %v813 = vunpack.c.h.b16 %v273
  %v814 = vunpack.c.l.b16 %v274
  %v815 = vunpack.c.h.b16 %v274
  %v816 = vunpack.c.l.b16 %v275
  %v817 = vunpack.c.h.b16 %v275
  %v818 = vunpack.c.l.b16 %v276
  %v819 = vunpack.c.h.b16 %v276
  %v820 = vunpack.c.l.b16 %v277
  %v821 = vunpack.c.h.b16 %v277
  %v822 = vunpack.c.l.b16 %v278
  %v823 = vunpack.c.h.b16 %v278
  %v824 = vunpack.c.l.b16 %v279
  %v825 = vunpack.c.h.b16 %v279
  %v826 = vunpack.c.l.b16 %v280
  %v827 = vunpack.c.h.b16 %v280
  %v828 = vunpack.c.l.b16 %v281
  %v829 = vunpack.c.h.b16 %v281
  %v830 = vunpack.c.l.b16 %v282
  %v831 = vunpack.c.h.b16 %v282
  %v832 = vunpack.c.l.b16 %v283
  %v833 = vunpack.c.h.b16 %v283
  %v834 = vunpack.c.l.b16 %v284
  %v835 = vunpack.c.h.b16 %v284
  %v836 = vunpack.c.l.b16 %v285
  %v837 = vunpack.c.h.b16 %v285
  %v838 = vunpack.c.l.b16 %v286
  %v839 = vunpack.c.h.b16 %v286
  %v840 = vunpack.c.l.b16 %v287
  %v841 = vunpack.c.h.b16 %v287
  %v842 = vunpack.c.l.b16 %v288
  %v843 = vunpack.c.h.b16 %v288
  %v844 = vunpack.c.l.b16 %v289
  %v845 = vunpack.c.h.b16 %v289
  %v846 = vunpack.c.l.b16 %v290
  %v847 = vunpack.c.h.b16 %v290
  %v848 = vunpack.c.l.b16 %v291
  %v849 = vunpack.c.h.b16 %v291
  %v850 = vunpack.c.l.b16 %v292
  %v851 = vunpack.c.h.b16 %v292
  %v852 = vunpack.c.l.b16 %v293
  %v853 = vunpack.c.h.b16 %v293
  %v854 = vunpack.c.l.b16 %v294
  %v855 = vunpack.c.h.b16 %v294
  %v856 = vunpack.c.l.b16 %v295
  %v857 = vunpack.c.h.b16 %v295
  %v858 = vunpack.c.l.b16 %v296
  %v859 = vunpack.c.h.b16 %v296
  %v860 = vunpack.c.l.b16 %v297
  %v861 = vunpack.c.h.b16 %v297
  %v862 = vunpack.c.l.b16 %v298
  %v863 = vunpack.c.h.b16 %v298
  %v864 = vunpack.c.l.b16 %v299
  %v865 = vunpack.c.h.b16 %v299
  %v866 = vunpack.c.l.b16 %v300
  %v867 = vunpack.c.h.b16 %v300
  %v868 = vunpack.c.l.b16 %v301
  %v869 = vunpack.c.h.b16 %v301
  %v870 = vunpack.c.l.b16 %v302
  %v871 = vunpack.c.h.b16 %v302
  %v872 = vunpack.c.l.b16 %v303
  %v873 = vunpack.c.h.b16 %v303
  %v874 = vunpack.c.l.b16 %v304
  %v875 = vunpack.c.h.b16 %v304
  %v876 = vunpack.c.l.b16 %v305
  %v877 = vunpack.c.h.b16 %v305
  %v878 = vunpack.c.l.b16 %v306
  %v879 = vunpack.c.h.b16 %v306
  %v880 = vunpack.c.l.b16 %v307
  %v881 = vunpack.c.h.b16 %v307
  %v882 = vunpack.c.l.b16 %v308
  %v883 = vunpack.c.h.b16 %v308
  %v884 = vunpack.c.l.b16 %v309
  %v885 = vunpack.c.h.b16 %v309
  %v886 = vunpack.c.l.b16 %v310
  %v887 = vunpack.c.h.b16 %v310
  %v888 = vunpack.c.l.b16 %v311
  %v889 = vunpack.c.h.b16 %v311
  %v890 = vunpack.c.l.b16 %v312
  %v891 = vunpack.c.h.b16 %v312
  %v892 = vunpack.c.l.b16 %v313
  %v893 = vunpack.c.h.b16 %v313
  %v894 = vunpack.c.l.b16 %v314
  %v895 = vunpack.c.h.b16 %v314
  %v896 = vunpack.c.l.b16 %v315
  %v897 = vunpack.c.h.b16 %v315
  %v898 = vunpack.c.l.b16 %v316
  %v899 = vunpack.c.h.b16 %v316
  %v900 = vunpack.c.l.b16 %v317
  %v901 = vunpack.c.h.b16 %v317
  %v902 = vunpack.c.l.b16 %v318
  %v903 = vunpack.c.h.b16 %v318
  %v904 = vunpack.c.l.b16 %v319
  %v905 = vunpack.c.h.b16 %v319
  %v906 = vunpack.c.l.b16 %v320
  %v907 = vunpack.c.h.b16 %v320
  %v908 = vunpack.c.l.b16 %v321
  %v909 = vunpack.c.h.b16 %v321
  %v910 = vunpack.c.l.b16 %v322
  %v911 = vunpack.c.h.b16 %v322
  %v912 = vunpack.c.l.b16 %v323
  %v913 = vunpack.c.h.b16 %v323
  %v914 = vunpack.c.l.b16 %v324
  %v915 = vunpack.c.h.b16 %v324
  %v916 = vunpack.c.l.b16 %v325
  %v917 = vunpack.c.h.b16 %v325
  %v918 = vunpack.c.l.b16 %v326
  %v919 = vunpack.c.h.b16 %v326
  %v920 = vunpack.c.l.b16 %v327
  %v921 = vunpack.c.h.b16 %v327
  %v922 = vunpack.c.l.b16 %v328
  %v923 = vunpack.c.h.b16 %v328
  %v924 = vunpack.c.l.b16 %v329
  %v925 = vunpack.c.h.b16 %v329
  %v926 = vunpack.c.l.b16 %v330
  %v927 = vunpack.c.h.b16 %v330
  %v928 = vunpack.c.l.b16 %v331
  %v929 = vunpack.c.h.b16 %v331
  %v930 = vunpack.c.l.b16 %v332
  %v931 = vunpack.c.h.b16 %v332
  %v932 = vunpack.c.l.b16 %v333
  %v933 = vunpack.c.h.b16 %v333
  %v934 = vunpack.c.l.b16 %v334
  %v935 = vunpack.c.h.b16 %v334
  %v936 = vunpack.c.l.b16 %v335
  %v937 = vunpack.c.h.b16 %v335
  %v938 = vunpack.c.l.b16 %v336
  %v939 = vunpack.c.h.b16 %v336
  %v940 = vunpack.c.l.b16 %v337
  %v941 = vunpack.c.h.b16 %v337
  %v942 = vunpack.c.l.b16 %v338
  %v943 = vunpack.c.h.b16 %v338
  %v944 = vunpack.c.l.b16 %v339
  %v945 = vunpack.c.h.b16 %v339
  %v946 = vunpack.c.l.b16 %v340
  %v947 = vunpack.c.h.b16 %v340
  %v948 = vunpack.c.l.b16 %v341
  %v949 = vunpack.c.h.b16 %v341
  %v950 = vunpack.c.l.b16 %v342
  %v951 = vunpack.c.h.b16 %v342
  %v952 = vunpack.c.l.b16 %v343
  %v953 = vunpack.c.h.b16 %v343
  %v954 = vunpack.c.l.b16 %v344
  %v955 = vunpack.c.h.b16 %v344
  %v956 = vunpack.c.l.b16 %v345
  %v957 = vunpack.c.h.b16 %v345
  %v958 = vunpack.c.l.b16 %v346
  %v959 = vunpack.c.h.b16 %v346
  %v960 = vunpack.c.l.b16 %v347
  %v961 = vunpack.c.h.b16 %v347
  %v962 = vunpack.c.l.b16 %v348
  %v963 = vunpack.c.h.b16 %v348
  %v964 = vunpack.c.l.b16 %v349
  %v965 = vunpack.c.h.b16 %v349
  %v966 = vunpack.c.l.b16 %v350
  %v967 = vunpack.c.h.b16 %v350
  %v968 = vunpack.c.l.b16 %v351
  %v969 = vunpack.c.h.b16 %v351
  %v970 = vunpack.c.l.b16 %v352
  %v971 = vunpack.c.h.b16 %v352
  %v972 = vunpack.c.l.b16 %v353
  %v973 = vunpack.c.h.b16 %v353
  %v974 = vunpack.c.l.b16 %v354
  %v975 = vunpack.c.h.b16 %v354
  %v976 = vunpack.c.l.b16 %v355
  %v977 = vunpack.c.h.b16 %v355
  %v978 = vunpack.c.l.b16 %v356
  %v979 = vunpack.c.h.b16 %v356
  %v980 = vunpack.c.l.b16 %v357
  %v981 = vunpack.c.h.b16 %v357
  %v982 = vunpack.c.l.b16 %v358
  %v983 = vunpack.c.h.b16 %v358
  %v984 = vunpack.c.l.b16 %v359
  %v985 = vunpack.c.h.b16 %v359
  %v986 = vunpack.c.l.b16 %v360
  %v987 = vunpack.c.h.b16 %v360
  %v988 = vunpack.c.l.b16 %v361
  %v989 = vunpack.c.h.b16 %v361
  %v990 = vunpack.c.l.b16 %v362
  %v991 = vunpack.c.h.b16 %v362
  %v992 = vunpack.c.l.b16 %v363
  %v993 = vunpack.c.h.b16 %v363
  %v994 = vunpack.c.l.b16 %v364
  %v995 = vunpack.c.h.b16 %v364
  %v996 = vunpack.c.l.b16 %v365
  %v997 = vunpack.c.h.b16 %v365
  %v998 = vunpack.c.l.b16 %v366
  %v999 = vunpack.c.h.b16 %v366
  %v1000 = vunpack.c.l.b16 %v367
  %v1001 = vunpack.c.h.b16 %v367
  %v1002 = vunpack.c.l.b16 %v368
  %v1003 = vunpack.c.h.b16 %v368
  %v1004 = vunpack.c.l.b16 %v369
  %v1005 = vunpack.c.h.b16 %v369
  %v1006 = vunpack.c.l.b16 %v370
  %v1007 = vunpack.c.h.b16 %v370
  %v1008 = vunpack.c.l.b16 %v371
  %v1009 = vunpack.c.h.b16 %v371
  %v1010 = vunpack.c.l.b16 %v372
  %v1011 = vunpack.c.h.b16 %v372
  %v1012 = vunpack.c.l.b16 %v373
  %v1013 = vunpack.c.h.b16 %v373
  %v1014 = vunpack.c.l.b16 %v374
  %v1015 = vunpack.c.h.b16 %v374
  %v1016 = vunpack.c.l.b16 %v375
  %v1017 = vunpack.c.h.b16 %v375
  %v1018 = vunpack.c.l.b16 %v376
  %v1019 = vunpack.c.h.b16 %v376
  %v1020 = vunpack.c.l.b16 %v377
  %v1021 = vunpack.c.h.b16 %v377
  %v1022 = vunpack.c.l.b16 %v378
  %v1023 = vunpack.c.h.b16 %v378
  %v1024 = vunpack.c.l.b16 %v379
  %v1025 = vunpack.c.h.b16 %v379
  %v1026 = vunpack.c.l.b16 %v380
  %v1027 = vunpack.c.h.b16 %v380
  %v1028 = vunpack.c.l.b16 %v381
  %v1029 = vunpack.c.h.b16 %v381
  %v1030 = vunpack.c.l.b16 %v382
  %v1031 = vunpack.c.h.b16 %v382
  %v1032 = vunpack.c.l.b16 %v383
  %v1033 = vunpack.c.h.b16 %v383
  %v1034 = vunpack.c.l.b16 %v384
  %v1035 = vunpack.c.h.b16 %v384
  %v1036 = vunpack.c.l.b16 %v385
  %v1037 = vunpack.c.h.b16 %v385
  %v1038 = vunpack.c.l.b16 %v386
  %v1039 = vunpack.c.h.b16 %v386
  %v1040 = vunpack.c.l.b16 %v387
  %v1041 = vunpack.c.h.b16 %v387
  %v1042 = vunpack.c.l.b16 %v388
  %v1043 = vunpack.c.h.b16 %v388
  %v1044 = vunpack.c.l.b16 %v389
  %v1045 = vunpack.c.h.b16 %v389
  %v1046 = vunpack.c.l.b16 %v390
  %v1047 = vunpack.c.h.b16 %v390
  %v1048 = vunpack.c.l.b16 %v391
  %v1049 = vunpack.c.h.b16 %v391
  %v1050 = vunpack.c.l.b16 %v392
  %v1051 = vunpack.c.h.b16 %v392
  %v1052 = vunpack.c.l.b16 %v393
  %v1053 = vunpack.c.h.b16 %v393
  %v1054 = vunpack.c.l.b16 %v394
  %v1055 = vunpack.c.h.b16 %v394
  %v1056 = vunpack.c.l.b16 %v395
  %v1057 = vunpack.c.h.b16 %v395
  %v1058 = vunpack.c.l.b16 %v396
  %v1059 = vunpack.c.h.b16 %v396
  %v1060 = vunpack.c.l.b16 %v397
  %v1061 = vunpack.c.h.b16 %v397
  %v1062 = vunpack.c.l.b16 %v398
  %v1063 = vunpack.c.h.b16 %v398
  %v1064 = vunpack.c.l.b16 %v399
  %v1065 = vunpack.c.h.b16 %v399
  %v1066 = vunpack.c.l.b16 %v400
  %v1067 = vunpack.c.h.b16 %v400
  %v1068 = vunpack.c.l.b16 %v401
  %v1069 = vunpack.c.h.b16 %v401
  %v1070 = vunpack.c.l.b16 %v402
  %v1071 = vunpack.c.h.b16 %v402
  %v1072 = vunpack.c.l.b16 %v403
  %v1073 = vunpack.c.h.b16 %v403
  %v1074 = vunpack.c.l.b16 %v404
  %v1075 = vunpack.c.h.b16 %v404
  %v1076 = vunpack.c.l.b16 %v405
  %v1077 = vunpack.c.h.b16 %v405
  %v1078 = vunpack.c.l.b16 %v406
  %v1079 = vunpack.c.h.b16 %v406
  %v1080 = vunpack.c.l.b16 %v407
  %v1081 = vunpack.c.h.b16 %v407
  %v1082 = vunpack.c.l.b16 %v408
  %v1083 = vunpack.c.h.b16 %v408
  %v1084 = vunpack.c.l.b16 %v409
  %v1085 = vunpack.c.h.b16 %v409
  %v1086 = vunpack.c.l.b16 %v410
  %v1087 = vunpack.c.h.b16 %v410
  %v1088 = vunpack.c.l.b16 %v411
  %v1089 = vunpack.c.h.b16 %v411
  %v1090 = vunpack.c.l.b16 %v412
  %v1091 = vunpack.c.h.b16 %v412
  %v1092 = vunpack.c.l.b16 %v413
  %v1093 = vunpack.c.h.b16 %v413
  %v1094 = vunpack.c.l.b16 %v414
  %v1095 = vunpack.c.h.b16 %v414
  %v1096 = vunpack.c.l.b16 %v415
  %v1097 = vunpack.c.h.b16 %v415
  %v1098 = vunpack.c.l.b16 %v416
  %v1099 = vunpack.c.h.b16 %v416
  %v1100 = vunpack.c.l.b16 %v417
  %v1101 = vunpack.c.h.b16 %v417
  %v1102 = vpack.c.b16 %v658, %v646
  %v1103 = vpack.c.b16 %v659, %v647
  %v1104 = vpack.c.b16 %v660, %v648
  %v1105 = vpack.c.b16 %v661, %v649
  %v1106 = vpack.c.b16 %v662, %v650
  %v1107 = vpack.c.b16 %v663, %v651
  %v1108 = vpack.c.b16 %v664, %v652
  %v1109 = vpack.c.b16 %v665, %v653
  %v1110 = vpack.c.b16 %v666, %v654
  %v1111 = vpack.c.b16 %v667, %v655
  %v1112 = vpack.c.b16 %v668, %v656
  %v1113 = vpack.c.b16 %v669, %v657
  %v1114 = vpack.c.b16 %v682, %v670
  %v1115 = vpack.c.b16 %v683, %v671
  %v1116 = vpack.c.b16 %v684, %v672
  %v1117 = vpack.c.b16 %v685, %v673
  %v1118 = vpack.c.b16 %v686, %v674
  %v1119 = vpack.c.b16 %v687, %v675
  %v1120 = vpack.c.b16 %v688, %v676
  %v1121 = vpack.c.b16 %v689, %v677
  %v1122 = vpack.c.b16 %v690, %v678
  %v1123 = vpack.c.b16 %v691, %v679
  %v1124 = vpack.c.b16 %v692, %v680
  %v1125 = vpack.c.b16 %v693, %v681
  %v1126 = vpack.c.b16 %v706, %v694
  %v1127 = vpack.c.b16 %v707, %v695
  %v1128 = vpack.c.b16 %v708, %v696
  %v1129 = vpack.c.b16 %v709, %v697
  %v1130 = vpack.c.b16 %v710, %v698
  %v1131 = vpack.c.b16 %v711, %v699
  %v1132 = vpack.c.b16 %v712, %v700
  %v1133 = vpack.c.b16 %v713, %v701
  %v1134 = vpack.c.b16 %v714, %v702
  %v1135 = vpack.c.b16 %v715, %v703
  %v1136 = vpack.c.b16 %v716, %v704
  %v1137 = vpack.c.b16 %v717, %v705
  %v1138 = vpack.c.b16 %v730, %v718
  %v1139 = vpack.c.b16 %v731, %v719
  %v1140 = vpack.c.b16 %v732, %v720
  %v1141 = vpack.c.b16 %v733, %v721
  %v1142 = vpack.c.b16 %v734, %v722
  %v1143 = vpack.c.b16 %v735, %v723
  %v1144 = vpack.c.b16 %v736, %v724
  %v1145 = vpack.c.b16 %v737, %v725
  %v1146 = vpack.c.b16 %v738, %v726
  %v1147 = vpack.c.b16 %v739, %v727
  %v1148 = vpack.c.b16 %v740, %v728
  %v1149 = vpack.c.b16 %v741, %v729
  %v1150 = vpack.c.b16 %v754, %v742
  %v1151 = vpack.c.b16 %v755, %v743
  %v1152 = vpack.c.b16 %v756, %v744
  %v1153 = vpack.c.b16 %v757, %v745
  %v1154 = vpack.c.b16 %v758, %v746
  %v1155 = vpack.c.b16 %v759, %v747
  %v1156 = vpack.c.b16 %v760, %v748
  %v1157 = vpack.c.b16 %v761, %v749
  %v1158 = vpack.c.b16 %v762, %v750
  %v1159 = vpack.c.b16 %v763, %v751
  %v1160 = vpack.c.b16 %v764, %v752
  %v1161 = vpack.c.b16 %v765, %v753
  %v1162 = vpack.c.b16 %v778, %v766
  %v1163 = vpack.c.b16 %v779, %v767
  %v1164 = vpack.c.b16 %v780, %v768
  %v1165 = vpack.c.b16 %v781, %v769
  %v1166 = vpack.c.b16 %v782, %v770
  %v1167 = vpack.c.b16 %v783, %v771
  %v1168 = vpack.c.b16 %v784, %v772
  %v1169 = vpack.c.b16 %v785, %v773
  %v1170 = vpack.c.b16 %v786, %v774
  %v1171 = vpack.c.b16 %v787, %v775
  %v1172 = vpack.c.b16 %v788, %v776
  %v1173 = vpack.c.b16 %v789, %v777
  %v1174 = vpack.c.b16 %v802, %v790
  %v1175 = vpack.c.b16 %v803, %v791
  %v1176 = vpack.c.b16 %v804, %v792
  %v1177 = vpack.c.b16 %v805, %v793
  %v1178 = vpack.c.b16 %v806, %v794
  %v1179 = vpack.c.b16 %v807, %v795
  %v1180 = vpack.c.b16 %v808, %v796
  %v1181 = vpack.c.b16 %v809, %v797
  %v1182 = vpack.c.b16 %v810, %v798
  %v1183 = vpack.c.b16 %v811, %v799
  %v1184 = vpack.c.b16 %v812, %v800
  %v1185 = vpack.c.b16 %v813, %v801
  %v1186 = vpack.c.b16 %v826, %v814
  %v1187 = vpack.c.b16 %v827, %v815
  %v1188 = vpack.c.b16 %v828, %v816
  %v1189 = vpack.c.b16 %v829, %v817
  %v1190 = vpack.c.b16 %v830, %v818
  %v1191 = vpack.c.b16 %v831, %v819
  %v1192 = vpack.c.b16 %v832, %v820
  %v1193 = vpack.c.b16 %v833, %v821
  %v1194 = vpack.c.b16 %v834, %v822
  %v1195 = vpack.c.b16 %v835, %v823
  %v1196 = vpack.c.b16 %v836, %v824
  %v1197 = vpack.c.b16 %v837, %v825
  %v1198 = vpack.c.b16 %v850, %v838
  %v1199 = vpack.c.b16 %v851, %v839
  %v1200 = vpack.c.b16 %v852, %v840
  %v1201 = vpack.c.b16 %v853, %v841
  %v1202 = vpack.c.b16 %v854, %v842
  %v1203 = vpack.c.b16 %v855, %v843
  %v1204 = vpack.c.b16 %v856, %v844
  %v1205 = vpack.c.b16 %v857, %v845
  %v1206 = vpack.c.b16 %v858, %v846
  %v1207 = vpack.c.b16 %v859, %v847
  %v1208 = vpack.c.b16 %v860, %v848
  %v1209 = vpack.c.b16 %v861, %v849
  %v1210 = vpack.c.b16 %v874, %v862
  %v1211 = vpack.c.b16 %v875, %v863
  %v1212 = vpack.c.b16 %v876, %v864
  %v1213 = vpack.c.b16 %v877, %v865
  %v1214 = vpack.c.b16 %v878, %v866
  %v1215 = vpack.c.b16 %v879, %v867
  %v1216 = vpack.c.b16 %v880, %v868
  %v1217 = vpack.c.b16 %v881, %v869
  %v1218 = vpack.c.b16 %v882, %v870
  %v1219 = vpack.c.b16 %v883, %v871
  %v1220 = vpack.c.b16 %v884, %v872
  %v1221 = vpack.c.b16 %v885, %v873
  %v1222 = vpack.c.b16 %v898, %v886
  %v1223 = vpack.c.b16 %v899, %v887
  %v1224 = vpack.c.b16 %v900, %v888
  %v1225 = vpack.c.b16 %v901, %v889
  %v1226 = vpack.c.b16 %v902, %v890
  %v1227 = vpack.c.b16 %v903, %v891
  %v1228 = vpack.c.b16 %v904, %v892
  %v1229 = vpack.c.b16 %v905, %v893
  %v1230 = vpack.c.b16 %v906, %v894
  %v1231 = vpack.c.b16 %v907, %v895
  %v1232 = vpack.c.b16 %v908, %v896
  %v1233 = vpack.c.b16 %v909, %v897
  %v1234 = vpack.c.b16 %v922, %v910
  %v1235 = vpack.c.b16 %v923, %v911
  %v1236 = vpack.c.b16 %v924, %v912
  %v1237 = vpack.c.b16 %v925, %v913
  %v1238 = vpack.c.b16 %v926, %v914
  %v1239 = vpack.c.b16 %v927, %v915
  %v1240 = vpack.c.b16 %v928, %v916
  %v1241 = vpack.c.b16 %v929, %v917
  %v1242 = vpack.c.b16 %v930, %v918
  %v1243 = vpack.c.b16 %v931, %v919
  %v1244 = vpack.c.b16 %v932, %v920
  %v1245 = vpack.c.b16 %v933, %v921
  %v1246 = vpack.c.b16 %v946, %v934
  %v1247 = vpack.c.b16 %v947, %v935
  %v1248 = vpack.c.b16 %v948, %v936
  %v1249 = vpack.c.b16 %v949, %v937
  %v1250 = vpack.c.b16 %v950, %v938
  %v1251 = vpack.c.b16 %v951, %v939
  %v1252 = vpack.c.b16 %v952, %v940
  %v1253 = vpack.c.b16 %v953, %v941
  %v1254 = vpack.c.b16 %v954, %v942
  %v1255 = vpack.c.b16 %v955, %v943
  %v1256 = vpack.c.b16 %v956, %v944
  %v1257 = vpack.c.b16 %v957, %v945
  %v1258 = vpack.c.b16 %v970, %v958
  %v1259 = vpack.c.b16 %v971, %v959
  %v1260 = vpack.c.b16 %v972, %v960
  %v1261 = vpack.c.b16 %v973, %v961
  %v1262 = vpack.c.b16 %v974, %v962
  %v1263 = vpack.c.b16 %v975, %v963
  %v1264 = vpack.c.b16 %v976, %v964
  %v1265 = vpack.c.b16 %v977, %v965
  %v1266 = vpack.c.b16 %v978, %v966
  %v1267 = vpack.c.b16 %v979, %v967
  %v1268 = vpack.c.b16 %v980, %v968
  %v1269 = vpack.c.b16 %v981, %v969
  %v1270 = vpack.c.b16 %v994, %v982
  %v1271 = vpack.c.b16 %v995, %v983
  %v1272 = vpack.c.b16 %v996, %v984
  %v1273 = vpack.c.b16 %v997, %v985
  %v1274 = vpack.c.b16 %v998, %v986
  %v1275 = vpack.c.b16 %v999, %v987
  %v1276 = vpack.c.b16 %v1000, %v988
  %v1277 = vpack.c.b16 %v1001, %v989
  %v1278 = vpack.c.b16 %v1002, %v990
  %v1279 = vpack.c.b16 %v1003, %v991
  %v1280 = vpack.c.b16 %v1004, %v992
  %v1281 = vpack.c.b16 %v1005, %v993
  %v1282 = vpack.c.b16 %v1018, %v1006
  %v1283 = vpack.c.b16 %v1019, %v1007
  %v1284 = vpack.c.b16 %v1020, %v1008
  %v1285 = vpack.c.b16 %v1021, %v1009
  %v1286 = vpack.c.b16 %v1022, %v1010
  %v1287 = vpack.c.b16 %v1023, %v1011
  %v1288 = vpack.c.b16 %v1024, %v1012
  %v1289 = vpack.c.b16 %v1025, %v1013
  %v1290 = vpack.c.b16 %v1026, %v1014
  %v1291 = vpack.c.b16 %v1027, %v1015
  %v1292 = vpack.c.b16 %v1028, %v1016
  %v1293 = vpack.c.b16 %v1029, %v1017
  %v1294 = vpack.c.b16 %v1042, %v1030
  %v1295 = vpack.c.b16 %v1043, %v1031
  %v1296 = vpack.c.b16 %v1044, %v1032
  %v1297 = vpack.c.b16 %v1045, %v1033
  %v1298 = vpack.c.b16 %v1046, %v1034
  %v1299 = vpack.c.b16 %v1047, %v1035
  %v1300 = vpack.c.b16 %v1048, %v1036
  %v1301 = vpack.c.b16 %v1049, %v1037
  %v1302 = vpack.c.b16 %v1050, %v1038
  %v1303 = vpack.c.b16 %v1051, %v1039
  %v1304 = vpack.c.b16 %v1052, %v1040
  %v1305 = vpack.c.b16 %v1053, %v1041
  %v1306 = vpack.c.b16 %v1066, %v1054
  %v1307 = vpack.c.b16 %v1067, %v1055
  %v1308 = vpack.c.b16 %v1068, %v1056
  %v1309 = vpack.c.b16 %v1069, %v1057
  %v1310 = vpack.c.b16 %v1070, %v1058
  %v1311 = vpack.c.b16 %v1071, %v1059
  %v1312 = vpack.c.b16 %v1072, %v1060
  %v1313 = vpack.c.b16 %v1073, %v1061
  %v1314 = vpack.c.b16 %v1074, %v1062
  %v1315 = vpack.c.b16 %v1075, %v1063
  %v1316 = vpack.c.b16 %v1076, %v1064
  %v1317 = vpack.c.b16 %v1077, %v1065
  %v1318 = vpack.c.b16 %v1090, %v1078
  %v1319 = vpack.c.b16 %v1091, %v1079
  %v1320 = vpack.c.b16 %v1092, %v1080
  %v1321 = vpack.c.b16 %v1093, %v1081
  %v1322 = vpack.c.b16 %v1094, %v1082
  %v1323 = vpack.c.b16 %v1095, %v1083
  %v1324 = vpack.c.b16 %v1096, %v1084
  %v1325 = vpack.c.b16 %v1097, %v1085
  %v1326 = vpack.c.b16 %v1098, %v1086
  %v1327 = vpack.c.b16 %v1099, %v1087
  %v1328 = vpack.c.b16 %v1100, %v1088
  %v1329 = vpack.c.b16 %v1101, %v1089
  %vm1546 = vcmask 359424
  %v1548 = vsel %vm1546, %v189, 0
  %vm1550 = vcmask 1045504
  %v1552 = vsel %vm1550, %v1318, 0
  %v1555 = vsel %vm1550, %v1319, 0
  %v1558 = vsel %vm1550, %v1320, 0
  %v1561 = vsel %vm1550, %v1321, 0
  %v1564 = vsel %vm1550, %v1322, 0
  %v1567 = vsel %vm1550, %v1323, 0
  %v1570 = vsel %vm1550, %v1324, 0
  %v1573 = vsel %vm1550, %v1325, 0
  %v1576 = vsel %vm1550, %v1326, 0
  %v1579 = vsel %vm1550, %v1327, 0
  %v1582 = vsel %vm1550, %v1328, 0
  %v1585 = vsel %vm1550, %v1329, 0
  %1587 = vmatprep.subr.bf16.mxu0 %v1103
  %1588 = vmatpush1.bf16.msra.mxu0 %v1102
  %1589 = vmatprep.subr.bf16.mxu0 %v1115
  %1590 = vmatpush1.bf16.msra.mxu0 %v1114
  %1591 = vmatprep.subr.bf16.mxu0 %v1127
  %1592 = vmatpush1.bf16.msra.mxu0 %v1126
  %1593 = vmatprep.subr.bf16.mxu0 %v1139
  %1594 = vmatpush1.bf16.msra.mxu0 %v1138
  %1595 = vmatprep.subr.bf16.mxu0 %v1151
  %1596 = vmatpush1.bf16.msra.mxu0 %v1150
  %1597 = vmatprep.subr.bf16.mxu0 %v1163
  %1598 = vmatpush1.bf16.msra.mxu0 %v1162
  %1599 = vmatprep.subr.bf16.mxu0 %v1175
  %1600 = vmatpush1.bf16.msra.mxu0 %v1174
  %1601 = vmatprep.subr.bf16.mxu0 %v1187
  %1602 = vmatpush1.bf16.msra.mxu0 %v1186
  %1603 = vmatprep.subr.bf16.mxu0 %v1199
  %1604 = vmatpush1.bf16.msra.mxu0 %v1198
  %1605 = vmatprep.subr.bf16.mxu0 %v1211
  %1606 = vmatpush1.bf16.msra.mxu0 %v1210
  %1607 = vmatprep.subr.bf16.mxu0 %v1223
  %1608 = vmatpush1.bf16.msra.mxu0 %v1222
  %1609 = vmatprep.subr.bf16.mxu0 %v1235
  %1610 = vmatpush1.bf16.msra.mxu0 %v1234
  %1611 = vmatprep.subr.bf16.mxu0 %v1247
  %1612 = vmatpush1.bf16.msra.mxu0 %v1246
  %1613 = vmatprep.subr.bf16.mxu0 %v1259
  %1614 = vmatpush1.bf16.msra.mxu0 %v1258
  %1615 = vmatprep.subr.bf16.mxu0 %v1271
  %1616 = vmatpush1.bf16.msra.mxu0 %v1270
  %1617 = vmatprep.subr.bf16.mxu0 %v1283
  %1618 = vmatpush1.bf16.msra.mxu0 %v1282
  %1619 = vmatprep.mubr.bf16.mxu0 %v188
  %1620 = vmatmul.mubr.bf16.gmra.mrb[0].mxu0 %v187
  %v1621 = vpop.f32.mrb[0].mxu0
  %v1622 = vadd.f32 0.0, %v1621
  %v1623 = vpop.f32.mrb[0].mxu0
  %v1624 = vadd.f32 0.0, %v1623
  %v1625 = vpop.f32.mrb[0].mxu0
  %v1626 = vadd.f32 0.0, %v1625
  %v1627 = vpop.f32.mrb[0].mxu0
  %v1628 = vadd.f32 0.0, %v1627
  %1629 = vdwg.mxu0
  %1630 = vmatprep.subr.bf16.mxu0 %v1295
  %1631 = vmatpush1.bf16.msra.mxu0 %v1294
  %1632 = vmatprep.subr.bf16.mxu0 %v1307
  %1633 = vmatpush1.bf16.msra.mxu0 %v1306
  %1634 = vmatprep.subr.bf16.mxu0 %v1555
  %1635 = vmatpush1.bf16.msra.mxu0 %v1552
  %1636 = vmatprep.subr.bf16.mxu0 0
  %1637 = vmatpush1.bf16.msra.mxu0 0
  %1638 = vmatprep.subr.bf16.mxu0 0
  %1639 = vmatpush1.bf16.msra.mxu0 0
  %1640 = vmatprep.subr.bf16.mxu0 0
  %1641 = vmatpush1.bf16.msra.mxu0 0
  %1642 = vmatprep.subr.bf16.mxu0 0
  %1643 = vmatpush1.bf16.msra.mxu0 0
  %1644 = vmatprep.subr.bf16.mxu0 0
  %1645 = vmatpush1.bf16.msra.mxu0 0
  %1646 = vmatprep.subr.bf16.mxu0 0
  %1647 = vmatpush1.bf16.msra.mxu0 0
  %1648 = vmatprep.subr.bf16.mxu0 0
  %1649 = vmatpush1.bf16.msra.mxu0 0
  %1650 = vmatprep.subr.bf16.mxu0 0
  %1651 = vmatpush1.bf16.msra.mxu0 0
  %1652 = vmatprep.subr.bf16.mxu0 0
  %1653 = vmatpush1.bf16.msra.mxu0 0
  %1654 = vmatprep.subr.bf16.mxu0 0
  %1655 = vmatpush1.bf16.msra.mxu0 0
  %1656 = vmatprep.subr.bf16.mxu0 0
  %1657 = vmatpush1.bf16.msra.mxu0 0
  %1658 = vmatprep.subr.bf16.mxu0 0
  %1659 = vmatpush1.bf16.msra.mxu0 0
  %1660 = vmatprep.subr.bf16.mxu0 0
  %1661 = vmatpush1.bf16.msra.mxu0 0
  %1662 = vmatprep.mubr.bf16.mxu0 0
  %1663 = vmatmul.mubr.bf16.gmra.mrb[0].mxu0 %v1548
  %v1664 = vpop.f32.mrb[0].mxu0
  %v1665 = vadd.f32 %v1622, %v1664
  %v1666 = vpop.f32.mrb[0].mxu0
  %v1667 = vadd.f32 %v1624, %v1666
  %v1668 = vpop.f32.mrb[0].mxu0
  %v1669 = vadd.f32 %v1626, %v1668
  %v1670 = vpop.f32.mrb[0].mxu0
  %v1671 = vadd.f32 %v1628, %v1670
  %1672 = vdwg.mxu0
  %1673 = vmatprep.subr.bf16.mxu0 %v1105
  %1674 = vmatpush1.bf16.msra.mxu0 %v1104
  %1675 = vmatprep.subr.bf16.mxu0 %v1117
  %1676 = vmatpush1.bf16.msra.mxu0 %v1116
  %1677 = vmatprep.subr.bf16.mxu0 %v1129
  %1678 = vmatpush1.bf16.msra.mxu0 %v1128
  %1679 = vmatprep.subr.bf16.mxu0 %v1141
  %1680 = vmatpush1.bf16.msra.mxu0 %v1140
  %1681 = vmatprep.subr.bf16.mxu0 %v1153
  %1682 = vmatpush1.bf16.msra.mxu0 %v1152
  %1683 = vmatprep.subr.bf16.mxu0 %v1165
  %1684 = vmatpush1.bf16.msra.mxu0 %v1164
  %1685 = vmatprep.subr.bf16.mxu0 %v1177
  %1686 = vmatpush1.bf16.msra.mxu0 %v1176
  %1687 = vmatprep.subr.bf16.mxu0 %v1189
  %1688 = vmatpush1.bf16.msra.mxu0 %v1188
  %1689 = vmatprep.subr.bf16.mxu0 %v1201
  %1690 = vmatpush1.bf16.msra.mxu0 %v1200
  %1691 = vmatprep.subr.bf16.mxu0 %v1213
  %1692 = vmatpush1.bf16.msra.mxu0 %v1212
  %1693 = vmatprep.subr.bf16.mxu0 %v1225
  %1694 = vmatpush1.bf16.msra.mxu0 %v1224
  %1695 = vmatprep.subr.bf16.mxu0 %v1237
  %1696 = vmatpush1.bf16.msra.mxu0 %v1236
  %1697 = vmatprep.subr.bf16.mxu0 %v1249
  %1698 = vmatpush1.bf16.msra.mxu0 %v1248
  %1699 = vmatprep.subr.bf16.mxu0 %v1261
  %1700 = vmatpush1.bf16.msra.mxu0 %v1260
  %1701 = vmatprep.subr.bf16.mxu0 %v1273
  %1702 = vmatpush1.bf16.msra.mxu0 %v1272
  %1703 = vmatprep.subr.bf16.mxu0 %v1285
  %1704 = vmatpush1.bf16.msra.mxu0 %v1284
  %1705 = vmatprep.mubr.bf16.mxu0 %v188
  %1706 = vmatmul.mubr.bf16.gmra.mrb[0].mxu0 %v187
  %v1707 = vpop.f32.mrb[0].mxu0
  %v1708 = vadd.f32 0.0, %v1707
  %v1709 = vpop.f32.mrb[0].mxu0
  %v1710 = vadd.f32 0.0, %v1709
  %v1711 = vpop.f32.mrb[0].mxu0
  %v1712 = vadd.f32 0.0, %v1711
  %v1713 = vpop.f32.mrb[0].mxu0
  %v1714 = vadd.f32 0.0, %v1713
  %1715 = vdwg.mxu0
  %1716 = vmatprep.subr.bf16.mxu0 %v1297
  %1717 = vmatpush1.bf16.msra.mxu0 %v1296
  %1718 = vmatprep.subr.bf16.mxu0 %v1309
  %1719 = vmatpush1.bf16.msra.mxu0 %v1308
  %1720 = vmatprep.subr.bf16.mxu0 %v1561
  %1721 = vmatpush1.bf16.msra.mxu0 %v1558
  %1722 = vmatprep.subr.bf16.mxu0 0
  %1723 = vmatpush1.bf16.msra.mxu0 0
  %1724 = vmatprep.subr.bf16.mxu0 0
  %1725 = vmatpush1.bf16.msra.mxu0 0
  %1726 = vmatprep.subr.bf16.mxu0 0
  %1727 = vmatpush1.bf16.msra.mxu0 0
  %1728 = vmatprep.subr.bf16.mxu0 0
  %1729 = vmatpush1.bf16.msra.mxu0 0
  %1730 = vmatprep.subr.bf16.mxu0 0
  %1731 = vmatpush1.bf16.msra.mxu0 0
  %1732 = vmatprep.subr.bf16.mxu0 0
  %1733 = vmatpush1.bf16.msra.mxu0 0
  %1734 = vmatprep.subr.bf16.mxu0 0
  %1735 = vmatpush1.bf16.msra.mxu0 0
  %1736 = vmatprep.subr.bf16.mxu0 0
  %1737 = vmatpush1.bf16.msra.mxu0 0
  %1738 = vmatprep.subr.bf16.mxu0 0
  %1739 = vmatpush1.bf16.msra.mxu0 0
  %1740 = vmatprep.subr.bf16.mxu0 0
  %1741 = vmatpush1.bf16.msra.mxu0 0
  %1742 = vmatprep.subr.bf16.mxu0 0
  %1743 = vmatpush1.bf16.msra.mxu0 0
  %1744 = vmatprep.subr.bf16.mxu0 0
  %1745 = vmatpush1.bf16.msra.mxu0 0
  %1746 = vmatprep.subr.bf16.mxu0 0
  %1747 = vmatpush1.bf16.msra.mxu0 0
  %1748 = vmatprep.mubr.bf16.mxu0 0
  %1749 = vmatmul.mubr.bf16.gmra.mrb[0].mxu0 %v1548
  %v1750 = vpop.f32.mrb[0].mxu0
  %v1751 = vadd.f32 %v1708, %v1750
  %v1752 = vpop.f32.mrb[0].mxu0
  %v1753 = vadd.f32 %v1710, %v1752
  %v1754 = vpop.f32.mrb[0].mxu0
  %v1755 = vadd.f32 %v1712, %v1754
  %v1756 = vpop.f32.mrb[0].mxu0
  %v1757 = vadd.f32 %v1714, %v1756
  %1758 = vdwg.mxu0
  %1759 = vmatprep.subr.bf16.mxu0 %v1107
  %1760 = vmatpush1.bf16.msra.mxu0 %v1106
  %1761 = vmatprep.subr.bf16.mxu0 %v1119
  %1762 = vmatpush1.bf16.msra.mxu0 %v1118
  %1763 = vmatprep.subr.bf16.mxu0 %v1131
  %1764 = vmatpush1.bf16.msra.mxu0 %v1130
  %1765 = vmatprep.subr.bf16.mxu0 %v1143
  %1766 = vmatpush1.bf16.msra.mxu0 %v1142
  %1767 = vmatprep.subr.bf16.mxu0 %v1155
  %1768 = vmatpush1.bf16.msra.mxu0 %v1154
  %1769 = vmatprep.subr.bf16.mxu0 %v1167
  %1770 = vmatpush1.bf16.msra.mxu0 %v1166
  %1771 = vmatprep.subr.bf16.mxu0 %v1179
  %1772 = vmatpush1.bf16.msra.mxu0 %v1178
  %1773 = vmatprep.subr.bf16.mxu0 %v1191
  %1774 = vmatpush1.bf16.msra.mxu0 %v1190
  %1775 = vmatprep.subr.bf16.mxu0 %v1203
  %1776 = vmatpush1.bf16.msra.mxu0 %v1202
  %1777 = vmatprep.subr.bf16.mxu0 %v1215
  %1778 = vmatpush1.bf16.msra.mxu0 %v1214
  %1779 = vmatprep.subr.bf16.mxu0 %v1227
  %1780 = vmatpush1.bf16.msra.mxu0 %v1226
  %1781 = vmatprep.subr.bf16.mxu0 %v1239
  %1782 = vmatpush1.bf16.msra.mxu0 %v1238
  %1783 = vmatprep.subr.bf16.mxu0 %v1251
  %1784 = vmatpush1.bf16.msra.mxu0 %v1250
  %1785 = vmatprep.subr.bf16.mxu0 %v1263
  %1786 = vmatpush1.bf16.msra.mxu0 %v1262
  %1787 = vmatprep.subr.bf16.mxu0 %v1275
  %1788 = vmatpush1.bf16.msra.mxu0 %v1274
  %1789 = vmatprep.subr.bf16.mxu0 %v1287
  %1790 = vmatpush1.bf16.msra.mxu0 %v1286
  %1791 = vmatprep.mubr.bf16.mxu0 %v188
  %1792 = vmatmul.mubr.bf16.gmra.mrb[0].mxu0 %v187
  %v1793 = vpop.f32.mrb[0].mxu0
  %v1794 = vadd.f32 0.0, %v1793
  %v1795 = vpop.f32.mrb[0].mxu0
  %v1796 = vadd.f32 0.0, %v1795
  %v1797 = vpop.f32.mrb[0].mxu0
  %v1798 = vadd.f32 0.0, %v1797
  %v1799 = vpop.f32.mrb[0].mxu0
  %v1800 = vadd.f32 0.0, %v1799
  %1801 = vdwg.mxu0
  %1802 = vmatprep.subr.bf16.mxu0 %v1299
  %1803 = vmatpush1.bf16.msra.mxu0 %v1298
  %1804 = vmatprep.subr.bf16.mxu0 %v1311
  %1805 = vmatpush1.bf16.msra.mxu0 %v1310
  %1806 = vmatprep.subr.bf16.mxu0 %v1567
  %1807 = vmatpush1.bf16.msra.mxu0 %v1564
  %1808 = vmatprep.subr.bf16.mxu0 0
  %1809 = vmatpush1.bf16.msra.mxu0 0
  %1810 = vmatprep.subr.bf16.mxu0 0
  %1811 = vmatpush1.bf16.msra.mxu0 0
  %1812 = vmatprep.subr.bf16.mxu0 0
  %1813 = vmatpush1.bf16.msra.mxu0 0
  %1814 = vmatprep.subr.bf16.mxu0 0
  %1815 = vmatpush1.bf16.msra.mxu0 0
  %1816 = vmatprep.subr.bf16.mxu0 0
  %1817 = vmatpush1.bf16.msra.mxu0 0
  %1818 = vmatprep.subr.bf16.mxu0 0
  %1819 = vmatpush1.bf16.msra.mxu0 0
  %1820 = vmatprep.subr.bf16.mxu0 0
  %1821 = vmatpush1.bf16.msra.mxu0 0
  %1822 = vmatprep.subr.bf16.mxu0 0
  %1823 = vmatpush1.bf16.msra.mxu0 0
  %1824 = vmatprep.subr.bf16.mxu0 0
  %1825 = vmatpush1.bf16.msra.mxu0 0
  %1826 = vmatprep.subr.bf16.mxu0 0
  %1827 = vmatpush1.bf16.msra.mxu0 0
  %1828 = vmatprep.subr.bf16.mxu0 0
  %1829 = vmatpush1.bf16.msra.mxu0 0
  %1830 = vmatprep.subr.bf16.mxu0 0
  %1831 = vmatpush1.bf16.msra.mxu0 0
  %1832 = vmatprep.subr.bf16.mxu0 0
  %1833 = vmatpush1.bf16.msra.mxu0 0
  %1834 = vmatprep.mubr.bf16.mxu0 0
  %1835 = vmatmul.mubr.bf16.gmra.mrb[0].mxu0 %v1548
  %v1836 = vpop.f32.mrb[0].mxu0
  %v1837 = vadd.f32 %v1794, %v1836
  %v1838 = vpop.f32.mrb[0].mxu0
  %v1839 = vadd.f32 %v1796, %v1838
  %v1840 = vpop.f32.mrb[0].mxu0
  %v1841 = vadd.f32 %v1798, %v1840
  %v1842 = vpop.f32.mrb[0].mxu0
  %v1843 = vadd.f32 %v1800, %v1842
  %1844 = vdwg.mxu0
  %1845 = vmatprep.subr.bf16.mxu0 %v1109
  %1846 = vmatpush1.bf16.msra.mxu0 %v1108
  %1847 = vmatprep.subr.bf16.mxu0 %v1121
  %1848 = vmatpush1.bf16.msra.mxu0 %v1120
  %1849 = vmatprep.subr.bf16.mxu0 %v1133
  %1850 = vmatpush1.bf16.msra.mxu0 %v1132
  %1851 = vmatprep.subr.bf16.mxu0 %v1145
  %1852 = vmatpush1.bf16.msra.mxu0 %v1144
  %1853 = vmatprep.subr.bf16.mxu0 %v1157
  %1854 = vmatpush1.bf16.msra.mxu0 %v1156
  %1855 = vmatprep.subr.bf16.mxu0 %v1169
  %1856 = vmatpush1.bf16.msra.mxu0 %v1168
  %1857 = vmatprep.subr.bf16.mxu0 %v1181
  %1858 = vmatpush1.bf16.msra.mxu0 %v1180
  %1859 = vmatprep.subr.bf16.mxu0 %v1193
  %1860 = vmatpush1.bf16.msra.mxu0 %v1192
  %1861 = vmatprep.subr.bf16.mxu0 %v1205
  %1862 = vmatpush1.bf16.msra.mxu0 %v1204
  %1863 = vmatprep.subr.bf16.mxu0 %v1217
  %1864 = vmatpush1.bf16.msra.mxu0 %v1216
  %1865 = vmatprep.subr.bf16.mxu0 %v1229
  %1866 = vmatpush1.bf16.msra.mxu0 %v1228
  %1867 = vmatprep.subr.bf16.mxu0 %v1241
  %1868 = vmatpush1.bf16.msra.mxu0 %v1240
  %1869 = vmatprep.subr.bf16.mxu0 %v1253
  %1870 = vmatpush1.bf16.msra.mxu0 %v1252
  %1871 = vmatprep.subr.bf16.mxu0 %v1265
  %1872 = vmatpush1.bf16.msra.mxu0 %v1264
  %1873 = vmatprep.subr.bf16.mxu0 %v1277
  %1874 = vmatpush1.bf16.msra.mxu0 %v1276
  %1875 = vmatprep.subr.bf16.mxu0 %v1289
  %1876 = vmatpush1.bf16.msra.mxu0 %v1288
  %1877 = vmatprep.mubr.bf16.mxu0 %v188
  %1878 = vmatmul.mubr.bf16.gmra.mrb[0].mxu0 %v187
  %v1879 = vpop.f32.mrb[0].mxu0
  %v1880 = vadd.f32 0.0, %v1879
  %v1881 = vpop.f32.mrb[0].mxu0
  %v1882 = vadd.f32 0.0, %v1881
  %v1883 = vpop.f32.mrb[0].mxu0
  %v1884 = vadd.f32 0.0, %v1883
  %v1885 = vpop.f32.mrb[0].mxu0
  %v1886 = vadd.f32 0.0, %v1885
  %1887 = vdwg.mxu0
  %1888 = vmatprep.subr.bf16.mxu0 %v1301
  %1889 = vmatpush1.bf16.msra.mxu0 %v1300
  %1890 = vmatprep.subr.bf16.mxu0 %v1313
  %1891 = vmatpush1.bf16.msra.mxu0 %v1312
  %1892 = vmatprep.subr.bf16.mxu0 %v1573
  %1893 = vmatpush1.bf16.msra.mxu0 %v1570
  %1894 = vmatprep.subr.bf16.mxu0 0
  %1895 = vmatpush1.bf16.msra.mxu0 0
  %1896 = vmatprep.subr.bf16.mxu0 0
  %1897 = vmatpush1.bf16.msra.mxu0 0
  %1898 = vmatprep.subr.bf16.mxu0 0
  %1899 = vmatpush1.bf16.msra.mxu0 0
  %1900 = vmatprep.subr.bf16.mxu0 0
  %1901 = vmatpush1.bf16.msra.mxu0 0
  %1902 = vmatprep.subr.bf16.mxu0 0
  %1903 = vmatpush1.bf16.msra.mxu0 0
  %1904 = vmatprep.subr.bf16.mxu0 0
  %1905 = vmatpush1.bf16.msra.mxu0 0
  %1906 = vmatprep.subr.bf16.mxu0 0
  %1907 = vmatpush1.bf16.msra.mxu0 0
  %1908 = vmatprep.subr.bf16.mxu0 0
  %1909 = vmatpush1.bf16.msra.mxu0 0
  %1910 = vmatprep.subr.bf16.mxu0 0
  %1911 = vmatpush1.bf16.msra.mxu0 0
  %1912 = vmatprep.subr.bf16.mxu0 0
  %1913 = vmatpush1.bf16.msra.mxu0 0
  %1914 = vmatprep.subr.bf16.mxu0 0
  %1915 = vmatpush1.bf16.msra.mxu0 0
  %1916 = vmatprep.subr.bf16.mxu0 0
  %1917 = vmatpush1.bf16.msra.mxu0 0
  %1918 = vmatprep.subr.bf16.mxu0 0
  %1919 = vmatpush1.bf16.msra.mxu0 0
  %1920 = vmatprep.mubr.bf16.mxu0 0
  %1921 = vmatmul.mubr.bf16.gmra.mrb[0].mxu0 %v1548
  %v1922 = vpop.f32.mrb[0].mxu0
  %v1923 = vadd.f32 %v1880, %v1922
  %v1924 = vpop.f32.mrb[0].mxu0
  %v1925 = vadd.f32 %v1882, %v1924
  %v1926 = vpop.f32.mrb[0].mxu0
  %v1927 = vadd.f32 %v1884, %v1926
  %v1928 = vpop.f32.mrb[0].mxu0
  %v1929 = vadd.f32 %v1886, %v1928
  %1930 = vdwg.mxu0
  %1931 = vmatprep.subr.bf16.mxu0 %v1111
  %1932 = vmatpush1.bf16.msra.mxu0 %v1110
  %1933 = vmatprep.subr.bf16.mxu0 %v1123
  %1934 = vmatpush1.bf16.msra.mxu0 %v1122
  %1935 = vmatprep.subr.bf16.mxu0 %v1135
  %1936 = vmatpush1.bf16.msra.mxu0 %v1134
  %1937 = vmatprep.subr.bf16.mxu0 %v1147
  %1938 = vmatpush1.bf16.msra.mxu0 %v1146
  %1939 = vmatprep.subr.bf16.mxu0 %v1159
  %1940 = vmatpush1.bf16.msra.mxu0 %v1158
  %1941 = vmatprep.subr.bf16.mxu0 %v1171
  %1942 = vmatpush1.bf16.msra.mxu0 %v1170
  %1943 = vmatprep.subr.bf16.mxu0 %v1183
  %1944 = vmatpush1.bf16.msra.mxu0 %v1182
  %1945 = vmatprep.subr.bf16.mxu0 %v1195
  %1946 = vmatpush1.bf16.msra.mxu0 %v1194
  %1947 = vmatprep.subr.bf16.mxu0 %v1207
  %1948 = vmatpush1.bf16.msra.mxu0 %v1206
  %1949 = vmatprep.subr.bf16.mxu0 %v1219
  %1950 = vmatpush1.bf16.msra.mxu0 %v1218
  %1951 = vmatprep.subr.bf16.mxu0 %v1231
  %1952 = vmatpush1.bf16.msra.mxu0 %v1230
  %1953 = vmatprep.subr.bf16.mxu0 %v1243
  %1954 = vmatpush1.bf16.msra.mxu0 %v1242
  %1955 = vmatprep.subr.bf16.mxu0 %v1255
  %1956 = vmatpush1.bf16.msra.mxu0 %v1254
  %1957 = vmatprep.subr.bf16.mxu0 %v1267
  %1958 = vmatpush1.bf16.msra.mxu0 %v1266
  %1959 = vmatprep.subr.bf16.mxu0 %v1279
  %1960 = vmatpush1.bf16.msra.mxu0 %v1278
  %1961 = vmatprep.subr.bf16.mxu0 %v1291
  %1962 = vmatpush1.bf16.msra.mxu0 %v1290
  %1963 = vmatprep.mubr.bf16.mxu0 %v188
  %1964 = vmatmul.mubr.bf16.gmra.mrb[0].mxu0 %v187
  %v1965 = vpop.f32.mrb[0].mxu0
  %v1966 = vadd.f32 0.0, %v1965
  %v1967 = vpop.f32.mrb[0].mxu0
  %v1968 = vadd.f32 0.0, %v1967
  %v1969 = vpop.f32.mrb[0].mxu0
  %v1970 = vadd.f32 0.0, %v1969
  %v1971 = vpop.f32.mrb[0].mxu0
  %v1972 = vadd.f32 0.0, %v1971
  %1973 = vdwg.mxu0
  %1974 = vmatprep.subr.bf16.mxu0 %v1303
  %1975 = vmatpush1.bf16.msra.mxu0 %v1302
  %1976 = vmatprep.subr.bf16.mxu0 %v1315
  %1977 = vmatpush1.bf16.msra.mxu0 %v1314
  %1978 = vmatprep.subr.bf16.mxu0 %v1579
  %1979 = vmatpush1.bf16.msra.mxu0 %v1576
  %1980 = vmatprep.subr.bf16.mxu0 0
  %1981 = vmatpush1.bf16.msra.mxu0 0
  %1982 = vmatprep.subr.bf16.mxu0 0
  %1983 = vmatpush1.bf16.msra.mxu0 0
  %1984 = vmatprep.subr.bf16.mxu0 0
  %1985 = vmatpush1.bf16.msra.mxu0 0
  %1986 = vmatprep.subr.bf16.mxu0 0
  %1987 = vmatpush1.bf16.msra.mxu0 0
  %1988 = vmatprep.subr.bf16.mxu0 0
  %1989 = vmatpush1.bf16.msra.mxu0 0
  %1990 = vmatprep.subr.bf16.mxu0 0
  %1991 = vmatpush1.bf16.msra.mxu0 0
  %1992 = vmatprep.subr.bf16.mxu0 0
  %1993 = vmatpush1.bf16.msra.mxu0 0
  %1994 = vmatprep.subr.bf16.mxu0 0
  %1995 = vmatpush1.bf16.msra.mxu0 0
  %1996 = vmatprep.subr.bf16.mxu0 0
  %1997 = vmatpush1.bf16.msra.mxu0 0
  %1998 = vmatprep.subr.bf16.mxu0 0
  %1999 = vmatpush1.bf16.msra.mxu0 0
  %2000 = vmatprep.subr.bf16.mxu0 0
  %2001 = vmatpush1.bf16.msra.mxu0 0
  %2002 = vmatprep.subr.bf16.mxu0 0
  %2003 = vmatpush1.bf16.msra.mxu0 0
  %2004 = vmatprep.subr.bf16.mxu0 0
  %2005 = vmatpush1.bf16.msra.mxu0 0
  %2006 = vmatprep.mubr.bf16.mxu0 0
  %2007 = vmatmul.mubr.bf16.gmra.mrb[0].mxu0 %v1548
  %v2008 = vpop.f32.mrb[0].mxu0
  %v2009 = vadd.f32 %v1966, %v2008
  %v2010 = vpop.f32.mrb[0].mxu0
  %v2011 = vadd.f32 %v1968, %v2010
  %v2012 = vpop.f32.mrb[0].mxu0
  %v2013 = vadd.f32 %v1970, %v2012
  %v2014 = vpop.f32.mrb[0].mxu0
  %v2015 = vadd.f32 %v1972, %v2014
  %2016 = vdwg.mxu0
  %2017 = vmatprep.subr.bf16.mxu0 %v1113
  %2018 = vmatpush1.bf16.msra.mxu0 %v1112
  %2019 = vmatprep.subr.bf16.mxu0 %v1125
  %2020 = vmatpush1.bf16.msra.mxu0 %v1124
  %2021 = vmatprep.subr.bf16.mxu0 %v1137
  %2022 = vmatpush1.bf16.msra.mxu0 %v1136
  %2023 = vmatprep.subr.bf16.mxu0 %v1149
  %2024 = vmatpush1.bf16.msra.mxu0 %v1148
  %2025 = vmatprep.subr.bf16.mxu0 %v1161
  %2026 = vmatpush1.bf16.msra.mxu0 %v1160
  %2027 = vmatprep.subr.bf16.mxu0 %v1173
  %2028 = vmatpush1.bf16.msra.mxu0 %v1172
  %2029 = vmatprep.subr.bf16.mxu0 %v1185
  %2030 = vmatpush1.bf16.msra.mxu0 %v1184
  %2031 = vmatprep.subr.bf16.mxu0 %v1197
  %2032 = vmatpush1.bf16.msra.mxu0 %v1196
  %2033 = vmatprep.subr.bf16.mxu0 %v1209
  %2034 = vmatpush1.bf16.msra.mxu0 %v1208
  %2035 = vmatprep.subr.bf16.mxu0 %v1221
  %2036 = vmatpush1.bf16.msra.mxu0 %v1220
  %2037 = vmatprep.subr.bf16.mxu0 %v1233
  %2038 = vmatpush1.bf16.msra.mxu0 %v1232
  %2039 = vmatprep.subr.bf16.mxu0 %v1245
  %2040 = vmatpush1.bf16.msra.mxu0 %v1244
  %2041 = vmatprep.subr.bf16.mxu0 %v1257
  %2042 = vmatpush1.bf16.msra.mxu0 %v1256
  %2043 = vmatprep.subr.bf16.mxu0 %v1269
  %2044 = vmatpush1.bf16.msra.mxu0 %v1268
  %2045 = vmatprep.subr.bf16.mxu0 %v1281
  %2046 = vmatpush1.bf16.msra.mxu0 %v1280
  %2047 = vmatprep.subr.bf16.mxu0 %v1293
  %2048 = vmatpush1.bf16.msra.mxu0 %v1292
  %2049 = vmatprep.mubr.bf16.mxu0 %v188
  %2050 = vmatmul.mubr.bf16.gmra.mrb[0].mxu0 %v187
  %v2051 = vpop.f32.mrb[0].mxu0
  %v2052 = vadd.f32 0.0, %v2051
  %v2053 = vpop.f32.mrb[0].mxu0
  %v2054 = vadd.f32 0.0, %v2053
  %v2055 = vpop.f32.mrb[0].mxu0
  %v2056 = vadd.f32 0.0, %v2055
  %v2057 = vpop.f32.mrb[0].mxu0
  %v2058 = vadd.f32 0.0, %v2057
  %2059 = vdwg.mxu0
  %2060 = vmatprep.subr.bf16.mxu0 %v1305
  %2061 = vmatpush1.bf16.msra.mxu0 %v1304
  %2062 = vmatprep.subr.bf16.mxu0 %v1317
  %2063 = vmatpush1.bf16.msra.mxu0 %v1316
  %2064 = vmatprep.subr.bf16.mxu0 %v1585
  %2065 = vmatpush1.bf16.msra.mxu0 %v1582
  %2066 = vmatprep.subr.bf16.mxu0 0
  %2067 = vmatpush1.bf16.msra.mxu0 0
  %2068 = vmatprep.subr.bf16.mxu0 0
  %2069 = vmatpush1.bf16.msra.mxu0 0
  %2070 = vmatprep.subr.bf16.mxu0 0
  %2071 = vmatpush1.bf16.msra.mxu0 0
  %2072 = vmatprep.subr.bf16.mxu0 0
  %2073 = vmatpush1.bf16.msra.mxu0 0
  %2074 = vmatprep.subr.bf16.mxu0 0
  %2075 = vmatpush1.bf16.msra.mxu0 0
  %2076 = vmatprep.subr.bf16.mxu0 0
  %2077 = vmatpush1.bf16.msra.mxu0 0
  %2078 = vmatprep.subr.bf16.mxu0 0
  %2079 = vmatpush1.bf16.msra.mxu0 0
  %2080 = vmatprep.subr.bf16.mxu0 0
  %2081 = vmatpush1.bf16.msra.mxu0 0
  %2082 = vmatprep.subr.bf16.mxu0 0
  %2083 = vmatpush1.bf16.msra.mxu0 0
  %2084 = vmatprep.subr.bf16.mxu0 0
  %2085 = vmatpush1.bf16.msra.mxu0 0
  %2086 = vmatprep.subr.bf16.mxu0 0
  %2087 = vmatpush1.bf16.msra.mxu0 0
  %2088 = vmatprep.subr.bf16.mxu0 0
  %2089 = vmatpush1.bf16.msra.mxu0 0
  %2090 = vmatprep.subr.bf16.mxu0 0
  %2091 = vmatpush1.bf16.msra.mxu0 0
  %2092 = vmatprep.mubr.bf16.mxu0 0
  %2093 = vmatmul.mubr.bf16.gmra.mrb[0].mxu0 %v1548
  %v2094 = vpop.f32.mrb[0].mxu0
  %v2095 = vadd.f32 %v2052, %v2094
  %v2096 = vpop.f32.mrb[0].mxu0
  %v2097 = vadd.f32 %v2054, %v2096
  %v2098 = vpop.f32.mrb[0].mxu0
  %v2099 = vadd.f32 %v2056, %v2098
  %v2100 = vpop.f32.mrb[0].mxu0
  %v2101 = vadd.f32 %v2058, %v2100
  %2102 = vdwg.mxu0
  %v2103 = vrot.slane %v1665, 4
  %v2104 = vmax.f32 %v1665, %v2103
  %v2105 = vrot.slane %v2104, 2
  %v2106 = vmax.f32 %v2104, %v2105
  %v2107 = vrot.slane %v2106, 1
  %v2108 = vmax.f32 %v2106, %v2107
  %v2109 = vrot.slane %v1667, 4
  %v2110 = vmax.f32 %v1667, %v2109
  %v2111 = vrot.slane %v2110, 2
  %v2112 = vmax.f32 %v2110, %v2111
  %v2113 = vrot.slane %v2112, 1
  %v2114 = vmax.f32 %v2112, %v2113
  %v2117 = vrot.slane %v1837, 1
  %v2118 = vrot.slane %v1839, 1
  %v2121 = vadd.f32 %v1751, %v2117
  %v2122 = vadd.f32 %v1753, %v2118
  %vm2123 = vcmask 1046528
  %v2124 = vsel %vm2123, %v2121, -inf
  %v2125 = vrot.slane %v2124, 4
  %v2126 = vmax.f32 %v2124, %v2125
  %v2127 = vrot.slane %v2126, 2
  %v2128 = vmax.f32 %v2126, %v2127
  %v2129 = vrot.slane %v2128, 1
  %v2130 = vmax.f32 %v2128, %v2129
  %v2131 = vsel %vm2123, %v2122, -inf
  %v2132 = vrot.slane %v2131, 4
  %v2133 = vmax.f32 %v2131, %v2132
  %v2134 = vrot.slane %v2133, 2
  %v2135 = vmax.f32 %v2133, %v2134
  %v2136 = vrot.slane %v2135, 1
  %v2137 = vmax.f32 %v2135, %v2136
  %v2140 = vrot.slane %v2009, 1
  %v2141 = vrot.slane %v2011, 1
  %v2144 = vadd.f32 %v1923, %v2140
  %v2145 = vadd.f32 %v1925, %v2141
  %v2148 = vrot.slane %v2095, 2
  %v2149 = vrot.slane %v2097, 2
  %v2152 = vadd.f32 %v2144, %v2148
  %v2153 = vadd.f32 %v2145, %v2149
  %v2154 = vsel %vm1550, %v2152, -inf
  %v2155 = vrot.slane %v2154, 4
  %v2156 = vmax.f32 %v2154, %v2155
  %v2157 = vrot.slane %v2156, 2
  %v2158 = vmax.f32 %v2156, %v2157
  %v2159 = vrot.slane %v2158, 1
  %v2160 = vmax.f32 %v2158, %v2159
  %v2161 = vsel %vm1550, %v2153, -inf
  %v2162 = vrot.slane %v2161, 4
  %v2163 = vmax.f32 %v2161, %v2162
  %v2164 = vrot.slane %v2163, 2
  %v2165 = vmax.f32 %v2163, %v2164
  %v2166 = vrot.slane %v2165, 1
  %v2167 = vmax.f32 %v2165, %v2166
  %v2168 = vrot.slane %v1669, 4
  %v2169 = vmax.f32 %v1669, %v2168
  %v2170 = vrot.slane %v2169, 2
  %v2171 = vmax.f32 %v2169, %v2170
  %v2172 = vrot.slane %v2171, 1
  %v2173 = vmax.f32 %v2171, %v2172
  %v2174 = vrot.slane %v1671, 4
  %v2175 = vmax.f32 %v1671, %v2174
  %v2176 = vrot.slane %v2175, 2
  %v2177 = vmax.f32 %v2175, %v2176
  %v2178 = vrot.slane %v2177, 1
  %v2179 = vmax.f32 %v2177, %v2178
  %v2182 = vrot.slane %v1841, 1
  %v2183 = vrot.slane %v1843, 1
  %v2186 = vadd.f32 %v1755, %v2182
  %v2187 = vadd.f32 %v1757, %v2183
  %v2188 = vsel %vm2123, %v2186, -inf
  %v2189 = vrot.slane %v2188, 4
  %v2190 = vmax.f32 %v2188, %v2189
  %v2191 = vrot.slane %v2190, 2
  %v2192 = vmax.f32 %v2190, %v2191
  %v2193 = vrot.slane %v2192, 1
  %v2194 = vmax.f32 %v2192, %v2193
  %v2195 = vsel %vm2123, %v2187, -inf
  %v2196 = vrot.slane %v2195, 4
  %v2197 = vmax.f32 %v2195, %v2196
  %v2198 = vrot.slane %v2197, 2
  %v2199 = vmax.f32 %v2197, %v2198
  %v2200 = vrot.slane %v2199, 1
  %v2201 = vmax.f32 %v2199, %v2200
  %v2204 = vrot.slane %v2013, 1
  %v2205 = vrot.slane %v2015, 1
  %v2208 = vadd.f32 %v1927, %v2204
  %v2209 = vadd.f32 %v1929, %v2205
  %v2212 = vrot.slane %v2099, 2
  %v2213 = vrot.slane %v2101, 2
  %v2216 = vadd.f32 %v2208, %v2212
  %v2217 = vadd.f32 %v2209, %v2213
  %v2218 = vsel %vm1550, %v2216, -inf
  %v2219 = vrot.slane %v2218, 4
  %v2220 = vmax.f32 %v2218, %v2219
  %v2221 = vrot.slane %v2220, 2
  %v2222 = vmax.f32 %v2220, %v2221
  %v2223 = vrot.slane %v2222, 1
  %v2224 = vmax.f32 %v2222, %v2223
  %v2225 = vsel %vm1550, %v2217, -inf
  %v2226 = vrot.slane %v2225, 4
  %v2227 = vmax.f32 %v2225, %v2226
  %v2228 = vrot.slane %v2227, 2
  %v2229 = vmax.f32 %v2227, %v2228
  %v2230 = vrot.slane %v2229, 1
  %v2231 = vmax.f32 %v2229, %v2230
  %v2238 = vrot.slane %v2173, 7
  %v2239 = vrot.slane %v2179, 7
  %v2240 = vrot.slane %v2194, 7
  %v2241 = vrot.slane %v2201, 7
  %v2242 = vrot.slane %v2224, 7
  %v2243 = vrot.slane %v2231, 7
  %vm2250 = vcmask 1040384
  %v2251 = vsel %vm2250, %v2108, %v2238
  %v2252 = vsel %vm2250, %v2114, %v2239
  %v2253 = vsel %vm2250, %v2130, %v2240
  %v2254 = vsel %vm2250, %v2137, %v2241
  %v2255 = vsel %vm2250, %v2160, %v2242
  %v2256 = vsel %vm2250, %v2167, %v2243
  %v2257 = vld [vmem:[%s4] sm:$0x3f]
  %v2259 = vlaneseq
  %v2260 = vshrl.u32 %v2259, 7
  %v2261 = vsub.s32 0, %v2260
  %v2262 = vrot.slane %v2257, %v2261
  %v2263 = vlaneseq
  %v2264 = vshrl.u32 %v2263, 7
  %v2265 = vsub.s32 1, %v2264
  %v2266 = vrot.slane %v2257, %v2265
  %v2267 = vlaneseq
  %v2268 = vshrl.u32 %v2267, 7
  %v2269 = vsub.s32 2, %v2268
  %v2270 = vrot.slane %v2257, %v2269
  %v2271 = vlaneseq
  %v2272 = vshrl.u32 %v2271, 7
  %v2273 = vsub.s32 3, %v2272
  %v2274 = vrot.slane %v2257, %v2273
  %v2275 = vlaneseq
  %v2276 = vshrl.u32 %v2275, 7
  %v2277 = vsub.s32 4, %v2276
  %v2278 = vrot.slane %v2257, %v2277
  %v2279 = vlaneseq
  %v2280 = vshrl.u32 %v2279, 7
  %v2281 = vsub.s32 5, %v2280
  %v2282 = vrot.slane %v2257, %v2281
  %v2289 = vadd.f32 %v2251, %v2262
  %v2290 = vadd.f32 %v2252, %v2266
  %v2291 = vadd.f32 %v2253, %v2270
  %v2292 = vadd.f32 %v2254, %v2274
  %v2293 = vadd.f32 %v2255, %v2278
  %v2294 = vadd.f32 %v2256, %v2282
  %v2295 = vtanh.pop %v2289
  %v2296 = vtanh.pop %v2290
  %v2297 = vtanh.pop %v2291
  %v2298 = vtanh.pop %v2292
  %v2299 = vtanh.pop %v2293
  %v2300 = vtanh.pop %v2294
  %v2301 = vpack.c.bf16 %v2295, %v2295
  %v2302 = vpack.c.bf16 %v2296, %v2296
  %v2303 = vpack.c.bf16 %v2297, %v2297
  %v2304 = vpack.c.bf16 %v2298, %v2298
  %v2305 = vpack.c.bf16 %v2299, %v2299
  %v2306 = vpack.c.bf16 %v2300, %v2300
  %v2307 = vld [vmem:[%s5] sm:$0xff]
  %v2308 = vld [vmem:[%s5 + $0x8] sm:$0xf]
  %v2309 = vld [vmem:[%s5 + $0xc] sm:$0xff]
  %v2310 = vld [vmem:[%s5 + $0x14] sm:$0xf]
  %v2311 = vld [vmem:[%s5 + $0x18] sm:$0xff]
  %v2312 = vld [vmem:[%s5 + $0x20] sm:$0xf]
  %v2313 = vld [vmem:[%s5 + $0x24] sm:$0xff]
  %v2314 = vld [vmem:[%s5 + $0x2c] sm:$0xf]
  %v2315 = vld [vmem:[%s5 + $0x30] sm:$0xff]
  %v2316 = vld [vmem:[%s5 + $0x38] sm:$0xf]
  %v2317 = vld [vmem:[%s5 + $0x3c] sm:$0xff]
  %v2318 = vld [vmem:[%s5 + $0x44] sm:$0xf]
  %v2319 = vld [vmem:[%s5 + $0x48] sm:$0xff]
  %v2320 = vld [vmem:[%s5 + $0x50] sm:$0xf]
  %v2321 = vld [vmem:[%s5 + $0x54] sm:$0xff]
  %v2322 = vld [vmem:[%s5 + $0x5c] sm:$0xf]
  %v2323 = vld [vmem:[%s5 + $0x60] sm:$0xff]
  %v2324 = vld [vmem:[%s5 + $0x68] sm:$0xf]
  %v2325 = vld [vmem:[%s5 + $0x6c] sm:$0xff]
  %v2326 = vld [vmem:[%s5 + $0x74] sm:$0xf]
  %v2327 = vld [vmem:[%s5 + $0x78] sm:$0xff]
  %v2328 = vld [vmem:[%s5 + $0x80] sm:$0xf]
  %v2329 = vld [vmem:[%s5 + $0x84] sm:$0xff]
  %v2330 = vld [vmem:[%s5 + $0x8c] sm:$0xf]
  %v2331 = vld [vmem:[%s5 + $0x90] sm:$0xff]
  %v2332 = vld [vmem:[%s5 + $0x98] sm:$0xf]
  %v2333 = vld [vmem:[%s5 + $0x9c] sm:$0xff]
  %v2334 = vld [vmem:[%s5 + $0xa4] sm:$0xf]
  %v2335 = vld [vmem:[%s5 + $0xa8] sm:$0xff]
  %v2336 = vld [vmem:[%s5 + $0xb0] sm:$0xf]
  %v2337 = vld [vmem:[%s5 + $0xb4] sm:$0xff]
  %v2338 = vld [vmem:[%s5 + $0xbc] sm:$0xf]
  %v2339 = vld [vmem:[%s5 + $0xc0] sm:$0xff]
  %v2340 = vld [vmem:[%s5 + $0xc8] sm:$0xf]
  %v2341 = vld [vmem:[%s5 + $0xcc] sm:$0xff]
  %v2342 = vld [vmem:[%s5 + $0xd4] sm:$0xf]
  %v2343 = vld [vmem:[%s5 + $0xd8] sm:$0xff]
  %v2344 = vld [vmem:[%s5 + $0xe0] sm:$0xf]
  %v2345 = vld [vmem:[%s5 + $0xe4] sm:$0xff]
  %v2346 = vld [vmem:[%s5 + $0xec] sm:$0xf]
  %v2347 = vld [vmem:[%s5 + $0xf0] sm:$0xff]
  %v2348 = vld [vmem:[%s5 + $0xf8] sm:$0xf]
  %v2349 = vld [vmem:[%s5 + $0xfc] sm:$0xff]
  %v2350 = vld [vmem:[%s5 + $0x104] sm:$0xf]
  %v2351 = vld [vmem:[%s5 + $0x108] sm:$0xff]
  %v2352 = vld [vmem:[%s5 + $0x110] sm:$0xf]
  %v2353 = vld [vmem:[%s5 + $0x114] sm:$0xff]
  %v2354 = vld [vmem:[%s5 + $0x11c] sm:$0xf]
  %v2355 = vld [vmem:[%s5 + $0x120] sm:$0xff]
  %v2356 = vld [vmem:[%s5 + $0x128] sm:$0xf]
  %v2357 = vld [vmem:[%s5 + $0x12c] sm:$0xff]
  %v2358 = vld [vmem:[%s5 + $0x134] sm:$0xf]
  %v2359 = vld [vmem:[%s5 + $0x138] sm:$0xff]
  %v2360 = vld [vmem:[%s5 + $0x140] sm:$0xf]
  %v2361 = vld [vmem:[%s5 + $0x144] sm:$0xff]
  %v2362 = vld [vmem:[%s5 + $0x14c] sm:$0xf]
  %v2363 = vld [vmem:[%s5 + $0x150] sm:$0xff]
  %v2364 = vld [vmem:[%s5 + $0x158] sm:$0xf]
  %v2365 = vld [vmem:[%s5 + $0x15c] sm:$0xff]
  %v2366 = vld [vmem:[%s5 + $0x164] sm:$0xf]
  %v2367 = vld [vmem:[%s5 + $0x168] sm:$0xff]
  %v2368 = vld [vmem:[%s5 + $0x170] sm:$0xf]
  %v2369 = vld [vmem:[%s5 + $0x174] sm:$0xff]
  %v2370 = vld [vmem:[%s5 + $0x17c] sm:$0xf]
  %v2371 = vld [vmem:[%s5 + $0x180] sm:$0xff]
  %v2372 = vld [vmem:[%s5 + $0x188] sm:$0xf]
  %v2373 = vld [vmem:[%s5 + $0x18c] sm:$0xff]
  %v2374 = vld [vmem:[%s5 + $0x194] sm:$0xf]
  %v2375 = vld [vmem:[%s5 + $0x198] sm:$0xff]
  %v2376 = vld [vmem:[%s5 + $0x1a0] sm:$0xf]
  %v2377 = vld [vmem:[%s5 + $0x1a4] sm:$0xff]
  %v2378 = vld [vmem:[%s5 + $0x1ac] sm:$0xf]
  %v2379 = vld [vmem:[%s5 + $0x1b0] sm:$0xff]
  %v2380 = vld [vmem:[%s5 + $0x1b8] sm:$0xf]
  %v2381 = vld [vmem:[%s5 + $0x1bc] sm:$0xff]
  %v2382 = vld [vmem:[%s5 + $0x1c4] sm:$0xf]
  %v2383 = vld [vmem:[%s5 + $0x1c8] sm:$0xff]
  %v2384 = vld [vmem:[%s5 + $0x1d0] sm:$0xf]
  %v2385 = vld [vmem:[%s5 + $0x1d4] sm:$0xff]
  %v2386 = vld [vmem:[%s5 + $0x1dc] sm:$0xf]
  %v2387 = vld [vmem:[%s5 + $0x1e0] sm:$0xff]
  %v2388 = vld [vmem:[%s5 + $0x1e8] sm:$0xf]
  %v2389 = vld [vmem:[%s5 + $0x1ec] sm:$0xff]
  %v2390 = vld [vmem:[%s5 + $0x1f4] sm:$0xf]
  %v2391 = vld [vmem:[%s5 + $0x1f8] sm:$0xff]
  %v2392 = vld [vmem:[%s5 + $0x200] sm:$0xf]
  %v2393 = vld [vmem:[%s5 + $0x204] sm:$0xff]
  %v2394 = vld [vmem:[%s5 + $0x20c] sm:$0xf]
  %v2395 = vld [vmem:[%s5 + $0x210] sm:$0xff]
  %v2396 = vld [vmem:[%s5 + $0x218] sm:$0xf]
  %v2397 = vld [vmem:[%s5 + $0x21c] sm:$0xff]
  %v2398 = vld [vmem:[%s5 + $0x224] sm:$0xf]
  %v2399 = vld [vmem:[%s5 + $0x228] sm:$0xff]
  %v2400 = vld [vmem:[%s5 + $0x230] sm:$0xf]
  %v2401 = vld [vmem:[%s5 + $0x234] sm:$0xff]
  %v2402 = vld [vmem:[%s5 + $0x23c] sm:$0xf]
  %v2403 = vld [vmem:[%s5 + $0x240] sm:$0xff]
  %v2404 = vld [vmem:[%s5 + $0x248] sm:$0xf]
  %v2405 = vld [vmem:[%s5 + $0x24c] sm:$0xff]
  %v2406 = vld [vmem:[%s5 + $0x254] sm:$0xf]
  %v2407 = vld [vmem:[%s5 + $0x258] sm:$0xff]
  %v2408 = vld [vmem:[%s5 + $0x260] sm:$0xf]
  %v2409 = vld [vmem:[%s5 + $0x264] sm:$0xff]
  %v2410 = vld [vmem:[%s5 + $0x26c] sm:$0xf]
  %v2411 = vld [vmem:[%s5 + $0x270] sm:$0xff]
  %v2412 = vld [vmem:[%s5 + $0x278] sm:$0xf]
  %v2413 = vld [vmem:[%s5 + $0x27c] sm:$0xff]
  %v2414 = vld [vmem:[%s5 + $0x284] sm:$0xf]
  %v2415 = vld [vmem:[%s5 + $0x288] sm:$0xff]
  %v2416 = vld [vmem:[%s5 + $0x290] sm:$0xf]
  %v2417 = vld [vmem:[%s5 + $0x294] sm:$0xff]
  %v2418 = vld [vmem:[%s5 + $0x29c] sm:$0xf]
  %v2419 = vld [vmem:[%s5 + $0x2a0] sm:$0xff]
  %v2420 = vld [vmem:[%s5 + $0x2a8] sm:$0xf]
  %v2421 = vld [vmem:[%s5 + $0x2ac] sm:$0xff]
  %v2422 = vld [vmem:[%s5 + $0x2b4] sm:$0xf]
  %v2423 = vld [vmem:[%s5 + $0x2b8] sm:$0xff]
  %v2424 = vld [vmem:[%s5 + $0x2c0] sm:$0xf]
  %v2425 = vld [vmem:[%s5 + $0x2c4] sm:$0xff]
  %v2426 = vld [vmem:[%s5 + $0x2cc] sm:$0xf]
  %v2427 = vld [vmem:[%s5 + $0x2d0] sm:$0xff]
  %v2428 = vld [vmem:[%s5 + $0x2d8] sm:$0xf]
  %v2429 = vld [vmem:[%s5 + $0x2dc] sm:$0xff]
  %v2430 = vld [vmem:[%s5 + $0x2e4] sm:$0xf]
  %v2431 = vld [vmem:[%s5 + $0x2e8] sm:$0xff]
  %v2432 = vld [vmem:[%s5 + $0x2f0] sm:$0xf]
  %v2433 = vld [vmem:[%s5 + $0x2f4] sm:$0xff]
  %v2434 = vld [vmem:[%s5 + $0x2fc] sm:$0xf]
  %v2435 = vld [vmem:[%s5 + $0x300] sm:$0xff]
  %v2436 = vld [vmem:[%s5 + $0x308] sm:$0xf]
  %v2437 = vld [vmem:[%s5 + $0x30c] sm:$0xff]
  %v2438 = vld [vmem:[%s5 + $0x314] sm:$0xf]
  %v2439 = vld [vmem:[%s5 + $0x318] sm:$0xff]
  %v2440 = vld [vmem:[%s5 + $0x320] sm:$0xf]
  %v2441 = vld [vmem:[%s5 + $0x324] sm:$0xff]
  %v2442 = vld [vmem:[%s5 + $0x32c] sm:$0xf]
  %v2443 = vld [vmem:[%s5 + $0x330] sm:$0xff]
  %v2444 = vld [vmem:[%s5 + $0x338] sm:$0xf]
  %v2445 = vld [vmem:[%s5 + $0x33c] sm:$0xff]
  %v2446 = vld [vmem:[%s5 + $0x344] sm:$0xf]
  %v2447 = vld [vmem:[%s5 + $0x348] sm:$0xff]
  %v2448 = vld [vmem:[%s5 + $0x350] sm:$0xf]
  %v2449 = vld [vmem:[%s5 + $0x354] sm:$0xff]
  %v2450 = vld [vmem:[%s5 + $0x35c] sm:$0xf]
  %v2451 = vld [vmem:[%s5 + $0x360] sm:$0xff]
  %v2452 = vld [vmem:[%s5 + $0x368] sm:$0xf]
  %v2453 = vld [vmem:[%s5 + $0x36c] sm:$0xff]
  %v2454 = vld [vmem:[%s5 + $0x374] sm:$0xf]
  %v2455 = vld [vmem:[%s5 + $0x378] sm:$0xff]
  %v2456 = vld [vmem:[%s5 + $0x380] sm:$0xf]
  %v2457 = vld [vmem:[%s5 + $0x384] sm:$0xff]
  %v2458 = vld [vmem:[%s5 + $0x38c] sm:$0xf]
  %v2459 = vld [vmem:[%s5 + $0x390] sm:$0xff]
  %v2460 = vld [vmem:[%s5 + $0x398] sm:$0xf]
  %v2461 = vld [vmem:[%s5 + $0x39c] sm:$0xff]
  %v2462 = vld [vmem:[%s5 + $0x3a4] sm:$0xf]
  %v2463 = vld [vmem:[%s5 + $0x3a8] sm:$0xff]
  %v2464 = vld [vmem:[%s5 + $0x3b0] sm:$0xf]
  %v2465 = vld [vmem:[%s5 + $0x3b4] sm:$0xff]
  %v2466 = vld [vmem:[%s5 + $0x3bc] sm:$0xf]
  %v2467 = vld [vmem:[%s5 + $0x3c0] sm:$0xff]
  %v2468 = vld [vmem:[%s5 + $0x3c8] sm:$0xf]
  %v2469 = vld [vmem:[%s5 + $0x3cc] sm:$0xff]
  %v2470 = vld [vmem:[%s5 + $0x3d4] sm:$0xf]
  %v2471 = vld [vmem:[%s5 + $0x3d8] sm:$0xff]
  %v2472 = vld [vmem:[%s5 + $0x3e0] sm:$0xf]
  %v2473 = vld [vmem:[%s5 + $0x3e4] sm:$0xff]
  %v2474 = vld [vmem:[%s5 + $0x3ec] sm:$0xf]
  %v2475 = vld [vmem:[%s5 + $0x3f0] sm:$0xff]
  %v2476 = vld [vmem:[%s5 + $0x3f8] sm:$0xf]
  %v2477 = vld [vmem:[%s5 + $0x3fc] sm:$0xff]
  %v2478 = vld [vmem:[%s5 + $0x404] sm:$0xf]
  %v2479 = vld [vmem:[%s5 + $0x408] sm:$0xff]
  %v2480 = vld [vmem:[%s5 + $0x410] sm:$0xf]
  %v2481 = vld [vmem:[%s5 + $0x414] sm:$0xff]
  %v2482 = vld [vmem:[%s5 + $0x41c] sm:$0xf]
  %v2483 = vld [vmem:[%s5 + $0x420] sm:$0xff]
  %v2484 = vld [vmem:[%s5 + $0x428] sm:$0xf]
  %v2485 = vld [vmem:[%s5 + $0x42c] sm:$0xff]
  %v2486 = vld [vmem:[%s5 + $0x434] sm:$0xf]
  %v2487 = vld [vmem:[%s5 + $0x438] sm:$0xff]
  %v2488 = vld [vmem:[%s5 + $0x440] sm:$0xf]
  %v2489 = vld [vmem:[%s5 + $0x444] sm:$0xff]
  %v2490 = vld [vmem:[%s5 + $0x44c] sm:$0xf]
  %v2491 = vld [vmem:[%s5 + $0x450] sm:$0xff]
  %v2492 = vld [vmem:[%s5 + $0x458] sm:$0xf]
  %v2493 = vld [vmem:[%s5 + $0x45c] sm:$0xff]
  %v2494 = vld [vmem:[%s5 + $0x464] sm:$0xf]
  %v2495 = vld [vmem:[%s5 + $0x468] sm:$0xff]
  %v2496 = vld [vmem:[%s5 + $0x470] sm:$0xf]
  %v2497 = vld [vmem:[%s5 + $0x474] sm:$0xff]
  %v2498 = vld [vmem:[%s5 + $0x47c] sm:$0xf]
  %v2499 = vld [vmem:[%s6] sm:$0x7]
  %v2501 = vlaneseq
  %v2502 = vshrl.u32 %v2501, 7
  %v2503 = vsub.s32 0, %v2502
  %v2504 = vrot.slane %v2499, %v2503
  %v2505 = vlaneseq
  %v2506 = vshrl.u32 %v2505, 7
  %v2507 = vsub.s32 1, %v2506
  %v2508 = vrot.slane %v2499, %v2507
  %v2509 = vlaneseq
  %v2510 = vshrl.u32 %v2509, 7
  %v2511 = vsub.s32 2, %v2510
  %v2512 = vrot.slane %v2499, %v2511
  %v2708 = vunpack.c.l.b16 %v2307
  %v2709 = vunpack.c.h.b16 %v2307
  %v2710 = vunpack.c.l.b16 %v2308
  %v2711 = vunpack.c.l.b16 %v2309
  %v2712 = vunpack.c.h.b16 %v2309
  %v2713 = vunpack.c.l.b16 %v2310
  %v2714 = vunpack.c.l.b16 %v2311
  %v2715 = vunpack.c.h.b16 %v2311
  %v2716 = vunpack.c.l.b16 %v2312
  %v2717 = vunpack.c.l.b16 %v2313
  %v2718 = vunpack.c.h.b16 %v2313
  %v2719 = vunpack.c.l.b16 %v2314
  %v2720 = vunpack.c.l.b16 %v2315
  %v2721 = vunpack.c.h.b16 %v2315
  %v2722 = vunpack.c.l.b16 %v2316
  %v2723 = vunpack.c.l.b16 %v2317
  %v2724 = vunpack.c.h.b16 %v2317
  %v2725 = vunpack.c.l.b16 %v2318
  %v2726 = vunpack.c.l.b16 %v2319
  %v2727 = vunpack.c.h.b16 %v2319
  %v2728 = vunpack.c.l.b16 %v2320
  %v2729 = vunpack.c.l.b16 %v2321
  %v2730 = vunpack.c.h.b16 %v2321
  %v2731 = vunpack.c.l.b16 %v2322
  %v2732 = vunpack.c.l.b16 %v2323
  %v2733 = vunpack.c.h.b16 %v2323
  %v2734 = vunpack.c.l.b16 %v2324
  %v2735 = vunpack.c.l.b16 %v2325
  %v2736 = vunpack.c.h.b16 %v2325
  %v2737 = vunpack.c.l.b16 %v2326
  %v2738 = vunpack.c.l.b16 %v2327
  %v2739 = vunpack.c.h.b16 %v2327
  %v2740 = vunpack.c.l.b16 %v2328
  %v2741 = vunpack.c.l.b16 %v2329
  %v2742 = vunpack.c.h.b16 %v2329
  %v2743 = vunpack.c.l.b16 %v2330
  %v2744 = vunpack.c.l.b16 %v2331
  %v2745 = vunpack.c.h.b16 %v2331
  %v2746 = vunpack.c.l.b16 %v2332
  %v2747 = vunpack.c.l.b16 %v2333
  %v2748 = vunpack.c.h.b16 %v2333
  %v2749 = vunpack.c.l.b16 %v2334
  %v2750 = vunpack.c.l.b16 %v2335
  %v2751 = vunpack.c.h.b16 %v2335
  %v2752 = vunpack.c.l.b16 %v2336
  %v2753 = vunpack.c.l.b16 %v2337
  %v2754 = vunpack.c.h.b16 %v2337
  %v2755 = vunpack.c.l.b16 %v2338
  %v2756 = vunpack.c.l.b16 %v2339
  %v2757 = vunpack.c.h.b16 %v2339
  %v2758 = vunpack.c.l.b16 %v2340
  %v2759 = vunpack.c.l.b16 %v2341
  %v2760 = vunpack.c.h.b16 %v2341
  %v2761 = vunpack.c.l.b16 %v2342
  %v2762 = vunpack.c.l.b16 %v2343
  %v2763 = vunpack.c.h.b16 %v2343
  %v2764 = vunpack.c.l.b16 %v2344
  %v2765 = vunpack.c.l.b16 %v2345
  %v2766 = vunpack.c.h.b16 %v2345
  %v2767 = vunpack.c.l.b16 %v2346
  %v2768 = vunpack.c.l.b16 %v2347
  %v2769 = vunpack.c.h.b16 %v2347
  %v2770 = vunpack.c.l.b16 %v2348
  %v2771 = vunpack.c.l.b16 %v2349
  %v2772 = vunpack.c.h.b16 %v2349
  %v2773 = vunpack.c.l.b16 %v2350
  %v2774 = vunpack.c.l.b16 %v2351
  %v2775 = vunpack.c.h.b16 %v2351
  %v2776 = vunpack.c.l.b16 %v2352
  %v2777 = vunpack.c.l.b16 %v2353
  %v2778 = vunpack.c.h.b16 %v2353
  %v2779 = vunpack.c.l.b16 %v2354
  %v2780 = vunpack.c.l.b16 %v2355
  %v2781 = vunpack.c.h.b16 %v2355
  %v2782 = vunpack.c.l.b16 %v2356
  %v2783 = vunpack.c.l.b16 %v2357
  %v2784 = vunpack.c.h.b16 %v2357
  %v2785 = vunpack.c.l.b16 %v2358
  %v2786 = vunpack.c.l.b16 %v2359
  %v2787 = vunpack.c.h.b16 %v2359
  %v2788 = vunpack.c.l.b16 %v2360
  %v2789 = vunpack.c.l.b16 %v2361
  %v2790 = vunpack.c.h.b16 %v2361
  %v2791 = vunpack.c.l.b16 %v2362
  %v2792 = vunpack.c.l.b16 %v2363
  %v2793 = vunpack.c.h.b16 %v2363
  %v2794 = vunpack.c.l.b16 %v2364
  %v2795 = vunpack.c.l.b16 %v2365
  %v2796 = vunpack.c.h.b16 %v2365
  %v2797 = vunpack.c.l.b16 %v2366
  %v2798 = vunpack.c.l.b16 %v2367
  %v2799 = vunpack.c.h.b16 %v2367
  %v2800 = vunpack.c.l.b16 %v2368
  %v2801 = vunpack.c.l.b16 %v2369
  %v2802 = vunpack.c.h.b16 %v2369
  %v2803 = vunpack.c.l.b16 %v2370
  %v2804 = vunpack.c.l.b16 %v2371
  %v2805 = vunpack.c.h.b16 %v2371
  %v2806 = vunpack.c.l.b16 %v2372
  %v2807 = vunpack.c.l.b16 %v2373
  %v2808 = vunpack.c.h.b16 %v2373
  %v2809 = vunpack.c.l.b16 %v2374
  %v2810 = vunpack.c.l.b16 %v2375
  %v2811 = vunpack.c.h.b16 %v2375
  %v2812 = vunpack.c.l.b16 %v2376
  %v2813 = vunpack.c.l.b16 %v2377
  %v2814 = vunpack.c.h.b16 %v2377
  %v2815 = vunpack.c.l.b16 %v2378
  %v2816 = vunpack.c.l.b16 %v2379
  %v2817 = vunpack.c.h.b16 %v2379
  %v2818 = vunpack.c.l.b16 %v2380
  %v2819 = vunpack.c.l.b16 %v2381
  %v2820 = vunpack.c.h.b16 %v2381
  %v2821 = vunpack.c.l.b16 %v2382
  %v2822 = vunpack.c.l.b16 %v2383
  %v2823 = vunpack.c.h.b16 %v2383
  %v2824 = vunpack.c.l.b16 %v2384
  %v2825 = vunpack.c.l.b16 %v2385
  %v2826 = vunpack.c.h.b16 %v2385
  %v2827 = vunpack.c.l.b16 %v2386
  %v2828 = vunpack.c.l.b16 %v2387
  %v2829 = vunpack.c.h.b16 %v2387
  %v2830 = vunpack.c.l.b16 %v2388
  %v2831 = vunpack.c.l.b16 %v2389
  %v2832 = vunpack.c.h.b16 %v2389
  %v2833 = vunpack.c.l.b16 %v2390
  %v2834 = vunpack.c.l.b16 %v2391
  %v2835 = vunpack.c.h.b16 %v2391
  %v2836 = vunpack.c.l.b16 %v2392
  %v2837 = vunpack.c.l.b16 %v2393
  %v2838 = vunpack.c.h.b16 %v2393
  %v2839 = vunpack.c.l.b16 %v2394
  %v2840 = vunpack.c.l.b16 %v2395
  %v2841 = vunpack.c.h.b16 %v2395
  %v2842 = vunpack.c.l.b16 %v2396
  %v2843 = vunpack.c.l.b16 %v2397
  %v2844 = vunpack.c.h.b16 %v2397
  %v2845 = vunpack.c.l.b16 %v2398
  %v2846 = vunpack.c.l.b16 %v2399
  %v2847 = vunpack.c.h.b16 %v2399
  %v2848 = vunpack.c.l.b16 %v2400
  %v2849 = vunpack.c.l.b16 %v2401
  %v2850 = vunpack.c.h.b16 %v2401
  %v2851 = vunpack.c.l.b16 %v2402
  %v2852 = vunpack.c.l.b16 %v2403
  %v2853 = vunpack.c.h.b16 %v2403
  %v2854 = vunpack.c.l.b16 %v2404
  %v2855 = vunpack.c.l.b16 %v2405
  %v2856 = vunpack.c.h.b16 %v2405
  %v2857 = vunpack.c.l.b16 %v2406
  %v2858 = vunpack.c.l.b16 %v2407
  %v2859 = vunpack.c.h.b16 %v2407
  %v2860 = vunpack.c.l.b16 %v2408
  %v2861 = vunpack.c.l.b16 %v2409
  %v2862 = vunpack.c.h.b16 %v2409
  %v2863 = vunpack.c.l.b16 %v2410
  %v2864 = vunpack.c.l.b16 %v2411
  %v2865 = vunpack.c.h.b16 %v2411
  %v2866 = vunpack.c.l.b16 %v2412
  %v2867 = vunpack.c.l.b16 %v2413
  %v2868 = vunpack.c.h.b16 %v2413
  %v2869 = vunpack.c.l.b16 %v2414
  %v2870 = vunpack.c.l.b16 %v2415
  %v2871 = vunpack.c.h.b16 %v2415
  %v2872 = vunpack.c.l.b16 %v2416
  %v2873 = vunpack.c.l.b16 %v2417
  %v2874 = vunpack.c.h.b16 %v2417
  %v2875 = vunpack.c.l.b16 %v2418
  %v2876 = vunpack.c.l.b16 %v2419
  %v2877 = vunpack.c.h.b16 %v2419
  %v2878 = vunpack.c.l.b16 %v2420
  %v2879 = vunpack.c.l.b16 %v2421
  %v2880 = vunpack.c.h.b16 %v2421
  %v2881 = vunpack.c.l.b16 %v2422
  %v2882 = vunpack.c.l.b16 %v2423
  %v2883 = vunpack.c.h.b16 %v2423
  %v2884 = vunpack.c.l.b16 %v2424
  %v2885 = vunpack.c.l.b16 %v2425
  %v2886 = vunpack.c.h.b16 %v2425
  %v2887 = vunpack.c.l.b16 %v2426
  %v2888 = vunpack.c.l.b16 %v2427
  %v2889 = vunpack.c.h.b16 %v2427
  %v2890 = vunpack.c.l.b16 %v2428
  %v2891 = vunpack.c.l.b16 %v2429
  %v2892 = vunpack.c.h.b16 %v2429
  %v2893 = vunpack.c.l.b16 %v2430
  %v2894 = vunpack.c.l.b16 %v2431
  %v2895 = vunpack.c.h.b16 %v2431
  %v2896 = vunpack.c.l.b16 %v2432
  %v2897 = vunpack.c.l.b16 %v2433
  %v2898 = vunpack.c.h.b16 %v2433
  %v2899 = vunpack.c.l.b16 %v2434
  %v2900 = vunpack.c.l.b16 %v2435
  %v2901 = vunpack.c.h.b16 %v2435
  %v2902 = vunpack.c.l.b16 %v2436
  %v2903 = vunpack.c.l.b16 %v2437
  %v2904 = vunpack.c.h.b16 %v2437
  %v2905 = vunpack.c.l.b16 %v2438
  %v2906 = vunpack.c.l.b16 %v2439
  %v2907 = vunpack.c.h.b16 %v2439
  %v2908 = vunpack.c.l.b16 %v2440
  %v2909 = vunpack.c.l.b16 %v2441
  %v2910 = vunpack.c.h.b16 %v2441
  %v2911 = vunpack.c.l.b16 %v2442
  %v2912 = vunpack.c.l.b16 %v2443
  %v2913 = vunpack.c.h.b16 %v2443
  %v2914 = vunpack.c.l.b16 %v2444
  %v2915 = vunpack.c.l.b16 %v2445
  %v2916 = vunpack.c.h.b16 %v2445
  %v2917 = vunpack.c.l.b16 %v2446
  %v2918 = vunpack.c.l.b16 %v2447
  %v2919 = vunpack.c.h.b16 %v2447
  %v2920 = vunpack.c.l.b16 %v2448
  %v2921 = vunpack.c.l.b16 %v2449
  %v2922 = vunpack.c.h.b16 %v2449
  %v2923 = vunpack.c.l.b16 %v2450
  %v2924 = vunpack.c.l.b16 %v2451
  %v2925 = vunpack.c.h.b16 %v2451
  %v2926 = vunpack.c.l.b16 %v2452
  %v2927 = vunpack.c.l.b16 %v2453
  %v2928 = vunpack.c.h.b16 %v2453
  %v2929 = vunpack.c.l.b16 %v2454
  %v2930 = vunpack.c.l.b16 %v2455
  %v2931 = vunpack.c.h.b16 %v2455
  %v2932 = vunpack.c.l.b16 %v2456
  %v2933 = vunpack.c.l.b16 %v2457
  %v2934 = vunpack.c.h.b16 %v2457
  %v2935 = vunpack.c.l.b16 %v2458
  %v2936 = vunpack.c.l.b16 %v2459
  %v2937 = vunpack.c.h.b16 %v2459
  %v2938 = vunpack.c.l.b16 %v2460
  %v2939 = vunpack.c.l.b16 %v2461
  %v2940 = vunpack.c.h.b16 %v2461
  %v2941 = vunpack.c.l.b16 %v2462
  %v2942 = vunpack.c.l.b16 %v2463
  %v2943 = vunpack.c.h.b16 %v2463
  %v2944 = vunpack.c.l.b16 %v2464
  %v2945 = vunpack.c.l.b16 %v2465
  %v2946 = vunpack.c.h.b16 %v2465
  %v2947 = vunpack.c.l.b16 %v2466
  %v2948 = vunpack.c.l.b16 %v2467
  %v2949 = vunpack.c.h.b16 %v2467
  %v2950 = vunpack.c.l.b16 %v2468
  %v2951 = vunpack.c.l.b16 %v2469
  %v2952 = vunpack.c.h.b16 %v2469
  %v2953 = vunpack.c.l.b16 %v2470
  %v2954 = vunpack.c.l.b16 %v2471
  %v2955 = vunpack.c.h.b16 %v2471
  %v2956 = vunpack.c.l.b16 %v2472
  %v2957 = vunpack.c.l.b16 %v2473
  %v2958 = vunpack.c.h.b16 %v2473
  %v2959 = vunpack.c.l.b16 %v2474
  %v2960 = vunpack.c.l.b16 %v2475
  %v2961 = vunpack.c.h.b16 %v2475
  %v2962 = vunpack.c.l.b16 %v2476
  %v2963 = vunpack.c.l.b16 %v2477
  %v2964 = vunpack.c.h.b16 %v2477
  %v2965 = vunpack.c.l.b16 %v2478
  %v2966 = vunpack.c.l.b16 %v2479
  %v2967 = vunpack.c.h.b16 %v2479
  %v2968 = vunpack.c.l.b16 %v2480
  %v2969 = vunpack.c.l.b16 %v2481
  %v2970 = vunpack.c.h.b16 %v2481
  %v2971 = vunpack.c.l.b16 %v2482
  %v2972 = vunpack.c.l.b16 %v2483
  %v2973 = vunpack.c.h.b16 %v2483
  %v2974 = vunpack.c.l.b16 %v2484
  %v2975 = vunpack.c.l.b16 %v2485
  %v2976 = vunpack.c.h.b16 %v2485
  %v2977 = vunpack.c.l.b16 %v2486
  %v2978 = vunpack.c.l.b16 %v2487
  %v2979 = vunpack.c.h.b16 %v2487
  %v2980 = vunpack.c.l.b16 %v2488
  %v2981 = vunpack.c.l.b16 %v2489
  %v2982 = vunpack.c.h.b16 %v2489
  %v2983 = vunpack.c.l.b16 %v2490
  %v2984 = vunpack.c.l.b16 %v2491
  %v2985 = vunpack.c.h.b16 %v2491
  %v2986 = vunpack.c.l.b16 %v2492
  %v2987 = vunpack.c.l.b16 %v2493
  %v2988 = vunpack.c.h.b16 %v2493
  %v2989 = vunpack.c.l.b16 %v2494
  %v2990 = vunpack.c.l.b16 %v2495
  %v2991 = vunpack.c.h.b16 %v2495
  %v2992 = vunpack.c.l.b16 %v2496
  %v2993 = vunpack.c.l.b16 %v2497
  %v2994 = vunpack.c.h.b16 %v2497
  %v2995 = vunpack.c.l.b16 %v2498
  %v2996 = vpack.c.b16 %v2711, %v2708
  %v2997 = vpack.c.b16 %v2712, %v2709
  %v2998 = vpack.c.b16 %v2713, %v2710
  %v2999 = vpack.c.b16 %v2717, %v2714
  %v3000 = vpack.c.b16 %v2718, %v2715
  %v3001 = vpack.c.b16 %v2719, %v2716
  %v3002 = vpack.c.b16 %v2723, %v2720
  %v3003 = vpack.c.b16 %v2724, %v2721
  %v3004 = vpack.c.b16 %v2725, %v2722
  %v3005 = vpack.c.b16 %v2729, %v2726
  %v3006 = vpack.c.b16 %v2730, %v2727
  %v3007 = vpack.c.b16 %v2731, %v2728
  %v3008 = vpack.c.b16 %v2735, %v2732
  %v3009 = vpack.c.b16 %v2736, %v2733
  %v3010 = vpack.c.b16 %v2737, %v2734
  %v3011 = vpack.c.b16 %v2741, %v2738
  %v3012 = vpack.c.b16 %v2742, %v2739
  %v3013 = vpack.c.b16 %v2743, %v2740
  %v3014 = vpack.c.b16 %v2747, %v2744
  %v3015 = vpack.c.b16 %v2748, %v2745
  %v3016 = vpack.c.b16 %v2749, %v2746
  %v3017 = vpack.c.b16 %v2753, %v2750
  %v3018 = vpack.c.b16 %v2754, %v2751
  %v3019 = vpack.c.b16 %v2755, %v2752
  %v3020 = vpack.c.b16 %v2759, %v2756
  %v3021 = vpack.c.b16 %v2760, %v2757
  %v3022 = vpack.c.b16 %v2761, %v2758
  %v3023 = vpack.c.b16 %v2765, %v2762
  %v3024 = vpack.c.b16 %v2766, %v2763
  %v3025 = vpack.c.b16 %v2767, %v2764
  %v3026 = vpack.c.b16 %v2771, %v2768
  %v3027 = vpack.c.b16 %v2772, %v2769
  %v3028 = vpack.c.b16 %v2773, %v2770
  %v3029 = vpack.c.b16 %v2777, %v2774
  %v3030 = vpack.c.b16 %v2778, %v2775
  %v3031 = vpack.c.b16 %v2779, %v2776
  %v3032 = vpack.c.b16 %v2783, %v2780
  %v3033 = vpack.c.b16 %v2784, %v2781
  %v3034 = vpack.c.b16 %v2785, %v2782
  %v3035 = vpack.c.b16 %v2789, %v2786
  %v3036 = vpack.c.b16 %v2790, %v2787
  %v3037 = vpack.c.b16 %v2791, %v2788
  %v3038 = vpack.c.b16 %v2795, %v2792
  %v3039 = vpack.c.b16 %v2796, %v2793
  %v3040 = vpack.c.b16 %v2797, %v2794
  %v3041 = vpack.c.b16 %v2801, %v2798
  %v3042 = vpack.c.b16 %v2802, %v2799
  %v3043 = vpack.c.b16 %v2803, %v2800
  %v3044 = vpack.c.b16 %v2807, %v2804
  %v3045 = vpack.c.b16 %v2808, %v2805
  %v3046 = vpack.c.b16 %v2809, %v2806
  %v3047 = vpack.c.b16 %v2813, %v2810
  %v3048 = vpack.c.b16 %v2814, %v2811
  %v3049 = vpack.c.b16 %v2815, %v2812
  %v3050 = vpack.c.b16 %v2819, %v2816
  %v3051 = vpack.c.b16 %v2820, %v2817
  %v3052 = vpack.c.b16 %v2821, %v2818
  %v3053 = vpack.c.b16 %v2825, %v2822
  %v3054 = vpack.c.b16 %v2826, %v2823
  %v3055 = vpack.c.b16 %v2827, %v2824
  %v3056 = vpack.c.b16 %v2831, %v2828
  %v3057 = vpack.c.b16 %v2832, %v2829
  %v3058 = vpack.c.b16 %v2833, %v2830
  %v3059 = vpack.c.b16 %v2837, %v2834
  %v3060 = vpack.c.b16 %v2838, %v2835
  %v3061 = vpack.c.b16 %v2839, %v2836
  %v3062 = vpack.c.b16 %v2843, %v2840
  %v3063 = vpack.c.b16 %v2844, %v2841
  %v3064 = vpack.c.b16 %v2845, %v2842
  %v3065 = vpack.c.b16 %v2849, %v2846
  %v3066 = vpack.c.b16 %v2850, %v2847
  %v3067 = vpack.c.b16 %v2851, %v2848
  %v3068 = vpack.c.b16 %v2855, %v2852
  %v3069 = vpack.c.b16 %v2856, %v2853
  %v3070 = vpack.c.b16 %v2857, %v2854
  %v3071 = vpack.c.b16 %v2861, %v2858
  %v3072 = vpack.c.b16 %v2862, %v2859
  %v3073 = vpack.c.b16 %v2863, %v2860
  %v3074 = vpack.c.b16 %v2867, %v2864
  %v3075 = vpack.c.b16 %v2868, %v2865
  %v3076 = vpack.c.b16 %v2869, %v2866
  %v3077 = vpack.c.b16 %v2873, %v2870
  %v3078 = vpack.c.b16 %v2874, %v2871
  %v3079 = vpack.c.b16 %v2875, %v2872
  %v3080 = vpack.c.b16 %v2879, %v2876
  %v3081 = vpack.c.b16 %v2880, %v2877
  %v3082 = vpack.c.b16 %v2881, %v2878
  %v3083 = vpack.c.b16 %v2885, %v2882
  %v3084 = vpack.c.b16 %v2886, %v2883
  %v3085 = vpack.c.b16 %v2887, %v2884
  %v3086 = vpack.c.b16 %v2891, %v2888
  %v3087 = vpack.c.b16 %v2892, %v2889
  %v3088 = vpack.c.b16 %v2893, %v2890
  %v3089 = vpack.c.b16 %v2897, %v2894
  %v3090 = vpack.c.b16 %v2898, %v2895
  %v3091 = vpack.c.b16 %v2899, %v2896
  %v3092 = vpack.c.b16 %v2903, %v2900
  %v3093 = vpack.c.b16 %v2904, %v2901
  %v3094 = vpack.c.b16 %v2905, %v2902
  %v3095 = vpack.c.b16 %v2909, %v2906
  %v3096 = vpack.c.b16 %v2910, %v2907
  %v3097 = vpack.c.b16 %v2911, %v2908
  %v3098 = vpack.c.b16 %v2915, %v2912
  %v3099 = vpack.c.b16 %v2916, %v2913
  %v3100 = vpack.c.b16 %v2917, %v2914
  %v3101 = vpack.c.b16 %v2921, %v2918
  %v3102 = vpack.c.b16 %v2922, %v2919
  %v3103 = vpack.c.b16 %v2923, %v2920
  %v3104 = vpack.c.b16 %v2927, %v2924
  %v3105 = vpack.c.b16 %v2928, %v2925
  %v3106 = vpack.c.b16 %v2929, %v2926
  %v3107 = vpack.c.b16 %v2933, %v2930
  %v3108 = vpack.c.b16 %v2934, %v2931
  %v3109 = vpack.c.b16 %v2935, %v2932
  %v3110 = vpack.c.b16 %v2939, %v2936
  %v3111 = vpack.c.b16 %v2940, %v2937
  %v3112 = vpack.c.b16 %v2941, %v2938
  %v3113 = vpack.c.b16 %v2945, %v2942
  %v3114 = vpack.c.b16 %v2946, %v2943
  %v3115 = vpack.c.b16 %v2947, %v2944
  %v3116 = vpack.c.b16 %v2951, %v2948
  %v3117 = vpack.c.b16 %v2952, %v2949
  %v3118 = vpack.c.b16 %v2953, %v2950
  %v3119 = vpack.c.b16 %v2957, %v2954
  %v3120 = vpack.c.b16 %v2958, %v2955
  %v3121 = vpack.c.b16 %v2959, %v2956
  %v3122 = vpack.c.b16 %v2963, %v2960
  %v3123 = vpack.c.b16 %v2964, %v2961
  %v3124 = vpack.c.b16 %v2965, %v2962
  %v3125 = vpack.c.b16 %v2969, %v2966
  %v3126 = vpack.c.b16 %v2970, %v2967
  %v3127 = vpack.c.b16 %v2971, %v2968
  %v3128 = vpack.c.b16 %v2975, %v2972
  %v3129 = vpack.c.b16 %v2976, %v2973
  %v3130 = vpack.c.b16 %v2977, %v2974
  %v3131 = vpack.c.b16 %v2981, %v2978
  %v3132 = vpack.c.b16 %v2982, %v2979
  %v3133 = vpack.c.b16 %v2983, %v2980
  %v3134 = vpack.c.b16 %v2987, %v2984
  %v3135 = vpack.c.b16 %v2988, %v2985
  %v3136 = vpack.c.b16 %v2989, %v2986
  %v3137 = vpack.c.b16 %v2993, %v2990
  %v3138 = vpack.c.b16 %v2994, %v2991
  %v3139 = vpack.c.b16 %v2995, %v2992
  %3284 = vmatprep.subr.bf16.mxu0 %v2997
  %3285 = vmatpush1.bf16.msra.mxu0 %v2996
  %3286 = vmatprep.subr.bf16.mxu0 %v3000
  %3287 = vmatpush1.bf16.msra.mxu0 %v2999
  %3288 = vmatprep.subr.bf16.mxu0 %v3003
  %3289 = vmatpush1.bf16.msra.mxu0 %v3002
  %3290 = vmatprep.subr.bf16.mxu0 %v3006
  %3291 = vmatpush1.bf16.msra.mxu0 %v3005
  %3292 = vmatprep.subr.bf16.mxu0 %v3009
  %3293 = vmatpush1.bf16.msra.mxu0 %v3008
  %3294 = vmatprep.subr.bf16.mxu0 %v3012
  %3295 = vmatpush1.bf16.msra.mxu0 %v3011
  %3296 = vmatprep.subr.bf16.mxu0 %v3015
  %3297 = vmatpush1.bf16.msra.mxu0 %v3014
  %3298 = vmatprep.subr.bf16.mxu0 %v3018
  %3299 = vmatpush1.bf16.msra.mxu0 %v3017
  %3300 = vmatprep.subr.bf16.mxu0 %v3021
  %3301 = vmatpush1.bf16.msra.mxu0 %v3020
  %3302 = vmatprep.subr.bf16.mxu0 %v3024
  %3303 = vmatpush1.bf16.msra.mxu0 %v3023
  %3304 = vmatprep.subr.bf16.mxu0 %v3027
  %3305 = vmatpush1.bf16.msra.mxu0 %v3026
  %3306 = vmatprep.subr.bf16.mxu0 %v3030
  %3307 = vmatpush1.bf16.msra.mxu0 %v3029
  %3308 = vmatprep.subr.bf16.mxu0 %v3033
  %3309 = vmatpush1.bf16.msra.mxu0 %v3032
  %3310 = vmatprep.subr.bf16.mxu0 %v3036
  %3311 = vmatpush1.bf16.msra.mxu0 %v3035
  %3312 = vmatprep.subr.bf16.mxu0 %v3039
  %3313 = vmatpush1.bf16.msra.mxu0 %v3038
  %3314 = vmatprep.subr.bf16.mxu0 %v3042
  %3315 = vmatpush1.bf16.msra.mxu0 %v3041
  %3316 = vmatprep.mubr.bf16.mxu0 %v2302
  %3317 = vmatmul.mubr.bf16.gmra.mrb[0].mxu0 %v2301
  %v3318 = vpop.f32.mrb[0].mxu0
  %v3319 = vadd.f32 %v2504, %v3318
  %v3320 = vpop.f32.mrb[0].mxu0
  %v3321 = vadd.f32 %v2508, %v3320
  %v3322 = vpop.f32.mrb[0].mxu0
  %v3323 = vpop.f32.mrb[0].mxu0
  %3324 = vdwg.mxu0
  %3325 = vmatprep.subr.bf16.mxu0 %v3045
  %3326 = vmatpush1.bf16.msra.mxu0 %v3044
  %3327 = vmatprep.subr.bf16.mxu0 %v3048
  %3328 = vmatpush1.bf16.msra.mxu0 %v3047
  %3329 = vmatprep.subr.bf16.mxu0 %v3051
  %3330 = vmatpush1.bf16.msra.mxu0 %v3050
  %3331 = vmatprep.subr.bf16.mxu0 %v3054
  %3332 = vmatpush1.bf16.msra.mxu0 %v3053
  %3333 = vmatprep.subr.bf16.mxu0 %v3057
  %3334 = vmatpush1.bf16.msra.mxu0 %v3056
  %3335 = vmatprep.subr.bf16.mxu0 %v3060
  %3336 = vmatpush1.bf16.msra.mxu0 %v3059
  %3337 = vmatprep.subr.bf16.mxu0 %v3063
  %3338 = vmatpush1.bf16.msra.mxu0 %v3062
  %3339 = vmatprep.subr.bf16.mxu0 %v3066
  %3340 = vmatpush1.bf16.msra.mxu0 %v3065
  %3341 = vmatprep.subr.bf16.mxu0 %v3069
  %3342 = vmatpush1.bf16.msra.mxu0 %v3068
  %3343 = vmatprep.subr.bf16.mxu0 %v3072
  %3344 = vmatpush1.bf16.msra.mxu0 %v3071
  %3345 = vmatprep.subr.bf16.mxu0 %v3075
  %3346 = vmatpush1.bf16.msra.mxu0 %v3074
  %3347 = vmatprep.subr.bf16.mxu0 %v3078
  %3348 = vmatpush1.bf16.msra.mxu0 %v3077
  %3349 = vmatprep.subr.bf16.mxu0 %v3081
  %3350 = vmatpush1.bf16.msra.mxu0 %v3080
  %3351 = vmatprep.subr.bf16.mxu0 %v3084
  %3352 = vmatpush1.bf16.msra.mxu0 %v3083
  %3353 = vmatprep.subr.bf16.mxu0 %v3087
  %3354 = vmatpush1.bf16.msra.mxu0 %v3086
  %3355 = vmatprep.subr.bf16.mxu0 %v3090
  %3356 = vmatpush1.bf16.msra.mxu0 %v3089
  %3357 = vmatprep.mubr.bf16.mxu0 %v2304
  %3358 = vmatmul.mubr.bf16.gmra.mrb[0].mxu0 %v2303
  %v3359 = vpop.f32.mrb[0].mxu0
  %v3360 = vadd.f32 %v3319, %v3359
  %v3361 = vpop.f32.mrb[0].mxu0
  %v3362 = vadd.f32 %v3321, %v3361
  %v3363 = vpop.f32.mrb[0].mxu0
  %v3364 = vpop.f32.mrb[0].mxu0
  %3365 = vdwg.mxu0
  %3366 = vmatprep.subr.bf16.mxu0 %v3093
  %3367 = vmatpush1.bf16.msra.mxu0 %v3092
  %3368 = vmatprep.subr.bf16.mxu0 %v3096
  %3369 = vmatpush1.bf16.msra.mxu0 %v3095
  %3370 = vmatprep.subr.bf16.mxu0 %v3099
  %3371 = vmatpush1.bf16.msra.mxu0 %v3098
  %3372 = vmatprep.subr.bf16.mxu0 %v3102
  %3373 = vmatpush1.bf16.msra.mxu0 %v3101
  %3374 = vmatprep.subr.bf16.mxu0 %v3105
  %3375 = vmatpush1.bf16.msra.mxu0 %v3104
  %3376 = vmatprep.subr.bf16.mxu0 %v3108
  %3377 = vmatpush1.bf16.msra.mxu0 %v3107
  %3378 = vmatprep.subr.bf16.mxu0 %v3111
  %3379 = vmatpush1.bf16.msra.mxu0 %v3110
  %3380 = vmatprep.subr.bf16.mxu0 %v3114
  %3381 = vmatpush1.bf16.msra.mxu0 %v3113
  %3382 = vmatprep.subr.bf16.mxu0 %v3117
  %3383 = vmatpush1.bf16.msra.mxu0 %v3116
  %3384 = vmatprep.subr.bf16.mxu0 %v3120
  %3385 = vmatpush1.bf16.msra.mxu0 %v3119
  %3386 = vmatprep.subr.bf16.mxu0 %v3123
  %3387 = vmatpush1.bf16.msra.mxu0 %v3122
  %3388 = vmatprep.subr.bf16.mxu0 %v3126
  %3389 = vmatpush1.bf16.msra.mxu0 %v3125
  %3390 = vmatprep.subr.bf16.mxu0 %v3129
  %3391 = vmatpush1.bf16.msra.mxu0 %v3128
  %3392 = vmatprep.subr.bf16.mxu0 %v3132
  %3393 = vmatpush1.bf16.msra.mxu0 %v3131
  %3394 = vmatprep.subr.bf16.mxu0 %v3135
  %3395 = vmatpush1.bf16.msra.mxu0 %v3134
  %3396 = vmatprep.subr.bf16.mxu0 %v3138
  %3397 = vmatpush1.bf16.msra.mxu0 %v3137
  %3398 = vmatprep.mubr.bf16.mxu0 %v2306
  %3399 = vmatmul.mubr.bf16.gmra.mrb[0].mxu0 %v2305
  %v3400 = vpop.f32.mrb[0].mxu0
  %v3401 = vadd.f32 %v3360, %v3400
  %v3402 = vpop.f32.mrb[0].mxu0
  %v3403 = vadd.f32 %v3362, %v3402
  %v3404 = vpop.f32.mrb[0].mxu0
  %v3405 = vpop.f32.mrb[0].mxu0
  %3406 = vdwg.mxu0
  %3407 = vmatprep.subr.bf16.mxu0 0
  %3408 = vmatpush1.bf16.msra.mxu0 %v2998
  %3409 = vmatprep.subr.bf16.mxu0 0
  %3410 = vmatpush1.bf16.msra.mxu0 %v3001
  %3411 = vmatprep.subr.bf16.mxu0 0
  %3412 = vmatpush1.bf16.msra.mxu0 %v3004
  %3413 = vmatprep.subr.bf16.mxu0 0
  %3414 = vmatpush1.bf16.msra.mxu0 %v3007
  %3415 = vmatprep.subr.bf16.mxu0 0
  %3416 = vmatpush1.bf16.msra.mxu0 %v3010
  %3417 = vmatprep.subr.bf16.mxu0 0
  %3418 = vmatpush1.bf16.msra.mxu0 %v3013
  %3419 = vmatprep.subr.bf16.mxu0 0
  %3420 = vmatpush1.bf16.msra.mxu0 %v3016
  %3421 = vmatprep.subr.bf16.mxu0 0
  %3422 = vmatpush1.bf16.msra.mxu0 %v3019
  %3423 = vmatprep.subr.bf16.mxu0 0
  %3424 = vmatpush1.bf16.msra.mxu0 %v3022
  %3425 = vmatprep.subr.bf16.mxu0 0
  %3426 = vmatpush1.bf16.msra.mxu0 %v3025
  %3427 = vmatprep.subr.bf16.mxu0 0
  %3428 = vmatpush1.bf16.msra.mxu0 %v3028
  %3429 = vmatprep.subr.bf16.mxu0 0
  %3430 = vmatpush1.bf16.msra.mxu0 %v3031
  %3431 = vmatprep.subr.bf16.mxu0 0
  %3432 = vmatpush1.bf16.msra.mxu0 %v3034
  %3433 = vmatprep.subr.bf16.mxu0 0
  %3434 = vmatpush1.bf16.msra.mxu0 %v3037
  %3435 = vmatprep.subr.bf16.mxu0 0
  %3436 = vmatpush1.bf16.msra.mxu0 %v3040
  %3437 = vmatprep.subr.bf16.mxu0 0
  %3438 = vmatpush1.bf16.msra.mxu0 %v3043
  %3439 = vmatprep.mubr.bf16.mxu0 %v2302
  %3440 = vmatmul.mubr.bf16.gmra.mrb[0].mxu0 %v2301
  %v3441 = vpop.f32.mrb[0].mxu0
  %v3442 = vadd.f32 %v2512, %v3441
  %v3443 = vpop.f32.mrb[0].mxu0
  %v3444 = vpop.f32.mrb[0].mxu0
  %v3445 = vpop.f32.mrb[0].mxu0
  %3446 = vdwg.mxu0
  %3447 = vmatprep.subr.bf16.mxu0 0
  %3448 = vmatpush1.bf16.msra.mxu0 %v3046
  %3449 = vmatprep.subr.bf16.mxu0 0
  %3450 = vmatpush1.bf16.msra.mxu0 %v3049
  %3451 = vmatprep.subr.bf16.mxu0 0
  %3452 = vmatpush1.bf16.msra.mxu0 %v3052
  %3453 = vmatprep.subr.bf16.mxu0 0
  %3454 = vmatpush1.bf16.msra.mxu0 %v3055
  %3455 = vmatprep.subr.bf16.mxu0 0
  %3456 = vmatpush1.bf16.msra.mxu0 %v3058
  %3457 = vmatprep.subr.bf16.mxu0 0
  %3458 = vmatpush1.bf16.msra.mxu0 %v3061
  %3459 = vmatprep.subr.bf16.mxu0 0
  %3460 = vmatpush1.bf16.msra.mxu0 %v3064
  %3461 = vmatprep.subr.bf16.mxu0 0
  %3462 = vmatpush1.bf16.msra.mxu0 %v3067
  %3463 = vmatprep.subr.bf16.mxu0 0
  %3464 = vmatpush1.bf16.msra.mxu0 %v3070
  %3465 = vmatprep.subr.bf16.mxu0 0
  %3466 = vmatpush1.bf16.msra.mxu0 %v3073
  %3467 = vmatprep.subr.bf16.mxu0 0
  %3468 = vmatpush1.bf16.msra.mxu0 %v3076
  %3469 = vmatprep.subr.bf16.mxu0 0
  %3470 = vmatpush1.bf16.msra.mxu0 %v3079
  %3471 = vmatprep.subr.bf16.mxu0 0
  %3472 = vmatpush1.bf16.msra.mxu0 %v3082
  %3473 = vmatprep.subr.bf16.mxu0 0
  %3474 = vmatpush1.bf16.msra.mxu0 %v3085
  %3475 = vmatprep.subr.bf16.mxu0 0
  %3476 = vmatpush1.bf16.msra.mxu0 %v3088
  %3477 = vmatprep.subr.bf16.mxu0 0
  %3478 = vmatpush1.bf16.msra.mxu0 %v3091
  %3479 = vmatprep.mubr.bf16.mxu0 %v2304
  %3480 = vmatmul.mubr.bf16.gmra.mrb[0].mxu0 %v2303
  %v3481 = vpop.f32.mrb[0].mxu0
  %v3482 = vadd.f32 %v3442, %v3481
  %v3483 = vpop.f32.mrb[0].mxu0
  %v3484 = vpop.f32.mrb[0].mxu0
  %v3485 = vpop.f32.mrb[0].mxu0
  %3486 = vdwg.mxu0
  %3487 = vmatprep.subr.bf16.mxu0 0
  %3488 = vmatpush1.bf16.msra.mxu0 %v3094
  %3489 = vmatprep.subr.bf16.mxu0 0
  %3490 = vmatpush1.bf16.msra.mxu0 %v3097
  %3491 = vmatprep.subr.bf16.mxu0 0
  %3492 = vmatpush1.bf16.msra.mxu0 %v3100
  %3493 = vmatprep.subr.bf16.mxu0 0
  %3494 = vmatpush1.bf16.msra.mxu0 %v3103
  %3495 = vmatprep.subr.bf16.mxu0 0
  %3496 = vmatpush1.bf16.msra.mxu0 %v3106
  %3497 = vmatprep.subr.bf16.mxu0 0
  %3498 = vmatpush1.bf16.msra.mxu0 %v3109
  %3499 = vmatprep.subr.bf16.mxu0 0
  %3500 = vmatpush1.bf16.msra.mxu0 %v3112
  %3501 = vmatprep.subr.bf16.mxu0 0
  %3502 = vmatpush1.bf16.msra.mxu0 %v3115
  %3503 = vmatprep.subr.bf16.mxu0 0
  %3504 = vmatpush1.bf16.msra.mxu0 %v3118
  %3505 = vmatprep.subr.bf16.mxu0 0
  %3506 = vmatpush1.bf16.msra.mxu0 %v3121
  %3507 = vmatprep.subr.bf16.mxu0 0
  %3508 = vmatpush1.bf16.msra.mxu0 %v3124
  %3509 = vmatprep.subr.bf16.mxu0 0
  %3510 = vmatpush1.bf16.msra.mxu0 %v3127
  %3511 = vmatprep.subr.bf16.mxu0 0
  %3512 = vmatpush1.bf16.msra.mxu0 %v3130
  %3513 = vmatprep.subr.bf16.mxu0 0
  %3514 = vmatpush1.bf16.msra.mxu0 %v3133
  %3515 = vmatprep.subr.bf16.mxu0 0
  %3516 = vmatpush1.bf16.msra.mxu0 %v3136
  %3517 = vmatprep.subr.bf16.mxu0 0
  %3518 = vmatpush1.bf16.msra.mxu0 %v3139
  %3519 = vmatprep.mubr.bf16.mxu0 %v2306
  %3520 = vmatmul.mubr.bf16.gmra.mrb[0].mxu0 %v2305
  %v3521 = vpop.f32.mrb[0].mxu0
  %v3522 = vadd.f32 %v3482, %v3521
  %v3523 = vpop.f32.mrb[0].mxu0
  %v3524 = vpop.f32.mrb[0].mxu0
  %v3525 = vpop.f32.mrb[0].mxu0
  %3526 = vdwg.mxu0
  %v3527 = vtanh.pop %v3401
  %v3528 = vtanh.pop %v3403
  %v3529 = vtanh.pop %v3522
  %v3530 = vld [vmem:[%s1] sm:$0x3]
  %v3531 = vpack.c.bf16 %v3530, %v3530
  %v3532 = vld [vmem:[%s7] sm:$0xf]
  %v3533 = vld [vmem:[%s7 + $0x4] sm:$0xf]
  %v3534 = vld [vmem:[%s7 + $0x8] sm:$0xf]
  %v3535 = vld [vmem:[%s7 + $0xc] sm:$0xf]
  %v3536 = vld [vmem:[%s7 + $0x10] sm:$0xf]
  %v3537 = vld [vmem:[%s7 + $0x14] sm:$0xf]
  %v3538 = vld [vmem:[%s7 + $0x18] sm:$0x1]
  %v3539 = vld [vmem:[%s8] sm:$0x1]
  %v3541 = vlaneseq
  %v3542 = vshrl.u32 %v3541, 7
  %v3543 = vsub.s32 0, %v3542
  %v3544 = vrot.slane %v3539, %v3543
  %v3553 = vunpack.c.l.b16 %v3532
  %v3554 = vunpack.c.l.b16 %v3533
  %v3555 = vunpack.c.l.b16 %v3534
  %v3556 = vunpack.c.l.b16 %v3535
  %v3557 = vunpack.c.l.b16 %v3536
  %v3558 = vunpack.c.l.b16 %v3537
  %v3559 = vunpack.c.l.b16 %v3538
  %v3560 = vpack.c.b16 %v3554, %v3553
  %v3561 = vpack.c.b16 %v3556, %v3555
  %v3562 = vpack.c.b16 %v3558, %v3557
  %v3563 = vpack.c.b16 %v3559, %v3559
  %vm3567 = vcmask 408576
  %v3569 = vsel %vm3567, %v3531, 0
  %v3572 = vsel %vm2250, %v3563, 0
  %3574 = vmatprep.subr.bf16.mxu0 0
  %3575 = vmatpush1.bf16.msra.mxu0 %v3560
  %3576 = vmatprep.subr.bf16.mxu0 0
  %3577 = vmatpush1.bf16.msra.mxu0 %v3561
  %3578 = vmatprep.subr.bf16.mxu0 0
  %3579 = vmatpush1.bf16.msra.mxu0 %v3562
  %3580 = vmatprep.subr.bf16.mxu0 0
  %3581 = vmatpush1.bf16.msra.mxu0 %v3572
  %3582 = vmatprep.subr.bf16.mxu0 0
  %3583 = vmatpush1.bf16.msra.mxu0 0
  %3584 = vmatprep.subr.bf16.mxu0 0
  %3585 = vmatpush1.bf16.msra.mxu0 0
  %3586 = vmatprep.subr.bf16.mxu0 0
  %3587 = vmatpush1.bf16.msra.mxu0 0
  %3588 = vmatprep.subr.bf16.mxu0 0
  %3589 = vmatpush1.bf16.msra.mxu0 0
  %3590 = vmatprep.subr.bf16.mxu0 0
  %3591 = vmatpush1.bf16.msra.mxu0 0
  %3592 = vmatprep.subr.bf16.mxu0 0
  %3593 = vmatpush1.bf16.msra.mxu0 0
  %3594 = vmatprep.subr.bf16.mxu0 0
  %3595 = vmatpush1.bf16.msra.mxu0 0
  %3596 = vmatprep.subr.bf16.mxu0 0
  %3597 = vmatpush1.bf16.msra.mxu0 0
  %3598 = vmatprep.subr.bf16.mxu0 0
  %3599 = vmatpush1.bf16.msra.mxu0 0
  %3600 = vmatprep.subr.bf16.mxu0 0
  %3601 = vmatpush1.bf16.msra.mxu0 0
  %3602 = vmatprep.subr.bf16.mxu0 0
  %3603 = vmatpush1.bf16.msra.mxu0 0
  %3604 = vmatprep.subr.bf16.mxu0 0
  %3605 = vmatpush1.bf16.msra.mxu0 0
  %3606 = vmatprep.mubr.bf16.mxu0 0
  %3607 = vmatmul.mubr.bf16.gmra.mrb[0].mxu0 %v3569
  %v3608 = vpop.f32.mrb[0].mxu0
  %v3609 = vadd.f32 %v3544, %v3608
  %v3610 = vpop.f32.mrb[0].mxu0
  %v3611 = vpop.f32.mrb[0].mxu0
  %v3612 = vpop.f32.mrb[0].mxu0
  %3613 = vdwg.mxu0
  %v3614 = vtanh.pop %v3609
  %v3615 = vpack.c.bf16 %v3527, %v3527
  %v3616 = vpack.c.bf16 %v3528, %v3528
  %v3617 = vpack.c.bf16 %v3529, %v3529
  %v3618 = vld [vmem:[%s9] sm:$0xff]
  %v3619 = vld [vmem:[%s9 + $0x8] sm:$0xf]
  %v3620 = vld [vmem:[%s9 + $0xc] sm:$0xff]
  %v3621 = vld [vmem:[%s9 + $0x14] sm:$0xf]
  %v3622 = vld [vmem:[%s9 + $0x18] sm:$0xff]
  %v3623 = vld [vmem:[%s9 + $0x20] sm:$0xf]
  %v3624 = vld [vmem:[%s9 + $0x24] sm:$0xff]
  %v3625 = vld [vmem:[%s9 + $0x2c] sm:$0xf]
  %v3626 = vld [vmem:[%s9 + $0x30] sm:$0xff]
  %v3627 = vld [vmem:[%s9 + $0x38] sm:$0xf]
  %v3628 = vld [vmem:[%s9 + $0x3c] sm:$0xff]
  %v3629 = vld [vmem:[%s9 + $0x44] sm:$0xf]
  %v3630 = vld [vmem:[%s9 + $0x48] sm:$0xff]
  %v3631 = vld [vmem:[%s9 + $0x50] sm:$0xf]
  %v3632 = vld [vmem:[%s9 + $0x54] sm:$0xff]
  %v3633 = vld [vmem:[%s9 + $0x5c] sm:$0xf]
  %v3634 = vld [vmem:[%s9 + $0x60] sm:$0xff]
  %v3635 = vld [vmem:[%s9 + $0x68] sm:$0xf]
  %v3636 = vld [vmem:[%s9 + $0x6c] sm:$0xff]
  %v3637 = vld [vmem:[%s9 + $0x74] sm:$0xf]
  %v3638 = vld [vmem:[%s9 + $0x78] sm:$0xff]
  %v3639 = vld [vmem:[%s9 + $0x80] sm:$0xf]
  %v3640 = vld [vmem:[%s9 + $0x84] sm:$0xff]
  %v3641 = vld [vmem:[%s9 + $0x8c] sm:$0xf]
  %v3642 = vld [vmem:[%s9 + $0x90] sm:$0xff]
  %v3643 = vld [vmem:[%s9 + $0x98] sm:$0xf]
  %v3644 = vld [vmem:[%s9 + $0x9c] sm:$0xff]
  %v3645 = vld [vmem:[%s9 + $0xa4] sm:$0xf]
  %v3646 = vld [vmem:[%s9 + $0xa8] sm:$0xff]
  %v3647 = vld [vmem:[%s9 + $0xb0] sm:$0xf]
  %v3648 = vld [vmem:[%s9 + $0xb4] sm:$0xff]
  %v3649 = vld [vmem:[%s9 + $0xbc] sm:$0xf]
  %v3650 = vld [vmem:[%s9 + $0xc0] sm:$0xff]
  %v3651 = vld [vmem:[%s9 + $0xc8] sm:$0xf]
  %v3652 = vld [vmem:[%s9 + $0xcc] sm:$0xff]
  %v3653 = vld [vmem:[%s9 + $0xd4] sm:$0xf]
  %v3654 = vld [vmem:[%s9 + $0xd8] sm:$0xff]
  %v3655 = vld [vmem:[%s9 + $0xe0] sm:$0xf]
  %v3656 = vld [vmem:[%s9 + $0xe4] sm:$0xff]
  %v3657 = vld [vmem:[%s9 + $0xec] sm:$0xf]
  %v3658 = vld [vmem:[%s9 + $0xf0] sm:$0xff]
  %v3659 = vld [vmem:[%s9 + $0xf8] sm:$0xf]
  %v3660 = vld [vmem:[%s9 + $0xfc] sm:$0xff]
  %v3661 = vld [vmem:[%s9 + $0x104] sm:$0xf]
  %v3662 = vld [vmem:[%s9 + $0x108] sm:$0xff]
  %v3663 = vld [vmem:[%s9 + $0x110] sm:$0xf]
  %v3664 = vld [vmem:[%s9 + $0x114] sm:$0xff]
  %v3665 = vld [vmem:[%s9 + $0x11c] sm:$0xf]
  %v3666 = vld [vmem:[%s9 + $0x120] sm:$0xff]
  %v3667 = vld [vmem:[%s9 + $0x128] sm:$0xf]
  %v3668 = vld [vmem:[%s9 + $0x12c] sm:$0xff]
  %v3669 = vld [vmem:[%s9 + $0x134] sm:$0xf]
  %v3670 = vld [vmem:[%s9 + $0x138] sm:$0xff]
  %v3671 = vld [vmem:[%s9 + $0x140] sm:$0xf]
  %v3672 = vld [vmem:[%s9 + $0x144] sm:$0xff]
  %v3673 = vld [vmem:[%s9 + $0x14c] sm:$0xf]
  %v3674 = vld [vmem:[%s9 + $0x150] sm:$0xff]
  %v3675 = vld [vmem:[%s9 + $0x158] sm:$0xf]
  %v3676 = vld [vmem:[%s9 + $0x15c] sm:$0xff]
  %v3677 = vld [vmem:[%s9 + $0x164] sm:$0xf]
  %v3678 = vld [vmem:[%s9 + $0x168] sm:$0xff]
  %v3679 = vld [vmem:[%s9 + $0x170] sm:$0xf]
  %v3680 = vld [vmem:[%s9 + $0x174] sm:$0xff]
  %v3681 = vld [vmem:[%s9 + $0x17c] sm:$0xf]
  %v3682 = vld [vmem:[%s9 + $0x180] sm:$0xff]
  %v3683 = vld [vmem:[%s9 + $0x188] sm:$0xf]
  %v3684 = vld [vmem:[%s9 + $0x18c] sm:$0xff]
  %v3685 = vld [vmem:[%s9 + $0x194] sm:$0xf]
  %v3686 = vld [vmem:[%s9 + $0x198] sm:$0xff]
  %v3687 = vld [vmem:[%s9 + $0x1a0] sm:$0xf]
  %v3688 = vld [vmem:[%s9 + $0x1a4] sm:$0xff]
  %v3689 = vld [vmem:[%s9 + $0x1ac] sm:$0xf]
  %v3690 = vld [vmem:[%s9 + $0x1b0] sm:$0xff]
  %v3691 = vld [vmem:[%s9 + $0x1b8] sm:$0xf]
  %v3692 = vld [vmem:[%s9 + $0x1bc] sm:$0x33]
  %v3693 = vld [vmem:[%s9 + $0x1c4] sm:$0x3]
  %v3694 = vpack.c.bf16 %v3614, %v3614
  %v3695 = vld [vmem:[%s10] sm:$0xff]
  %v3696 = vld [vmem:[%s10 + $0x8] sm:$0xf]
  %v3697 = vld [vmem:[%s10 + $0xc] sm:$0xff]
  %v3698 = vld [vmem:[%s10 + $0x14] sm:$0xf]
  %v3699 = vld [vmem:[%s10 + $0x18] sm:$0xff]
  %v3700 = vld [vmem:[%s10 + $0x20] sm:$0xf]
  %v3701 = vld [vmem:[%s10 + $0x24] sm:$0xff]
  %v3702 = vld [vmem:[%s10 + $0x2c] sm:$0xf]
  %v3703 = vld [vmem:[%s10 + $0x30] sm:$0xff]
  %v3704 = vld [vmem:[%s10 + $0x38] sm:$0xf]
  %v3705 = vld [vmem:[%s10 + $0x3c] sm:$0xff]
  %v3706 = vld [vmem:[%s10 + $0x44] sm:$0xf]
  %v3707 = vld [vmem:[%s10 + $0x48] sm:$0xff]
  %v3708 = vld [vmem:[%s10 + $0x50] sm:$0xf]
  %v3709 = vld [vmem:[%s10 + $0x54] sm:$0xff]
  %v3710 = vld [vmem:[%s10 + $0x5c] sm:$0xf]
  %v3711 = vld [vmem:[%s10 + $0x60] sm:$0xff]
  %v3712 = vld [vmem:[%s10 + $0x68] sm:$0xf]
  %v3713 = vld [vmem:[%s10 + $0x6c] sm:$0xff]
  %v3714 = vld [vmem:[%s10 + $0x74] sm:$0xf]
  %v3715 = vld [vmem:[%s10 + $0x78] sm:$0xff]
  %v3716 = vld [vmem:[%s10 + $0x80] sm:$0xf]
  %v3717 = vld [vmem:[%s10 + $0x84] sm:$0xff]
  %v3718 = vld [vmem:[%s10 + $0x8c] sm:$0xf]
  %v3719 = vld [vmem:[%s10 + $0x90] sm:$0x33]
  %v3720 = vld [vmem:[%s10 + $0x98] sm:$0x3]
  %v3747 = vunpack.c.l.b16 %v3695
  %v3748 = vunpack.c.h.b16 %v3695
  %v3749 = vunpack.c.l.b16 %v3696
  %v3750 = vunpack.c.l.b16 %v3697
  %v3751 = vunpack.c.h.b16 %v3697
  %v3752 = vunpack.c.l.b16 %v3698
  %v3753 = vunpack.c.l.b16 %v3699
  %v3754 = vunpack.c.h.b16 %v3699
  %v3755 = vunpack.c.l.b16 %v3700
  %v3756 = vunpack.c.l.b16 %v3701
  %v3757 = vunpack.c.h.b16 %v3701
  %v3758 = vunpack.c.l.b16 %v3702
  %v3759 = vunpack.c.l.b16 %v3703
  %v3760 = vunpack.c.h.b16 %v3703
  %v3761 = vunpack.c.l.b16 %v3704
  %v3762 = vunpack.c.l.b16 %v3705
  %v3763 = vunpack.c.h.b16 %v3705
  %v3764 = vunpack.c.l.b16 %v3706
  %v3765 = vunpack.c.l.b16 %v3707
  %v3766 = vunpack.c.h.b16 %v3707
  %v3767 = vunpack.c.l.b16 %v3708
  %v3768 = vunpack.c.l.b16 %v3709
  %v3769 = vunpack.c.h.b16 %v3709
  %v3770 = vunpack.c.l.b16 %v3710
  %v3771 = vunpack.c.l.b16 %v3711
  %v3772 = vunpack.c.h.b16 %v3711
  %v3773 = vunpack.c.l.b16 %v3712
  %v3774 = vunpack.c.l.b16 %v3713
  %v3775 = vunpack.c.h.b16 %v3713
  %v3776 = vunpack.c.l.b16 %v3714
  %v3777 = vunpack.c.l.b16 %v3715
  %v3778 = vunpack.c.h.b16 %v3715
  %v3779 = vunpack.c.l.b16 %v3716
  %v3780 = vunpack.c.l.b16 %v3717
  %v3781 = vunpack.c.h.b16 %v3717
  %v3782 = vunpack.c.l.b16 %v3718
  %v3783 = vunpack.c.l.b16 %v3719
  %v3784 = vunpack.c.h.b16 %v3719
  %v3785 = vunpack.c.l.b16 %v3720
  %v3786 = vpack.c.b16 %v3750, %v3747
  %v3787 = vpack.c.b16 %v3751, %v3748
  %v3788 = vpack.c.b16 %v3752, %v3749
  %v3789 = vpack.c.b16 %v3756, %v3753
  %v3790 = vpack.c.b16 %v3757, %v3754
  %v3791 = vpack.c.b16 %v3758, %v3755
  %v3792 = vpack.c.b16 %v3762, %v3759
  %v3793 = vpack.c.b16 %v3763, %v3760
  %v3794 = vpack.c.b16 %v3764, %v3761
  %v3795 = vpack.c.b16 %v3768, %v3765
  %v3796 = vpack.c.b16 %v3769, %v3766
  %v3797 = vpack.c.b16 %v3770, %v3767
  %v3798 = vpack.c.b16 %v3774, %v3771
  %v3799 = vpack.c.b16 %v3775, %v3772
  %v3800 = vpack.c.b16 %v3776, %v3773
  %v3801 = vpack.c.b16 %v3780, %v3777
  %v3802 = vpack.c.b16 %v3781, %v3778
  %v3803 = vpack.c.b16 %v3782, %v3779
  %v3804 = vpack.c.b16 %v3783, %v3783
  %v3805 = vpack.c.b16 %v3784, %v3784
  %v3806 = vpack.c.b16 %v3785, %v3785
  %vm3825 = vcmask 818176
  %v3827 = vsel %vm3825, %v3694, 0
  %vm3829 = vcmask 1041408
  %v3831 = vsel %vm3829, %v3804, 0
  %v3834 = vsel %vm3829, %v3805, 0
  %v3837 = vsel %vm3829, %v3806, 0
  %3839 = vmatprep.subr.bf16.mxu0 %v3787
  %3840 = vmatpush1.bf16.msra.mxu0 %v3786
  %3841 = vmatprep.subr.bf16.mxu0 %v3790
  %3842 = vmatpush1.bf16.msra.mxu0 %v3789
  %3843 = vmatprep.subr.bf16.mxu0 %v3793
  %3844 = vmatpush1.bf16.msra.mxu0 %v3792
  %3845 = vmatprep.subr.bf16.mxu0 %v3796
  %3846 = vmatpush1.bf16.msra.mxu0 %v3795
  %3847 = vmatprep.subr.bf16.mxu0 %v3799
  %3848 = vmatpush1.bf16.msra.mxu0 %v3798
  %3849 = vmatprep.subr.bf16.mxu0 %v3802
  %3850 = vmatpush1.bf16.msra.mxu0 %v3801
  %3851 = vmatprep.subr.bf16.mxu0 %v3834
  %3852 = vmatpush1.bf16.msra.mxu0 %v3831
  %3853 = vmatprep.subr.bf16.mxu0 0
  %3854 = vmatpush1.bf16.msra.mxu0 0
  %3855 = vmatprep.subr.bf16.mxu0 0
  %3856 = vmatpush1.bf16.msra.mxu0 0
  %3857 = vmatprep.subr.bf16.mxu0 0
  %3858 = vmatpush1.bf16.msra.mxu0 0
  %3859 = vmatprep.subr.bf16.mxu0 0
  %3860 = vmatpush1.bf16.msra.mxu0 0
  %3861 = vmatprep.subr.bf16.mxu0 0
  %3862 = vmatpush1.bf16.msra.mxu0 0
  %3863 = vmatprep.subr.bf16.mxu0 0
  %3864 = vmatpush1.bf16.msra.mxu0 0
  %3865 = vmatprep.subr.bf16.mxu0 0
  %3866 = vmatpush1.bf16.msra.mxu0 0
  %3867 = vmatprep.subr.bf16.mxu0 0
  %3868 = vmatpush1.bf16.msra.mxu0 0
  %3869 = vmatprep.subr.bf16.mxu0 0
  %3870 = vmatpush1.bf16.msra.mxu0 0
  %3871 = vmatprep.mubr.bf16.mxu0 0
  %3872 = vmatmul.mubr.bf16.gmra.mrb[0].mxu0 %v3827
  %v3873 = vpop.f32.mrb[0].mxu0
  %v3874 = vadd.f32 0.0, %v3873
  %v3875 = vpop.f32.mrb[0].mxu0
  %v3876 = vadd.f32 0.0, %v3875
  %v3877 = vpop.f32.mrb[0].mxu0
  %v3878 = vpop.f32.mrb[0].mxu0
  %3879 = vdwg.mxu0
  %3880 = vmatprep.subr.bf16.mxu0 0
  %3881 = vmatpush1.bf16.msra.mxu0 %v3788
  %3882 = vmatprep.subr.bf16.mxu0 0
  %3883 = vmatpush1.bf16.msra.mxu0 %v3791
  %3884 = vmatprep.subr.bf16.mxu0 0
  %3885 = vmatpush1.bf16.msra.mxu0 %v3794
  %3886 = vmatprep.subr.bf16.mxu0 0
  %3887 = vmatpush1.bf16.msra.mxu0 %v3797
  %3888 = vmatprep.subr.bf16.mxu0 0
  %3889 = vmatpush1.bf16.msra.mxu0 %v3800
  %3890 = vmatprep.subr.bf16.mxu0 0
  %3891 = vmatpush1.bf16.msra.mxu0 %v3803
  %3892 = vmatprep.subr.bf16.mxu0 0
  %3893 = vmatpush1.bf16.msra.mxu0 %v3837
  %3894 = vmatprep.subr.bf16.mxu0 0
  %3895 = vmatpush1.bf16.msra.mxu0 0
  %3896 = vmatprep.subr.bf16.mxu0 0
  %3897 = vmatpush1.bf16.msra.mxu0 0
  %3898 = vmatprep.subr.bf16.mxu0 0
  %3899 = vmatpush1.bf16.msra.mxu0 0
  %3900 = vmatprep.subr.bf16.mxu0 0
  %3901 = vmatpush1.bf16.msra.mxu0 0
  %3902 = vmatprep.subr.bf16.mxu0 0
  %3903 = vmatpush1.bf16.msra.mxu0 0
  %3904 = vmatprep.subr.bf16.mxu0 0
  %3905 = vmatpush1.bf16.msra.mxu0 0
  %3906 = vmatprep.subr.bf16.mxu0 0
  %3907 = vmatpush1.bf16.msra.mxu0 0
  %3908 = vmatprep.subr.bf16.mxu0 0
  %3909 = vmatpush1.bf16.msra.mxu0 0
  %3910 = vmatprep.subr.bf16.mxu0 0
  %3911 = vmatpush1.bf16.msra.mxu0 0
  %3912 = vmatprep.mubr.bf16.mxu0 0
  %3913 = vmatmul.mubr.bf16.gmra.mrb[0].mxu0 %v3827
  %v3914 = vpop.f32.mrb[0].mxu0
  %v3915 = vadd.f32 0.0, %v3914
  %v3916 = vpop.f32.mrb[0].mxu0
  %v3917 = vpop.f32.mrb[0].mxu0
  %v3918 = vpop.f32.mrb[0].mxu0
  %3919 = vdwg.mxu0
  %v3996 = vunpack.c.l.b16 %v3618
  %v3997 = vunpack.c.h.b16 %v3618
  %v3998 = vunpack.c.l.b16 %v3619
  %v3999 = vunpack.c.l.b16 %v3620
  %v4000 = vunpack.c.h.b16 %v3620
  %v4001 = vunpack.c.l.b16 %v3621
  %v4002 = vunpack.c.l.b16 %v3622
  %v4003 = vunpack.c.h.b16 %v3622
  %v4004 = vunpack.c.l.b16 %v3623
  %v4005 = vunpack.c.l.b16 %v3624
  %v4006 = vunpack.c.h.b16 %v3624
  %v4007 = vunpack.c.l.b16 %v3625
  %v4008 = vunpack.c.l.b16 %v3626
  %v4009 = vunpack.c.h.b16 %v3626
  %v4010 = vunpack.c.l.b16 %v3627
  %v4011 = vunpack.c.l.b16 %v3628
  %v4012 = vunpack.c.h.b16 %v3628
  %v4013 = vunpack.c.l.b16 %v3629
  %v4014 = vunpack.c.l.b16 %v3630
  %v4015 = vunpack.c.h.b16 %v3630
  %v4016 = vunpack.c.l.b16 %v3631
  %v4017 = vunpack.c.l.b16 %v3632
  %v4018 = vunpack.c.h.b16 %v3632
  %v4019 = vunpack.c.l.b16 %v3633
  %v4020 = vunpack.c.l.b16 %v3634
  %v4021 = vunpack.c.h.b16 %v3634
  %v4022 = vunpack.c.l.b16 %v3635
  %v4023 = vunpack.c.l.b16 %v3636
  %v4024 = vunpack.c.h.b16 %v3636
  %v4025 = vunpack.c.l.b16 %v3637
  %v4026 = vunpack.c.l.b16 %v3638
  %v4027 = vunpack.c.h.b16 %v3638
  %v4028 = vunpack.c.l.b16 %v3639
  %v4029 = vunpack.c.l.b16 %v3640
  %v4030 = vunpack.c.h.b16 %v3640
  %v4031 = vunpack.c.l.b16 %v3641
  %v4032 = vunpack.c.l.b16 %v3642
  %v4033 = vunpack.c.h.b16 %v3642
  %v4034 = vunpack.c.l.b16 %v3643
  %v4035 = vunpack.c.l.b16 %v3644
  %v4036 = vunpack.c.h.b16 %v3644
  %v4037 = vunpack.c.l.b16 %v3645
  %v4038 = vunpack.c.l.b16 %v3646
  %v4039 = vunpack.c.h.b16 %v3646
  %v4040 = vunpack.c.l.b16 %v3647
  %v4041 = vunpack.c.l.b16 %v3648
  %v4042 = vunpack.c.h.b16 %v3648
  %v4043 = vunpack.c.l.b16 %v3649
  %v4044 = vunpack.c.l.b16 %v3650
  %v4045 = vunpack.c.h.b16 %v3650
  %v4046 = vunpack.c.l.b16 %v3651
  %v4047 = vunpack.c.l.b16 %v3652
  %v4048 = vunpack.c.h.b16 %v3652
  %v4049 = vunpack.c.l.b16 %v3653
  %v4050 = vunpack.c.l.b16 %v3654
  %v4051 = vunpack.c.h.b16 %v3654
  %v4052 = vunpack.c.l.b16 %v3655
  %v4053 = vunpack.c.l.b16 %v3656
  %v4054 = vunpack.c.h.b16 %v3656
  %v4055 = vunpack.c.l.b16 %v3657
  %v4056 = vunpack.c.l.b16 %v3658
  %v4057 = vunpack.c.h.b16 %v3658
  %v4058 = vunpack.c.l.b16 %v3659
  %v4059 = vunpack.c.l.b16 %v3660
  %v4060 = vunpack.c.h.b16 %v3660
  %v4061 = vunpack.c.l.b16 %v3661
  %v4062 = vunpack.c.l.b16 %v3662
  %v4063 = vunpack.c.h.b16 %v3662
  %v4064 = vunpack.c.l.b16 %v3663
  %v4065 = vunpack.c.l.b16 %v3664
  %v4066 = vunpack.c.h.b16 %v3664
  %v4067 = vunpack.c.l.b16 %v3665
  %v4068 = vunpack.c.l.b16 %v3666
  %v4069 = vunpack.c.h.b16 %v3666
  %v4070 = vunpack.c.l.b16 %v3667
  %v4071 = vunpack.c.l.b16 %v3668
  %v4072 = vunpack.c.h.b16 %v3668
  %v4073 = vunpack.c.l.b16 %v3669
  %v4074 = vunpack.c.l.b16 %v3670
  %v4075 = vunpack.c.h.b16 %v3670
  %v4076 = vunpack.c.l.b16 %v3671
  %v4077 = vunpack.c.l.b16 %v3672
  %v4078 = vunpack.c.h.b16 %v3672
  %v4079 = vunpack.c.l.b16 %v3673
  %v4080 = vunpack.c.l.b16 %v3674
  %v4081 = vunpack.c.h.b16 %v3674
  %v4082 = vunpack.c.l.b16 %v3675
  %v4083 = vunpack.c.l.b16 %v3676
  %v4084 = vunpack.c.h.b16 %v3676
  %v4085 = vunpack.c.l.b16 %v3677
  %v4086 = vunpack.c.l.b16 %v3678
  %v4087 = vunpack.c.h.b16 %v3678
  %v4088 = vunpack.c.l.b16 %v3679
  %v4089 = vunpack.c.l.b16 %v3680
  %v4090 = vunpack.c.h.b16 %v3680
  %v4091 = vunpack.c.l.b16 %v3681
  %v4092 = vunpack.c.l.b16 %v3682
  %v4093 = vunpack.c.h.b16 %v3682
  %v4094 = vunpack.c.l.b16 %v3683
  %v4095 = vunpack.c.l.b16 %v3684
  %v4096 = vunpack.c.h.b16 %v3684
  %v4097 = vunpack.c.l.b16 %v3685
  %v4098 = vunpack.c.l.b16 %v3686
  %v4099 = vunpack.c.h.b16 %v3686
  %v4100 = vunpack.c.l.b16 %v3687
  %v4101 = vunpack.c.l.b16 %v3688
  %v4102 = vunpack.c.h.b16 %v3688
  %v4103 = vunpack.c.l.b16 %v3689
  %v4104 = vunpack.c.l.b16 %v3690
  %v4105 = vunpack.c.h.b16 %v3690
  %v4106 = vunpack.c.l.b16 %v3691
  %v4107 = vunpack.c.l.b16 %v3692
  %v4108 = vunpack.c.h.b16 %v3692
  %v4109 = vunpack.c.l.b16 %v3693
  %v4110 = vpack.c.b16 %v3999, %v3996
  %v4111 = vpack.c.b16 %v4000, %v3997
  %v4112 = vpack.c.b16 %v4001, %v3998
  %v4113 = vpack.c.b16 %v4005, %v4002
  %v4114 = vpack.c.b16 %v4006, %v4003
  %v4115 = vpack.c.b16 %v4007, %v4004
  %v4116 = vpack.c.b16 %v4011, %v4008
  %v4117 = vpack.c.b16 %v4012, %v4009
  %v4118 = vpack.c.b16 %v4013, %v4010
  %v4119 = vpack.c.b16 %v4017, %v4014
  %v4120 = vpack.c.b16 %v4018, %v4015
  %v4121 = vpack.c.b16 %v4019, %v4016
  %v4122 = vpack.c.b16 %v4023, %v4020
  %v4123 = vpack.c.b16 %v4024, %v4021
  %v4124 = vpack.c.b16 %v4025, %v4022
  %v4125 = vpack.c.b16 %v4029, %v4026
  %v4126 = vpack.c.b16 %v4030, %v4027
  %v4127 = vpack.c.b16 %v4031, %v4028
  %v4128 = vpack.c.b16 %v4035, %v4032
  %v4129 = vpack.c.b16 %v4036, %v4033
  %v4130 = vpack.c.b16 %v4037, %v4034
  %v4131 = vpack.c.b16 %v4041, %v4038
  %v4132 = vpack.c.b16 %v4042, %v4039
  %v4133 = vpack.c.b16 %v4043, %v4040
  %v4134 = vpack.c.b16 %v4047, %v4044
  %v4135 = vpack.c.b16 %v4048, %v4045
  %v4136 = vpack.c.b16 %v4049, %v4046
  %v4137 = vpack.c.b16 %v4053, %v4050
  %v4138 = vpack.c.b16 %v4054, %v4051
  %v4139 = vpack.c.b16 %v4055, %v4052
  %v4140 = vpack.c.b16 %v4059, %v4056
  %v4141 = vpack.c.b16 %v4060, %v4057
  %v4142 = vpack.c.b16 %v4061, %v4058
  %v4143 = vpack.c.b16 %v4065, %v4062
  %v4144 = vpack.c.b16 %v4066, %v4063
  %v4145 = vpack.c.b16 %v4067, %v4064
  %v4146 = vpack.c.b16 %v4071, %v4068
  %v4147 = vpack.c.b16 %v4072, %v4069
  %v4148 = vpack.c.b16 %v4073, %v4070
  %v4149 = vpack.c.b16 %v4077, %v4074
  %v4150 = vpack.c.b16 %v4078, %v4075
  %v4151 = vpack.c.b16 %v4079, %v4076
  %v4152 = vpack.c.b16 %v4083, %v4080
  %v4153 = vpack.c.b16 %v4084, %v4081
  %v4154 = vpack.c.b16 %v4085, %v4082
  %v4155 = vpack.c.b16 %v4089, %v4086
  %v4156 = vpack.c.b16 %v4090, %v4087
  %v4157 = vpack.c.b16 %v4091, %v4088
  %v4158 = vpack.c.b16 %v4095, %v4092
  %v4159 = vpack.c.b16 %v4096, %v4093
  %v4160 = vpack.c.b16 %v4097, %v4094
  %v4161 = vpack.c.b16 %v4101, %v4098
  %v4162 = vpack.c.b16 %v4102, %v4099
  %v4163 = vpack.c.b16 %v4103, %v4100
  %v4164 = vpack.c.b16 %v4107, %v4104
  %v4165 = vpack.c.b16 %v4108, %v4105
  %v4166 = vpack.c.b16 %v4109, %v4106
  %v4222 = vsel %vm1546, %v3617, 0
  %v4225 = vsel %vm1550, %v4164, 0
  %v4228 = vsel %vm1550, %v4165, 0
  %v4231 = vsel %vm1550, %v4166, 0
  %4233 = vmatprep.subr.bf16.mxu0 %v4111
  %4234 = vmatpush1.bf16.msra.mxu0 %v4110
  %4235 = vmatprep.subr.bf16.mxu0 %v4114
  %4236 = vmatpush1.bf16.msra.mxu0 %v4113
  %4237 = vmatprep.subr.bf16.mxu0 %v4117
  %4238 = vmatpush1.bf16.msra.mxu0 %v4116
  %4239 = vmatprep.subr.bf16.mxu0 %v4120
  %4240 = vmatpush1.bf16.msra.mxu0 %v4119
  %4241 = vmatprep.subr.bf16.mxu0 %v4123
  %4242 = vmatpush1.bf16.msra.mxu0 %v4122
  %4243 = vmatprep.subr.bf16.mxu0 %v4126
  %4244 = vmatpush1.bf16.msra.mxu0 %v4125
  %4245 = vmatprep.subr.bf16.mxu0 %v4129
  %4246 = vmatpush1.bf16.msra.mxu0 %v4128
  %4247 = vmatprep.subr.bf16.mxu0 %v4132
  %4248 = vmatpush1.bf16.msra.mxu0 %v4131
  %4249 = vmatprep.subr.bf16.mxu0 %v4135
  %4250 = vmatpush1.bf16.msra.mxu0 %v4134
  %4251 = vmatprep.subr.bf16.mxu0 %v4138
  %4252 = vmatpush1.bf16.msra.mxu0 %v4137
  %4253 = vmatprep.subr.bf16.mxu0 %v4141
  %4254 = vmatpush1.bf16.msra.mxu0 %v4140
  %4255 = vmatprep.subr.bf16.mxu0 %v4144
  %4256 = vmatpush1.bf16.msra.mxu0 %v4143
  %4257 = vmatprep.subr.bf16.mxu0 %v4147
  %4258 = vmatpush1.bf16.msra.mxu0 %v4146
  %4259 = vmatprep.subr.bf16.mxu0 %v4150
  %4260 = vmatpush1.bf16.msra.mxu0 %v4149
  %4261 = vmatprep.subr.bf16.mxu0 %v4153
  %4262 = vmatpush1.bf16.msra.mxu0 %v4152
  %4263 = vmatprep.subr.bf16.mxu0 %v4156
  %4264 = vmatpush1.bf16.msra.mxu0 %v4155
  %4265 = vmatprep.mubr.bf16.mxu0 %v3616
  %4266 = vmatmul.mubr.bf16.gmra.mrb[0].mxu0 %v3615
  %v4267 = vpop.f32.mrb[0].mxu0
  %v4268 = vadd.f32 %v3874, %v4267
  %v4269 = vpop.f32.mrb[0].mxu0
  %v4270 = vadd.f32 %v3876, %v4269
  %v4271 = vpop.f32.mrb[0].mxu0
  %v4272 = vpop.f32.mrb[0].mxu0
  %4273 = vdwg.mxu0
  %4274 = vmatprep.subr.bf16.mxu0 %v4159
  %4275 = vmatpush1.bf16.msra.mxu0 %v4158
  %4276 = vmatprep.subr.bf16.mxu0 %v4162
  %4277 = vmatpush1.bf16.msra.mxu0 %v4161
  %4278 = vmatprep.subr.bf16.mxu0 %v4228
  %4279 = vmatpush1.bf16.msra.mxu0 %v4225
  %4280 = vmatprep.subr.bf16.mxu0 0
  %4281 = vmatpush1.bf16.msra.mxu0 0
  %4282 = vmatprep.subr.bf16.mxu0 0
  %4283 = vmatpush1.bf16.msra.mxu0 0
  %4284 = vmatprep.subr.bf16.mxu0 0
  %4285 = vmatpush1.bf16.msra.mxu0 0
  %4286 = vmatprep.subr.bf16.mxu0 0
  %4287 = vmatpush1.bf16.msra.mxu0 0
  %4288 = vmatprep.subr.bf16.mxu0 0
  %4289 = vmatpush1.bf16.msra.mxu0 0
  %4290 = vmatprep.subr.bf16.mxu0 0
  %4291 = vmatpush1.bf16.msra.mxu0 0
  %4292 = vmatprep.subr.bf16.mxu0 0
  %4293 = vmatpush1.bf16.msra.mxu0 0
  %4294 = vmatprep.subr.bf16.mxu0 0
  %4295 = vmatpush1.bf16.msra.mxu0 0
  %4296 = vmatprep.subr.bf16.mxu0 0
  %4297 = vmatpush1.bf16.msra.mxu0 0
  %4298 = vmatprep.subr.bf16.mxu0 0
  %4299 = vmatpush1.bf16.msra.mxu0 0
  %4300 = vmatprep.subr.bf16.mxu0 0
  %4301 = vmatpush1.bf16.msra.mxu0 0
  %4302 = vmatprep.subr.bf16.mxu0 0
  %4303 = vmatpush1.bf16.msra.mxu0 0
  %4304 = vmatprep.subr.bf16.mxu0 0
  %4305 = vmatpush1.bf16.msra.mxu0 0
  %4306 = vmatprep.mubr.bf16.mxu0 0
  %4307 = vmatmul.mubr.bf16.gmra.mrb[0].mxu0 %v4222
  %v4308 = vpop.f32.mrb[0].mxu0
  %v4309 = vadd.f32 %v4268, %v4308
  %v4310 = vpop.f32.mrb[0].mxu0
  %v4311 = vadd.f32 %v4270, %v4310
  %v4312 = vpop.f32.mrb[0].mxu0
  %v4313 = vpop.f32.mrb[0].mxu0
  %4314 = vdwg.mxu0
  %4315 = vmatprep.subr.bf16.mxu0 0
  %4316 = vmatpush1.bf16.msra.mxu0 %v4112
  %4317 = vmatprep.subr.bf16.mxu0 0
  %4318 = vmatpush1.bf16.msra.mxu0 %v4115
  %4319 = vmatprep.subr.bf16.mxu0 0
  %4320 = vmatpush1.bf16.msra.mxu0 %v4118
  %4321 = vmatprep.subr.bf16.mxu0 0
  %4322 = vmatpush1.bf16.msra.mxu0 %v4121
  %4323 = vmatprep.subr.bf16.mxu0 0
  %4324 = vmatpush1.bf16.msra.mxu0 %v4124
  %4325 = vmatprep.subr.bf16.mxu0 0
  %4326 = vmatpush1.bf16.msra.mxu0 %v4127
  %4327 = vmatprep.subr.bf16.mxu0 0
  %4328 = vmatpush1.bf16.msra.mxu0 %v4130
  %4329 = vmatprep.subr.bf16.mxu0 0
  %4330 = vmatpush1.bf16.msra.mxu0 %v4133
  %4331 = vmatprep.subr.bf16.mxu0 0
  %4332 = vmatpush1.bf16.msra.mxu0 %v4136
  %4333 = vmatprep.subr.bf16.mxu0 0
  %4334 = vmatpush1.bf16.msra.mxu0 %v4139
  %4335 = vmatprep.subr.bf16.mxu0 0
  %4336 = vmatpush1.bf16.msra.mxu0 %v4142
  %4337 = vmatprep.subr.bf16.mxu0 0
  %4338 = vmatpush1.bf16.msra.mxu0 %v4145
  %4339 = vmatprep.subr.bf16.mxu0 0
  %4340 = vmatpush1.bf16.msra.mxu0 %v4148
  %4341 = vmatprep.subr.bf16.mxu0 0
  %4342 = vmatpush1.bf16.msra.mxu0 %v4151
  %4343 = vmatprep.subr.bf16.mxu0 0
  %4344 = vmatpush1.bf16.msra.mxu0 %v4154
  %4345 = vmatprep.subr.bf16.mxu0 0
  %4346 = vmatpush1.bf16.msra.mxu0 %v4157
  %4347 = vmatprep.mubr.bf16.mxu0 %v3616
  %4348 = vmatmul.mubr.bf16.gmra.mrb[0].mxu0 %v3615
  %v4349 = vpop.f32.mrb[0].mxu0
  %v4350 = vadd.f32 %v3915, %v4349
  %v4351 = vpop.f32.mrb[0].mxu0
  %v4352 = vpop.f32.mrb[0].mxu0
  %v4353 = vpop.f32.mrb[0].mxu0
  %4354 = vdwg.mxu0
  %4355 = vmatprep.subr.bf16.mxu0 0
  %4356 = vmatpush1.bf16.msra.mxu0 %v4160
  %4357 = vmatprep.subr.bf16.mxu0 0
  %4358 = vmatpush1.bf16.msra.mxu0 %v4163
  %4359 = vmatprep.subr.bf16.mxu0 0
  %4360 = vmatpush1.bf16.msra.mxu0 %v4231
  %4361 = vmatprep.subr.bf16.mxu0 0
  %4362 = vmatpush1.bf16.msra.mxu0 0
  %4363 = vmatprep.subr.bf16.mxu0 0
  %4364 = vmatpush1.bf16.msra.mxu0 0
  %4365 = vmatprep.subr.bf16.mxu0 0
  %4366 = vmatpush1.bf16.msra.mxu0 0
  %4367 = vmatprep.subr.bf16.mxu0 0
  %4368 = vmatpush1.bf16.msra.mxu0 0
  %4369 = vmatprep.subr.bf16.mxu0 0
  %4370 = vmatpush1.bf16.msra.mxu0 0
  %4371 = vmatprep.subr.bf16.mxu0 0
  %4372 = vmatpush1.bf16.msra.mxu0 0
  %4373 = vmatprep.subr.bf16.mxu0 0
  %4374 = vmatpush1.bf16.msra.mxu0 0
  %4375 = vmatprep.subr.bf16.mxu0 0
  %4376 = vmatpush1.bf16.msra.mxu0 0
  %4377 = vmatprep.subr.bf16.mxu0 0
  %4378 = vmatpush1.bf16.msra.mxu0 0
  %4379 = vmatprep.subr.bf16.mxu0 0
  %4380 = vmatpush1.bf16.msra.mxu0 0
  %4381 = vmatprep.subr.bf16.mxu0 0
  %4382 = vmatpush1.bf16.msra.mxu0 0
  %4383 = vmatprep.subr.bf16.mxu0 0
  %4384 = vmatpush1.bf16.msra.mxu0 0
  %4385 = vmatprep.subr.bf16.mxu0 0
  %4386 = vmatpush1.bf16.msra.mxu0 0
  %4387 = vmatprep.mubr.bf16.mxu0 0
  %4388 = vmatmul.mubr.bf16.gmra.mrb[0].mxu0 %v4222
  %v4389 = vpop.f32.mrb[0].mxu0
  %v4390 = vadd.f32 %v4350, %v4389
  %v4391 = vpop.f32.mrb[0].mxu0
  %v4392 = vpop.f32.mrb[0].mxu0
  %v4393 = vpop.f32.mrb[0].mxu0
  %4394 = vdwg.mxu0
  %v4395 = vld [vmem:[%s11] sm:$0x7]
  %v4397 = vlaneseq
  %v4398 = vshrl.u32 %v4397, 7
  %v4399 = vsub.s32 0, %v4398
  %v4400 = vrot.slane %v4395, %v4399
  %v4401 = vlaneseq
  %v4402 = vshrl.u32 %v4401, 7
  %v4403 = vsub.s32 1, %v4402
  %v4404 = vrot.slane %v4395, %v4403
  %v4405 = vlaneseq
  %v4406 = vshrl.u32 %v4405, 7
  %v4407 = vsub.s32 2, %v4406
  %v4408 = vrot.slane %v4395, %v4407
  %v4412 = vadd.f32 %v4309, %v4400
  %v4413 = vadd.f32 %v4311, %v4404
  %v4414 = vadd.f32 %v4390, %v4408
  %v4418 = vcombine.low %v4412, %v4413
  %v4420 = vunpack.c.l.s4 1983009808
  %v4421 = vunpack.c.0.s8 %v4420
  %v4422 = vlaneseq
  %v4423 = vshrl.u32 %v4422, 7
  %v4424 = vsub.s32 %v4421, %v4423
  %v4425 = vrot.slane %v4418, %v4424
  %v4427 = vunpack.c.l.s4 1983009808
  %v4428 = vunpack.c.0.s8 %v4427
  %v4429 = vlaneseq
  %v4430 = vshrl.u32 %v4429, 7
  %v4431 = vsub.s32 %v4428, %v4430
  %v4432 = vrot.slane %v4414, %v4431
  %v4433 = vcombine.low %v4425, %v4432
  %vm4435 = vcmask 1043458
  %vm4436 = vmor %vm4435, %vm3829
  %vm4437 = vcmask 357380
  %vm4438 = vmor %vm4437, %vm4436
  %4439 = vst.msk [vmem:[%s12] sm:$0x3f] %vm4438, %v4433
  // Predicated region
  $region50: #{wdecnn_forward.1} parent=0 // pred_check
    _
  $region51: #{wdecnn_forward.1} parent=0 // pred_check_branch
    %4441 = sbr.rel (0) target = $region53
  $region52: #{wdecnn_forward.1} parent=0 // pred_region
    _
  $region53: #{wdecnn_forward.1} parent=0 // pred_fallthru
    _
  // Predicated region
  $region54: #{wdecnn_forward.1} parent=0 // pred_check
    _
  $region55: #{wdecnn_forward.1} parent=0 // pred_check_branch
    %4443 = sbr.rel (0) target = $region57
  $region56: #{wdecnn_forward.1} parent=0 // pred_region
    _
  $region57: #{wdecnn_forward.1} parent=0 // pred_fallthru
    _

</llo_original>
